<compile_context>
chip_gen: v7x
topology: tpu7x:2x2x1
jax: 0.10.0
libtpu: 0.0.40
codegen_flags: <defaults>
</compile_context>

<pallas_src>
import functools

import jax
import jax.numpy as jnp
from jax import lax
from jax.experimental import pallas as pl
from jax.experimental.pallas import tpu as pltpu


def _round_up(x, m):
    return (x + m - 1) // m * m


# ---------------------------------------------------------------------------
# In-kernel math helpers
# ---------------------------------------------------------------------------
def _pair_sqdist(a, na, b, nbt):
    """Squared pairwise distances between rows of a (Ta,C) and b (Tb,C).

    na: (Ta, 1) precomputed squared norms of a's rows.
    nbt: (1, Tb) precomputed squared norms of b's rows (already transposed).
    The gram goes through the MXU as a contraction (no materialized b.T).
    """
    g = lax.dot_general(a, b,
                        dimension_numbers=(((1,), (1,)), ((), ())),
                        preferred_element_type=jnp.float32,
                        precision=lax.Precision.HIGHEST)
    return jnp.maximum(na + nbt - 2.0 * g, 0.0)


def _make_score_fn(mode, inv_denom2, thr):
    """Returns (score_fn, n_point_parts) with constants baked in."""
    inv_denom2 = float(inv_denom2)
    thr = float(thr)
    if mode == 'correspondence':
        def score_fn(pi, ni, pj, nj):
            x1 = _pair_sqdist(pi[0], ni[0], pj[0], nj[0])
            x2 = _pair_sqdist(pi[1], ni[1], pj[1], nj[1])
            # (d1 - d2)^2 == x1 + x2 - 2*sqrt(x1*x2): one sqrt per element
            # instead of two (abs dropped: result is already squared).
            diff2 = jnp.maximum(x1 + x2 - 2.0 * jnp.sqrt(x1 * x2), 0.0)
            s = 1.0 - diff2 * inv_denom2
            return jnp.where(s < thr, 0.0, s)      # score[score < thresh] = 0
        return score_fn, 2
    elif mode == 'pointcloud':
        def score_fn(pi, ni, pj, nj):
            # sqrt dropped: the cdist result is immediately squared anyway.
            x = _pair_sqdist(pi[0], ni[0], pj[0], nj[0])
            s = jnp.exp(-x * inv_denom2)
            return jnp.where(s < thr, 0.0, s)
        return score_fn, 1
    raise ValueError(f"unknown mode: {mode}")


# ---------------------------------------------------------------------------
# Pass 1: thresholded score, tile (bi, bj)
# ---------------------------------------------------------------------------
def _score_kernel(*refs, score_fn, n_parts):
    # refs layout: pts_i[n_parts], norms_i[n_parts], pts_j[n_parts],
    #              norms_j[n_parts], out
    pi = tuple(refs[p][0] for p in range(n_parts))                  # (blk, C)
    ni = tuple(refs[n_parts + p][0] for p in range(n_parts))        # (blk, 1)
    pj = tuple(refs[2 * n_parts + p][0] for p in range(n_parts))    # (blk, C)
    nj = tuple(refs[3 * n_parts + p][0] for p in range(n_parts))    # (1, blk)
    o_ref = refs[4 * n_parts]
    o_ref[0] = score_fn(pi, ni, pj, nj).astype(o_ref.dtype)


# ---------------------------------------------------------------------------
# Pass 2: out(i,j) = score(i,j) * sum_k score(i,k) @ score(k,j)
# ---------------------------------------------------------------------------
def _propagate_kernel(s_ik_ref, s_kj_ref, s_ij_ref, o_ref, acc_ref):
    kk = pl.program_id(3)

    @pl.when(kk == 0)
    def _():
        acc_ref[...] = jnp.zeros_like(acc_ref)

    acc_ref[...] += jnp.dot(s_ik_ref[0], s_kj_ref[0],
                            preferred_element_type=jnp.float32)

    @pl.when(kk == pl.num_programs(3) - 1)
    def _():
        o_ref[0] = s_ij_ref[0].astype(jnp.float32) * acc_ref[...]


# ---------------------------------------------------------------------------
# Wrapper (glue)
# ---------------------------------------------------------------------------
def graph_constructor_forward(points, mode, *, inlier_thresh, thresh,
                              sigma=None, tau=None, k1=2, k2=1,
                              block=512, matmul_dtype=jnp.bfloat16):
    """JAX/Pallas equivalent of GraphConstructor.forward."""
    points = jnp.asarray(points, jnp.float32)
    B, M, C = points.shape

    if mode == 'correspondence':
        assert C == 6, "correspondence mode expects B x M x 6 points"
        denom, thr, k = float(inlier_thresh), float(thresh), k1
        parts = (points[..., 0:3], points[..., 3:6])   # split in the wrapper
        # Distinct sentinels so |d1 - d2| is huge for any valid<->padded pair
        # -> score <= 0 -> thresholded to exactly 0 (no in-kernel masking).
        sentinels = (1.0e4, 0.0)
    elif mode == 'pointcloud':
        assert C == 3, "pointcloud mode expects B x N x 3 points"
        denom = float(inlier_thresh if sigma is None else sigma)  # self.sigma
        thr = float(thresh if tau is None else tau)               # self.tau
        k = k2
        parts = (points,)
        sentinels = (1.0e4,)
    else:
        raise ValueError(f"unknown mode: {mode}")

    inv_denom2 = 1.0 / (denom * denom)
    score_fn, n_parts = _make_score_fn(mode, inv_denom2, thr)
    # TODO(synk): like the original module, k != 1 performs exactly one
    # score * (score @ score) propagation step (k is not an iteration count).
    propagate = (k != 1)

    # ---- tile size / padding: lane-dense 128-multiple tiles, capped at 1024
    blk = max(128, min(int(block), 1024, _round_up(M, 128)))
    blk = (blk // 128) * 128
    M_pad = _round_up(M, blk)
    nb = M_pad // blk
    if M_pad != M:
        pad = ((0, 0), (0, M_pad - M), (0, 0))
        parts = tuple(jnp.pad(p, pad, constant_values=s)
                      for p, s in zip(parts, sentinels))

    # ---- per-point squared norms precomputed host/XLA-side -----------------
    norms_row = tuple(jnp.sum(p * p, axis=-1, keepdims=True) for p in parts)
    norms_col = tuple(jnp.swapaxes(n, -1, -2) for n in norms_row)

    score_dtype = jnp.dtype(matmul_dtype) if propagate else jnp.dtype(jnp.float32)
    vmem_limit = 48 * 1024 * 1024

    # ---- pass 1: score -------------------------------------------------------
    pt_i = [pl.BlockSpec((1, blk, p.shape[-1]), lambda b, i, j: (b, i, 0))
            for p in parts]
    nm_i = [pl.BlockSpec((1, blk, 1), lambda b, i, j: (b, i, 0)) for _ in parts]
    pt_j = [pl.BlockSpec((1, blk, p.shape[-1]), lambda b, i, j: (b, j, 0))
            for p in parts]
    nm_j = [pl.BlockSpec((1, 1, blk), lambda b, i, j: (b, 0, j)) for _ in parts]
    in_specs = pt_i + nm_i + pt_j + nm_j
    operands = list(parts) + list(norms_row) + list(parts) + list(norms_col)

    elem = B * M_pad * M_pad
    cost1 = pl.CostEstimate(
        flops=int(elem * (6 * n_parts + 12)),
        transcendentals=int(elem),
        bytes_accessed=int(8 * sum(p.size for p in parts)
                           + 8 * sum(n.size for n in norms_row)
                           + elem * score_dtype.itemsize))

    score = pl.pallas_call(
        functools.partial(_score_kernel, score_fn=score_fn, n_parts=n_parts),
        out_shape=jax.ShapeDtypeStruct((B, M_pad, M_pad), score_dtype),
        grid=(B, nb, nb),
        in_specs=in_specs,
        out_specs=pl.BlockSpec((1, blk, blk), lambda b, i, j: (b, i, j)),
        compiler_params=pltpu.CompilerParams(
            dimension_semantics=("parallel", "parallel", "parallel"),
            vmem_limit_bytes=vmem_limit),
        cost_estimate=cost1,
    )(*operands)

    if not propagate:
        out = score
    else:
        # ---- pass 2: K-tiled MXU matmul over the stored score --------------
        # TODO(synk): on v7x the pass-2 operands could optionally be fp8
        # (e4m3) to halve the HBM stream; bf16/f32 kept for portability.
        cost2 = pl.CostEstimate(
            flops=int(2 * B * M_pad ** 3),
            transcendentals=0,
            bytes_accessed=int(elem * score_dtype.itemsize * (2 * nb + 1)
                               + elem * 4))
        out = pl.pallas_call(
            _propagate_kernel,
            out_shape=jax.ShapeDtypeStruct((B, M_pad, M_pad), jnp.float32),
            grid=(B, nb, nb, nb),
            in_specs=[
                pl.BlockSpec((1, blk, blk), lambda b, i, j, kk: (b, i, kk)),
                pl.BlockSpec((1, blk, blk), lambda b, i, j, kk: (b, kk, j)),
                # k-invariant: DMA'd once per output tile
                pl.BlockSpec((1, blk, blk), lambda b, i, j, kk: (b, i, j)),
            ],
            out_specs=pl.BlockSpec((1, blk, blk), lambda b, i, j, kk: (b, i, j)),
            scratch_shapes=[pltpu.VMEM((blk, blk), jnp.float32)],
            compiler_params=pltpu.CompilerParams(
                dimension_semantics=("parallel", "parallel", "parallel",
                                     "arbitrary"),
                vmem_limit_bytes=vmem_limit),
            cost_estimate=cost2,
        )(score, score, score)

    if M_pad != M:
        out = out[:, :M, :M]
    return out


# ---------------------------------------------------------------------------
# Pure-JAX reference (same math as the PyTorch module, used for verification)
# ---------------------------------------------------------------------------
def _ref_sqdist(a):
    n = jnp.sum(a * a, axis=-1, keepdims=True)
    g = jnp.einsum('bmc,bnc->bmn', a, a, precision=lax.Precision.HIGHEST)
    return jnp.maximum(n + jnp.swapaxes(n, -1, -2) - 2.0 * g, 0.0)


def ref_forward(points, mode, *, inlier_thresh, thresh,
                sigma=None, tau=None, k1=2, k2=1):
    points = points.astype(jnp.float32)
    if mode == 'correspondence':
        d1 = jnp.sqrt(_ref_sqdist(points[..., :3]))
        d2 = jnp.sqrt(_ref_sqdist(points[..., 3:6]))
        dmat = jnp.abs(d1 - d2)
        score = 1.0 - dmat ** 2 / inlier_thresh ** 2
        score = jnp.where(score < thresh, 0.0, score)
        if k1 == 1:
            return score
        return score * jnp.einsum('bmn,bnk->bmk', score, score,
                                  precision=lax.Precision.HIGHEST)
    else:
        sigma_v = inlier_thresh if sigma is None else sigma
        tau_v = thresh if tau is None else tau
        d = jnp.sqrt(_ref_sqdist(points))
        score = jnp.exp(-d ** 2 / sigma_v ** 2)
        score = jnp.where(score < tau_v, 0.0, score)
        if k2 == 1:
            return score
        return score * jnp.einsum('bmn,bnk->bmk', score, score,
                                  precision=lax.Precision.HIGHEST)


# ---------------------------------------------------------------------------
# Main
# ---------------------------------------------------------------------------
if __name__ == "__main__":
    INLIER_THRESH = 0.1          # 3DMatch
    key = jax.random.PRNGKey(0)
    k_a, k_b, k_c, k_d = jax.random.split(key, 4)

    # --- (a) small shapes, realistic thresholds, exact f32 matmul path ------
    B, Ms = 2, 24
    pts_corr_s = 0.02 * jax.random.normal(k_a, (B, Ms, 6), dtype=jnp.float32)
    pts_pc_s = 0.05 * jax.random.normal(k_b, (B, Ms, 3), dtype=jnp.float32)

    out = jax.block_until_ready(graph_constructor_forward(
        pts_corr_s, 'correspondence', inlier_thresh=INLIER_THRESH, thresh=0.9,
        k1=2, block=128, matmul_dtype=jnp.float32))
    ref = ref_forward(pts_corr_s, 'correspondence',
                      inlier_thresh=INLIER_THRESH, thresh=0.9, k1=2)
    assert out.shape == (B, Ms, Ms)
    assert jnp.allclose(out, ref, atol=1e-2, rtol=1e-2)

    out = jax.block_until_ready(graph_constructor_forward(
        pts_pc_s, 'pointcloud', inlier_thresh=INLIER_THRESH, thresh=0.9,
        k2=1, block=128))
    ref = ref_forward(pts_pc_s, 'pointcloud',
                      inlier_thresh=INLIER_THRESH, thresh=0.9, k2=1)
    assert out.shape == (B, Ms, Ms)
    assert jnp.allclose(out, ref, atol=1e-4, rtol=1e-4)

    # --- (b) multi-tile + sentinel padding + K-reduction grid ---------------
    B, Ml = 2, 160               # block=128 -> pads to 256 -> 2x2(x2) grid
    pts_corr_l = 0.005 * jax.random.normal(k_c, (B, Ml, 6), dtype=jnp.float32)
    pts_pc_l = 0.005 * jax.random.normal(k_d, (B, Ml, 3), dtype=jnp.float32)

    ref_corr_l = ref_forward(pts_corr_l, 'correspondence',
                             inlier_thresh=INLIER_THRESH, thresh=0.5, k1=2)
    out_f32 = jax.block_until_ready(graph_constructor_forward(
        pts_corr_l, 'correspondence', inlier_thresh=INLIER_THRESH, thresh=0.5,
        k1=2, block=128, matmul_dtype=jnp.float32))
    assert out_f32.shape == (B, Ml, Ml)
    assert jnp.allclose(out_f32, ref_corr_l, atol=1e-2, rtol=5e-3)

    out_bf16 = jax.block_until_ready(graph_constructor_forward(
        pts_corr_l, 'correspondence', inlier_thresh=INLIER_THRESH, thresh=0.5,
        k1=2, block=128))                       # default bf16 matmul operands
    assert jnp.allclose(out_bf16, ref_corr_l, atol=1e-2, rtol=2e-2)

    ref_pc_l = ref_forward(pts_pc_l, 'pointcloud',
                           inlier_thresh=INLIER_THRESH, thresh=0.5, k2=2)
    out_pc = jax.block_until_ready(graph_constructor_forward(
        pts_pc_l, 'pointcloud', inlier_thresh=INLIER_THRESH, thresh=0.5,
        k2=2, block=128))
    assert out_pc.shape == (B, Ml, Ml)
    assert jnp.allclose(out_pc, ref_pc_l, atol=1e-2, rtol=2e-2)

    # --- (c) default (large) block: single-tile path with padding -----------
    out_def = jax.block_until_ready(graph_constructor_forward(
        pts_corr_l, 'correspondence', inlier_thresh=INLIER_THRESH, thresh=0.5,
        k1=2))                                  # block=512 -> clamped to 256
    assert out_def.shape == (B, Ml, Ml)
    assert jnp.allclose(out_def, ref_corr_l, atol=1e-2, rtol=2e-2)

    print("KERNEL_OK")
</pallas_src>

<mosaic_0001>
module attributes {stable_mosaic.version = 11 : i64} {
  func.func @_score_kernel(%arg0: i32, %arg1: i32, %arg2: i32, %arg3: memref<1x128x3xf32, #tpu.memory_space<vmem>>, %arg4: memref<1x128x3xf32, #tpu.memory_space<vmem>>, %arg5: memref<1x128x1xf32, #tpu.memory_space<vmem>>, %arg6: memref<1x128x1xf32, #tpu.memory_space<vmem>>, %arg7: memref<1x128x3xf32, #tpu.memory_space<vmem>>, %arg8: memref<1x128x3xf32, #tpu.memory_space<vmem>>, %arg9: memref<1x1x128xf32, #tpu.memory_space<vmem>>, %arg10: memref<1x1x128xf32, #tpu.memory_space<vmem>>, %arg11: memref<1x128x128xf32, #tpu.memory_space<vmem>>) attributes {dimension_semantics = [#tpu.dimension_semantics<parallel>, #tpu.dimension_semantics<parallel>, #tpu.dimension_semantics<parallel>], iteration_bounds = array<i64: 2, 1, 1>, scalar_prefetch = 0 : i64, scratch_operands = 0 : i64, tpu.core_type = #tpu.core_type<tc>, window_params = [{transform_indices = @transform_0, window_bounds = array<i64: 1, 128, 3>}, {transform_indices = @transform_1, window_bounds = array<i64: 1, 128, 3>}, {transform_indices = @transform_2, window_bounds = array<i64: 1, 128, 1>}, {transform_indices = @transform_3, window_bounds = array<i64: 1, 128, 1>}, {transform_indices = @transform_4, window_bounds = array<i64: 1, 128, 3>}, {transform_indices = @transform_5, window_bounds = array<i64: 1, 128, 3>}, {transform_indices = @transform_6, window_bounds = array<i64: 1, 1, 128>}, {transform_indices = @transform_7, window_bounds = array<i64: 1, 1, 128>}, {transform_indices = @transform_8, window_bounds = array<i64: 1, 128, 128>}]} {
    %c0 = arith.constant 0 : index
    %c0_0 = arith.constant 0 : index
    %c0_1 = arith.constant 0 : index
    %0 = vector.load %arg3[%c0, %c0_0, %c0_1] : memref<1x128x3xf32, #tpu.memory_space<vmem>>, vector<1x128x3xf32>
    %1 = vector.shape_cast %0 : vector<1x128x3xf32> to vector<128x3xf32>
    %c0_2 = arith.constant 0 : index
    %c0_3 = arith.constant 0 : index
    %c0_4 = arith.constant 0 : index
    %2 = vector.load %arg4[%c0_2, %c0_3, %c0_4] : memref<1x128x3xf32, #tpu.memory_space<vmem>>, vector<1x128x3xf32>
    %3 = vector.shape_cast %2 : vector<1x128x3xf32> to vector<128x3xf32>
    %c0_5 = arith.constant 0 : index
    %c0_6 = arith.constant 0 : index
    %c0_7 = arith.constant 0 : index
    %4 = vector.load %arg5[%c0_5, %c0_6, %c0_7] : memref<1x128x1xf32, #tpu.memory_space<vmem>>, vector<1x128x1xf32>
    %5 = vector.shape_cast %4 : vector<1x128x1xf32> to vector<128x1xf32>
    %c0_8 = arith.constant 0 : index
    %c0_9 = arith.constant 0 : index
    %c0_10 = arith.constant 0 : index
    %6 = vector.load %arg6[%c0_8, %c0_9, %c0_10] : memref<1x128x1xf32, #tpu.memory_space<vmem>>, vector<1x128x1xf32>
    %7 = vector.shape_cast %6 : vector<1x128x1xf32> to vector<128x1xf32>
    %c0_11 = arith.constant 0 : index
    %c0_12 = arith.constant 0 : index
    %c0_13 = arith.constant 0 : index
    %8 = vector.load %arg7[%c0_11, %c0_12, %c0_13] : memref<1x128x3xf32, #tpu.memory_space<vmem>>, vector<1x128x3xf32>
    %9 = vector.shape_cast %8 : vector<1x128x3xf32> to vector<128x3xf32>
    %c0_14 = arith.constant 0 : index
    %c0_15 = arith.constant 0 : index
    %c0_16 = arith.constant 0 : index
    %10 = vector.load %arg8[%c0_14, %c0_15, %c0_16] : memref<1x128x3xf32, #tpu.memory_space<vmem>>, vector<1x128x3xf32>
    %11 = vector.shape_cast %10 : vector<1x128x3xf32> to vector<128x3xf32>
    %c0_17 = arith.constant 0 : index
    %c0_18 = arith.constant 0 : index
    %c0_19 = arith.constant 0 : index
    %12 = vector.load %arg9[%c0_17, %c0_18, %c0_19] : memref<1x1x128xf32, #tpu.memory_space<vmem>>, vector<1x1x128xf32>
    %13 = vector.shape_cast %12 : vector<1x1x128xf32> to vector<1x128xf32>
    %c0_20 = arith.constant 0 : index
    %c0_21 = arith.constant 0 : index
    %c0_22 = arith.constant 0 : index
    %14 = vector.load %arg10[%c0_20, %c0_21, %c0_22] : memref<1x1x128xf32, #tpu.memory_space<vmem>>, vector<1x1x128xf32>
    %15 = vector.shape_cast %14 : vector<1x1x128xf32> to vector<1x128xf32>
    %cst = arith.constant dense<0.000000e+00> : vector<128x128xf32>
    %16 = tpu.matmul %1, %9, %cst {dimension_numbers = #tpu.dot_dimension_numbers<[1], [1], [0], [0], [0, 0, 1, 0], [], []>, precision = #tpu.contract_precision<fp32>} : vector<128x3xf32>, vector<128x3xf32>, vector<128x128xf32> -> vector<128x128xf32>
    %17 = vector.broadcast %5 : vector<128x1xf32> to vector<128x128xf32>
    %18 = vector.broadcast %13 : vector<1x128xf32> to vector<128x128xf32>
    %19 = arith.addf %17, %18 : vector<128x128xf32>
    %cst_23 = arith.constant 2.000000e+00 : f32
    %20 = vector.broadcast %cst_23 : f32 to vector<128x128xf32>
    %21 = arith.mulf %20, %16 : vector<128x128xf32>
    %22 = arith.subf %19, %21 : vector<128x128xf32>
    %cst_24 = arith.constant 0.000000e+00 : f32
    %23 = vector.broadcast %cst_24 : f32 to vector<128x128xf32>
    %24 = arith.maximumf %22, %23 : vector<128x128xf32>
    %cst_25 = arith.constant dense<0.000000e+00> : vector<128x128xf32>
    %25 = tpu.matmul %3, %11, %cst_25 {dimension_numbers = #tpu.dot_dimension_numbers<[1], [1], [0], [0], [0, 0, 1, 0], [], []>, precision = #tpu.contract_precision<fp32>} : vector<128x3xf32>, vector<128x3xf32>, vector<128x128xf32> -> vector<128x128xf32>
    %26 = vector.broadcast %7 : vector<128x1xf32> to vector<128x128xf32>
    %27 = vector.broadcast %15 : vector<1x128xf32> to vector<128x128xf32>
    %28 = arith.addf %26, %27 : vector<128x128xf32>
    %cst_26 = arith.constant 2.000000e+00 : f32
    %29 = vector.broadcast %cst_26 : f32 to vector<128x128xf32>
    %30 = arith.mulf %29, %25 : vector<128x128xf32>
    %31 = arith.subf %28, %30 : vector<128x128xf32>
    %cst_27 = arith.constant 0.000000e+00 : f32
    %32 = vector.broadcast %cst_27 : f32 to vector<128x128xf32>
    %33 = arith.maximumf %31, %32 : vector<128x128xf32>
    %34 = arith.addf %24, %33 : vector<128x128xf32>
    %35 = arith.mulf %24, %33 : vector<128x128xf32>
    %36 = math.sqrt %35 : vector<128x128xf32>
    %cst_28 = arith.constant 2.000000e+00 : f32
    %37 = vector.broadcast %cst_28 : f32 to vector<128x128xf32>
    %38 = arith.mulf %37, %36 : vector<128x128xf32>
    %39 = arith.subf %34, %38 : vector<128x128xf32>
    %cst_29 = arith.constant 0.000000e+00 : f32
    %40 = vector.broadcast %cst_29 : f32 to vector<128x128xf32>
    %41 = arith.maximumf %39, %40 : vector<128x128xf32>
    %cst_30 = arith.constant 1.000000e+02 : f32
    %42 = vector.broadcast %cst_30 : f32 to vector<128x128xf32>
    %43 = arith.mulf %41, %42 : vector<128x128xf32>
    %cst_31 = arith.constant 1.000000e+00 : f32
    %44 = vector.broadcast %cst_31 : f32 to vector<128x128xf32>
    %45 = arith.subf %44, %43 : vector<128x128xf32>
    %cst_32 = arith.constant 0.899999976 : f32
    %46 = vector.broadcast %cst_32 : f32 to vector<128x128xf32>
    %47 = arith.cmpf olt, %45, %46 : vector<128x128xf32>
    %cst_33 = arith.constant 0.000000e+00 : f32
    %48 = vector.broadcast %cst_33 : f32 to vector<128x128xf32>
    %49 = arith.select %47, %48, %45 : vector<128x128xi1>, vector<128x128xf32>
    %c0_34 = arith.constant 0 : index
    %c0_35 = arith.constant 0 : index
    %c0_36 = arith.constant 0 : index
    %50 = vector.load %arg11[%c0_34, %c0_35, %c0_36] : memref<1x128x128xf32, #tpu.memory_space<vmem>>, vector<1x128x128xf32>
    %51 = vector.shape_cast %50 : vector<1x128x128xf32> to vector<128x128xf32>
    %52 = vector.shape_cast %49 : vector<128x128xf32> to vector<1x128x128xf32>
    tpu.vector_store %arg11[%c0_34, %c0_35, %c0_36], %52 {strides = array<i32>} : memref<1x128x128xf32, #tpu.memory_space<vmem>>, vector<1x128x128xf32>,
    return
  }
  func.func @transform_0(%arg0: i32, %arg1: i32, %arg2: i32) -> (i32, i32, i32) {
    %c0_i32 = arith.constant 0 : i32
    %c0_i32_0 = arith.constant 0 : i32
    return %arg0, %arg1, %c0_i32 : i32, i32, i32
  }
  func.func @transform_1(%arg0: i32, %arg1: i32, %arg2: i32) -> (i32, i32, i32) {
    %c0_i32 = arith.constant 0 : i32
    %c0_i32_0 = arith.constant 0 : i32
    return %arg0, %arg1, %c0_i32 : i32, i32, i32
  }
  func.func @transform_2(%arg0: i32, %arg1: i32, %arg2: i32) -> (i32, i32, i32) {
    %c0_i32 = arith.constant 0 : i32
    %c0_i32_0 = arith.constant 0 : i32
    return %arg0, %arg1, %c0_i32 : i32, i32, i32
  }
  func.func @transform_3(%arg0: i32, %arg1: i32, %arg2: i32) -> (i32, i32, i32) {
    %c0_i32 = arith.constant 0 : i32
    %c0_i32_0 = arith.constant 0 : i32
    return %arg0, %arg1, %c0_i32 : i32, i32, i32
  }
  func.func @transform_4(%arg0: i32, %arg1: i32, %arg2: i32) -> (i32, i32, i32) {
    %c0_i32 = arith.constant 0 : i32
    %c0_i32_0 = arith.constant 0 : i32
    return %arg0, %arg2, %c0_i32 : i32, i32, i32
  }
  func.func @transform_5(%arg0: i32, %arg1: i32, %arg2: i32) -> (i32, i32, i32) {
    %c0_i32 = arith.constant 0 : i32
    %c0_i32_0 = arith.constant 0 : i32
    return %arg0, %arg2, %c0_i32 : i32, i32, i32
  }
  func.func @transform_6(%arg0: i32, %arg1: i32, %arg2: i32) -> (i32, i32, i32) {
    %c0_i32 = arith.constant 0 : i32
    %c0_i32_0 = arith.constant 0 : i32
    return %arg0, %c0_i32, %arg2 : i32, i32, i32
  }
  func.func @transform_7(%arg0: i32, %arg1: i32, %arg2: i32) -> (i32, i32, i32) {
    %c0_i32 = arith.constant 0 : i32
    %c0_i32_0 = arith.constant 0 : i32
    return %arg0, %c0_i32, %arg2 : i32, i32, i32
  }
  func.func @transform_8(%arg0: i32, %arg1: i32, %arg2: i32) -> (i32, i32, i32) {
    %c0_i32 = arith.constant 0 : i32
    return %arg0, %arg1, %arg2 : i32, i32, i32
  }
}

</mosaic_0001>

<llo_original>
// kernel: tpu_custom_call.1
$region0: #{tpu_custom_call.1}
  #allocation0 [shape = 'u32[]', space=smem, size = 0x4, offset = 0x4, fixed_abs, tag = 'smem constant byte address 0x4 - core index']
  #allocation1 [shape = 'u32[144,128]{1,0:T(1,128)}', space=vmem, size = 0x12000, scoped, tag = 'internal scratch']
  %s0 = inlined_call_operand.vmem [shape: f32[2,128,3], index: 0, kind: input, shape index: {}]
  %s1 = inlined_call_operand.vmem [shape: f32[2,128,3], index: 1, kind: input, shape index: {}]
  %s2 = inlined_call_operand.vmem [shape: f32[2,128,1], index: 2, kind: input, shape index: {}]
  %s3 = inlined_call_operand.vmem [shape: f32[2,128,1], index: 3, kind: input, shape index: {}]
  %s4 = inlined_call_operand.vmem [shape: f32[2,128,3], index: 4, kind: input, shape index: {}]
  %s5 = inlined_call_operand.vmem [shape: f32[2,128,3], index: 5, kind: input, shape index: {}]
  %s6 = inlined_call_operand.vmem [shape: f32[2,1,128], index: 6, kind: input, shape index: {}]
  %s7 = inlined_call_operand.vmem [shape: f32[2,1,128], index: 7, kind: input, shape index: {}]
  %s8 = inlined_call_operand.hbm [shape: f32[2,128,128], index: 8, kind: output, shape index: {}]
  %s9 = sld [smem:[#allocation0]]
  $region65: #{tpu_custom_call.1} parent=0
    _
  %s11 = ssub.s32 1, %s9
  %s12 = scalar_select 0, %s11, %s9
  $region1: #{tpu_custom_call.1} parent=0
    #allocation2 [shape = 'u8[131072]{0}', space=vmem, size = 0x20000, scoped, tag = 'output window, operand 0']
    #allocation3 [shape = 's32[2]{0}', space=sflag, size = 0x8, scoped, tag = 'scoped memory for tpu_custom_call.1']
    %13 = vsyncpa [#allocation3], 0
    %s14 = scalar_lea.sflag [#allocation3], 1
    %15 = vsyncpa %s14, 0
    loop: start=0, step=1, limit=4
    $region2: #{tpu_custom_call.1} parent=1 // loop_pre_header
      _
    $region3: #{tpu_custom_call.1} parent=1 // loop_header
      %s17 = sphi 0, %s21
      %p18 = scmp.ge.s32.totalorder %s17, 4
      %s24 = sphi 0, %s43
      %s25 = sphi 0, %s39
      %s26 = sphi 0, %s35
      %s27 = sphi 0, %s24
      %s28 = sphi 0, %s25
      %s29 = sphi 0, %s26
      %s30 = sphi 0, %s27
      %s31 = sphi 0, %s28
      %s32 = sphi 0, %s29
      %s48 = sphi 0, %s50
      %s51 = sphi 0, %s48
      %s52 = sphi 0, %s51
      %s68 = sphi 0, %s52
      %s76 = sphi 0, %s78
      %s79 = sphi 0, %s76
      %s80 = sphi 0, %s79
      %s96 = sphi 0, %s80
      %s104 = sphi 0, %s106
      %s107 = sphi 0, %s104
      %s108 = sphi 0, %s107
      %s124 = sphi 0, %s108
      %s132 = sphi 0, %s134
      %s135 = sphi 0, %s132
      %s136 = sphi 0, %s135
      %s152 = sphi 0, %s136
      %s160 = sphi 0, %s162
      %s163 = sphi 0, %s160
      %s164 = sphi 0, %s163
      %s180 = sphi 0, %s164
      %s188 = sphi 0, %s190
      %s191 = sphi 0, %s188
      %s192 = sphi 0, %s191
      %s208 = sphi 0, %s192
      %s216 = sphi 0, %s218
      %s219 = sphi 0, %s216
      %s220 = sphi 0, %s219
      %s236 = sphi 0, %s220
      %s244 = sphi 0, %s246
      %s247 = sphi 0, %s244
      %s248 = sphi 0, %s247
      %s264 = sphi 0, %s248
      %s274 = sphi 0, %s276
      %s277 = sphi 0, %s274
      %s278 = sphi 0, %s277
      %s294 = sphi 0, %s278
    $region4: #{tpu_custom_call.1} parent=1 // loop_header_branch
      %20 = sbr.rel (%p18) target = $region8
    $region5: #{tpu_custom_call.1} parent=1 // loop_body
      %s22 = ssub.s32 %s17, 1
      %s23 = ssub.s32 %s17, 2
      %s33 = sadd.s32 1, %s26
      %p34 = scmp.ge.s32.totalorder %s33, 1
      %s35 = scalar_select %p34, 0, %s33
      %s36 = sadd.s32 1, %s25
      %s37 = scalar_select %p34, %s36, %s25
      %p38 = scmp.ge.s32.totalorder %s37, 1
      %s39 = scalar_select %p38, 0, %s37
      %s40 = sadd.s32 1, %s24
      %s41 = scalar_select %p38, %s40, %s24
      %p42 = scmp.ge.s32.totalorder %s41, 2
      %s43 = scalar_select %p42, 0, %s41
      %s44 = ssub.s32 %s24, %s43
      %s45 = ssub.s32 %s25, %s39
      %s46 = sor.u32 %s44, %s45
      %p47 = scmp.eq.s32.totalorder %s46, 0
      %s49 = sadd.s32 %s48, 1
      %s50 = scalar_select %p47, %s48, %s49
      %p53 = pneg %p47
      %p54 = scmp.eq.s32.totalorder %s17, 1
      %p55 = por %p53, %p54
      %p56 = scmp.ne.s32.totalorder %s48, %s51
      %p57 = scmp.eq.s32.totalorder %s17, 0
      %p58 = por %p56, %p57
      %p59 = scmp.ne.s32.totalorder %s48, %s51
      %p60 = scmp.eq.s32.totalorder %s22, 1
      %p61 = por %p59, %p60
      %p62 = scmp.ne.s32.totalorder %s51, %s52
      %p63 = scmp.eq.s32.totalorder %s22, 0
      %p64 = por %p62, %p63
      %p65 = scmp.ne.s32.totalorder %s51, %s52
      %p66 = scmp.eq.s32.totalorder %s23, 1
      %p67 = por %p65, %p66
      %p69 = scmp.ne.s32.totalorder %s52, %s68
      %p70 = scmp.eq.s32.totalorder %s23, 0
      %p71 = por %p69, %p70
      %s72 = ssub.s32 %s24, %s43
      %s73 = ssub.s32 %s25, %s39
      %s74 = sor.u32 %s72, %s73
      %p75 = scmp.eq.s32.totalorder %s74, 0
      %s77 = sadd.s32 %s76, 1
      %s78 = scalar_select %p75, %s76, %s77
      %p81 = pneg %p75
      %p82 = scmp.eq.s32.totalorder %s17, 1
      %p83 = por %p81, %p82
      %p84 = scmp.ne.s32.totalorder %s76, %s79
      %p85 = scmp.eq.s32.totalorder %s17, 0
      %p86 = por %p84, %p85
      %p87 = scmp.ne.s32.totalorder %s76, %s79
      %p88 = scmp.eq.s32.totalorder %s22, 1
      %p89 = por %p87, %p88
      %p90 = scmp.ne.s32.totalorder %s79, %s80
      %p91 = scmp.eq.s32.totalorder %s22, 0
      %p92 = por %p90, %p91
      %p93 = scmp.ne.s32.totalorder %s79, %s80
      %p94 = scmp.eq.s32.totalorder %s23, 1
      %p95 = por %p93, %p94
      %p97 = scmp.ne.s32.totalorder %s80, %s96
      %p98 = scmp.eq.s32.totalorder %s23, 0
      %p99 = por %p97, %p98
      %s100 = ssub.s32 %s24, %s43
      %s101 = ssub.s32 %s25, %s39
      %s102 = sor.u32 %s100, %s101
      %p103 = scmp.eq.s32.totalorder %s102, 0
      %s105 = sadd.s32 %s104, 1
      %s106 = scalar_select %p103, %s104, %s105
      %p109 = pneg %p103
      %p110 = scmp.eq.s32.totalorder %s17, 1
      %p111 = por %p109, %p110
      %p112 = scmp.ne.s32.totalorder %s104, %s107
      %p113 = scmp.eq.s32.totalorder %s17, 0
      %p114 = por %p112, %p113
      %p115 = scmp.ne.s32.totalorder %s104, %s107
      %p116 = scmp.eq.s32.totalorder %s22, 1
      %p117 = por %p115, %p116
      %p118 = scmp.ne.s32.totalorder %s107, %s108
      %p119 = scmp.eq.s32.totalorder %s22, 0
      %p120 = por %p118, %p119
      %p121 = scmp.ne.s32.totalorder %s107, %s108
      %p122 = scmp.eq.s32.totalorder %s23, 1
      %p123 = por %p121, %p122
      %p125 = scmp.ne.s32.totalorder %s108, %s124
      %p126 = scmp.eq.s32.totalorder %s23, 0
      %p127 = por %p125, %p126
      %s128 = ssub.s32 %s24, %s43
      %s129 = ssub.s32 %s25, %s39
      %s130 = sor.u32 %s128, %s129
      %p131 = scmp.eq.s32.totalorder %s130, 0
      %s133 = sadd.s32 %s132, 1
      %s134 = scalar_select %p131, %s132, %s133
      %p137 = pneg %p131
      %p138 = scmp.eq.s32.totalorder %s17, 1
      %p139 = por %p137, %p138
      %p140 = scmp.ne.s32.totalorder %s132, %s135
      %p141 = scmp.eq.s32.totalorder %s17, 0
      %p142 = por %p140, %p141
      %p143 = scmp.ne.s32.totalorder %s132, %s135
      %p144 = scmp.eq.s32.totalorder %s22, 1
      %p145 = por %p143, %p144
      %p146 = scmp.ne.s32.totalorder %s135, %s136
      %p147 = scmp.eq.s32.totalorder %s22, 0
      %p148 = por %p146, %p147
      %p149 = scmp.ne.s32.totalorder %s135, %s136
      %p150 = scmp.eq.s32.totalorder %s23, 1
      %p151 = por %p149, %p150
      %p153 = scmp.ne.s32.totalorder %s136, %s152
      %p154 = scmp.eq.s32.totalorder %s23, 0
      %p155 = por %p153, %p154
      %s156 = ssub.s32 %s24, %s43
      %s157 = ssub.s32 %s26, %s35
      %s158 = sor.u32 %s156, %s157
      %p159 = scmp.eq.s32.totalorder %s158, 0
      %s161 = sadd.s32 %s160, 1
      %s162 = scalar_select %p159, %s160, %s161
      %p165 = pneg %p159
      %p166 = scmp.eq.s32.totalorder %s17, 1
      %p167 = por %p165, %p166
      %p168 = scmp.ne.s32.totalorder %s160, %s163
      %p169 = scmp.eq.s32.totalorder %s17, 0
      %p170 = por %p168, %p169
      %p171 = scmp.ne.s32.totalorder %s160, %s163
      %p172 = scmp.eq.s32.totalorder %s22, 1
      %p173 = por %p171, %p172
      %p174 = scmp.ne.s32.totalorder %s163, %s164
      %p175 = scmp.eq.s32.totalorder %s22, 0
      %p176 = por %p174, %p175
      %p177 = scmp.ne.s32.totalorder %s163, %s164
      %p178 = scmp.eq.s32.totalorder %s23, 1
      %p179 = por %p177, %p178
      %p181 = scmp.ne.s32.totalorder %s164, %s180
      %p182 = scmp.eq.s32.totalorder %s23, 0
      %p183 = por %p181, %p182
      %s184 = ssub.s32 %s24, %s43
      %s185 = ssub.s32 %s26, %s35
      %s186 = sor.u32 %s184, %s185
      %p187 = scmp.eq.s32.totalorder %s186, 0
      %s189 = sadd.s32 %s188, 1
      %s190 = scalar_select %p187, %s188, %s189
      %p193 = pneg %p187
      %p194 = scmp.eq.s32.totalorder %s17, 1
      %p195 = por %p193, %p194
      %p196 = scmp.ne.s32.totalorder %s188, %s191
      %p197 = scmp.eq.s32.totalorder %s17, 0
      %p198 = por %p196, %p197
      %p199 = scmp.ne.s32.totalorder %s188, %s191
      %p200 = scmp.eq.s32.totalorder %s22, 1
      %p201 = por %p199, %p200
      %p202 = scmp.ne.s32.totalorder %s191, %s192
      %p203 = scmp.eq.s32.totalorder %s22, 0
      %p204 = por %p202, %p203
      %p205 = scmp.ne.s32.totalorder %s191, %s192
      %p206 = scmp.eq.s32.totalorder %s23, 1
      %p207 = por %p205, %p206
      %p209 = scmp.ne.s32.totalorder %s192, %s208
      %p210 = scmp.eq.s32.totalorder %s23, 0
      %p211 = por %p209, %p210
      %s212 = ssub.s32 %s24, %s43
      %s213 = ssub.s32 %s26, %s35
      %s214 = sor.u32 %s212, %s213
      %p215 = scmp.eq.s32.totalorder %s214, 0
      %s217 = sadd.s32 %s216, 1
      %s218 = scalar_select %p215, %s216, %s217
      %p221 = pneg %p215
      %p222 = scmp.eq.s32.totalorder %s17, 1
      %p223 = por %p221, %p222
      %p224 = scmp.ne.s32.totalorder %s216, %s219
      %p225 = scmp.eq.s32.totalorder %s17, 0
      %p226 = por %p224, %p225
      %p227 = scmp.ne.s32.totalorder %s216, %s219
      %p228 = scmp.eq.s32.totalorder %s22, 1
      %p229 = por %p227, %p228
      %p230 = scmp.ne.s32.totalorder %s219, %s220
      %p231 = scmp.eq.s32.totalorder %s22, 0
      %p232 = por %p230, %p231
      %p233 = scmp.ne.s32.totalorder %s219, %s220
      %p234 = scmp.eq.s32.totalorder %s23, 1
      %p235 = por %p233, %p234
      %p237 = scmp.ne.s32.totalorder %s220, %s236
      %p238 = scmp.eq.s32.totalorder %s23, 0
      %p239 = por %p237, %p238
      %s240 = ssub.s32 %s24, %s43
      %s241 = ssub.s32 %s26, %s35
      %s242 = sor.u32 %s240, %s241
      %p243 = scmp.eq.s32.totalorder %s242, 0
      %s245 = sadd.s32 %s244, 1
      %s246 = scalar_select %p243, %s244, %s245
      %p249 = pneg %p243
      %p250 = scmp.eq.s32.totalorder %s17, 1
      %p251 = por %p249, %p250
      %p252 = scmp.ne.s32.totalorder %s244, %s247
      %p253 = scmp.eq.s32.totalorder %s17, 0
      %p254 = por %p252, %p253
      %p255 = scmp.ne.s32.totalorder %s244, %s247
      %p256 = scmp.eq.s32.totalorder %s22, 1
      %p257 = por %p255, %p256
      %p258 = scmp.ne.s32.totalorder %s247, %s248
      %p259 = scmp.eq.s32.totalorder %s22, 0
      %p260 = por %p258, %p259
      %p261 = scmp.ne.s32.totalorder %s247, %s248
      %p262 = scmp.eq.s32.totalorder %s23, 1
      %p263 = por %p261, %p262
      %p265 = scmp.ne.s32.totalorder %s248, %s264
      %p266 = scmp.eq.s32.totalorder %s23, 0
      %p267 = por %p265, %p266
      %s268 = ssub.s32 %s24, %s43
      %s269 = ssub.s32 %s25, %s39
      %s270 = sor.u32 %s268, %s269
      %s271 = ssub.s32 %s26, %s35
      %s272 = sor.u32 %s270, %s271
      %p273 = scmp.eq.s32.totalorder %s272, 0
      %s275 = sadd.s32 %s274, 1
      %s276 = scalar_select %p273, %s274, %s275
      %p279 = pneg %p273
      %p280 = scmp.eq.s32.totalorder %s17, 1
      %p281 = por %p279, %p280
      %p282 = scmp.ne.s32.totalorder %s274, %s277
      %p283 = scmp.eq.s32.totalorder %s17, 0
      %p284 = por %p282, %p283
      %p285 = scmp.ne.s32.totalorder %s274, %s277
      %p286 = scmp.eq.s32.totalorder %s22, 1
      %p287 = por %p285, %p286
      %p288 = scmp.ne.s32.totalorder %s277, %s278
      %p289 = scmp.eq.s32.totalorder %s22, 0
      %p290 = por %p288, %p289
      %p291 = scmp.ne.s32.totalorder %s277, %s278
      %p292 = scmp.eq.s32.totalorder %s23, 1
      %p293 = por %p291, %p292
      %p295 = scmp.ne.s32.totalorder %s278, %s294
      %p296 = scmp.eq.s32.totalorder %s23, 0
      %p297 = por %p295, %p296
      %p298 = scmp.le.s32.totalorder 1, %s17
      %p299 = scmp.lt.s32.totalorder %s17, 3
      %p300 = pnand %p298, %p299
      %p301 = pneg %p300
      // Predicated region
      $region9: #{tpu_custom_call.1} parent=5 // pred_check
        _
      $region10: #{tpu_custom_call.1} parent=5 // pred_check_branch
        %303 = sbr.rel (%p300) target = $region12
      $region11: #{tpu_custom_call.1} parent=5 // pred_region
        %s304 = ssub.s32 %s17, 1
      $region12: #{tpu_custom_call.1} parent=5 // pred_fallthru
        _
      %p305 = scmp.lt.s32.totalorder %s17, 2
      // Predicated region
      $region13: #{tpu_custom_call.1} parent=5 // pred_check
        %p306 = pneg %p305
      $region14: #{tpu_custom_call.1} parent=5 // pred_check_branch
        %308 = sbr.rel (%p306) target = $region16
      $region15: #{tpu_custom_call.1} parent=5 // pred_region
        // Predicated region
        $region17: #{tpu_custom_call.1} parent=15 // pred_check
          %p309 = pneg %p58
        $region18: #{tpu_custom_call.1} parent=15 // pred_check_branch
          %311 = sbr.rel (%p309) target = $region20
        $region19: #{tpu_custom_call.1} parent=15 // pred_region
          %s312 = smul.u32 16, %s25
          %p313 = scmp.lt.s32.totalorder %s24, 1
          %s314 = scalar_select %p313, %s24, 1
          %p315 = scmp.lt.s32.totalorder %s312, 15
          %s316 = scalar_select %p315, %s312, 15
          %s317 = smul.addr %s314, 16
          %s318 = sadd.s32 %s316, %s317
          %s319 = smul.addr %s318, 8
          %s320 = scalar_lea.vmem %s0, %s319
          %s321 = smul.u32 16, %s25
        $region20: #{tpu_custom_call.1} parent=15 // pred_fallthru
          _
        // Predicated region
        $region21: #{tpu_custom_call.1} parent=15 // pred_check
          %p322 = pneg %p86
        $region22: #{tpu_custom_call.1} parent=15 // pred_check_branch
          %324 = sbr.rel (%p322) target = $region24
        $region23: #{tpu_custom_call.1} parent=15 // pred_region
          %s325 = smul.u32 16, %s25
          %p326 = scmp.lt.s32.totalorder %s24, 1
          %s327 = scalar_select %p326, %s24, 1
          %p328 = scmp.lt.s32.totalorder %s325, 15
          %s329 = scalar_select %p328, %s325, 15
          %s330 = smul.addr %s327, 16
          %s331 = sadd.s32 %s329, %s330
          %s332 = smul.addr %s331, 8
          %s333 = scalar_lea.vmem %s1, %s332
          %s334 = smul.u32 16, %s25
        $region24: #{tpu_custom_call.1} parent=15 // pred_fallthru
          _
        // Predicated region
        $region25: #{tpu_custom_call.1} parent=15 // pred_check
          %p335 = pneg %p114
        $region26: #{tpu_custom_call.1} parent=15 // pred_check_branch
          %337 = sbr.rel (%p335) target = $region28
        $region27: #{tpu_custom_call.1} parent=15 // pred_region
          %s338 = smul.u32 16, %s25
          %p339 = scmp.lt.s32.totalorder %s24, 1
          %s340 = scalar_select %p339, %s24, 1
          %p341 = scmp.lt.s32.totalorder %s338, 15
          %s342 = scalar_select %p341, %s338, 15
          %s343 = smul.addr %s340, 16
          %s344 = sadd.s32 %s342, %s343
          %s345 = smul.addr %s344, 8
          %s346 = scalar_lea.vmem %s2, %s345
          %s347 = smul.u32 16, %s25
        $region28: #{tpu_custom_call.1} parent=15 // pred_fallthru
          _
        // Predicated region
        $region29: #{tpu_custom_call.1} parent=15 // pred_check
          %p348 = pneg %p142
        $region30: #{tpu_custom_call.1} parent=15 // pred_check_branch
          %350 = sbr.rel (%p348) target = $region32
        $region31: #{tpu_custom_call.1} parent=15 // pred_region
          %s351 = smul.u32 16, %s25
          %p352 = scmp.lt.s32.totalorder %s24, 1
          %s353 = scalar_select %p352, %s24, 1
          %p354 = scmp.lt.s32.totalorder %s351, 15
          %s355 = scalar_select %p354, %s351, 15
          %s356 = smul.addr %s353, 16
          %s357 = sadd.s32 %s355, %s356
          %s358 = smul.addr %s357, 8
          %s359 = scalar_lea.vmem %s3, %s358
          %s360 = smul.u32 16, %s25
        $region32: #{tpu_custom_call.1} parent=15 // pred_fallthru
          _
        // Predicated region
        $region33: #{tpu_custom_call.1} parent=15 // pred_check
          %p361 = pneg %p170
        $region34: #{tpu_custom_call.1} parent=15 // pred_check_branch
          %363 = sbr.rel (%p361) target = $region36
        $region35: #{tpu_custom_call.1} parent=15 // pred_region
          %s364 = smul.u32 16, %s26
          %p365 = scmp.lt.s32.totalorder %s24, 1
          %s366 = scalar_select %p365, %s24, 1
          %p367 = scmp.lt.s32.totalorder %s364, 15
          %s368 = scalar_select %p367, %s364, 15
          %s369 = smul.addr %s366, 16
          %s370 = sadd.s32 %s368, %s369
          %s371 = smul.addr %s370, 8
          %s372 = scalar_lea.vmem %s4, %s371
          %s373 = smul.u32 16, %s26
        $region36: #{tpu_custom_call.1} parent=15 // pred_fallthru
          _
        // Predicated region
        $region37: #{tpu_custom_call.1} parent=15 // pred_check
          %p374 = pneg %p198
        $region38: #{tpu_custom_call.1} parent=15 // pred_check_branch
          %376 = sbr.rel (%p374) target = $region40
        $region39: #{tpu_custom_call.1} parent=15 // pred_region
          %s377 = smul.u32 16, %s26
          %p378 = scmp.lt.s32.totalorder %s24, 1
          %s379 = scalar_select %p378, %s24, 1
          %p380 = scmp.lt.s32.totalorder %s377, 15
          %s381 = scalar_select %p380, %s377, 15
          %s382 = smul.addr %s379, 16
          %s383 = sadd.s32 %s381, %s382
          %s384 = smul.addr %s383, 8
          %s385 = scalar_lea.vmem %s5, %s384
          %s386 = smul.u32 16, %s26
        $region40: #{tpu_custom_call.1} parent=15 // pred_fallthru
          _
        // Predicated region
        $region41: #{tpu_custom_call.1} parent=15 // pred_check
          %p387 = pneg %p226
        $region42: #{tpu_custom_call.1} parent=15 // pred_check_branch
          %389 = sbr.rel (%p387) target = $region44
        $region43: #{tpu_custom_call.1} parent=15 // pred_region
          %p390 = scmp.lt.s32.totalorder %s24, 1
          %s391 = scalar_select %p390, %s24, 1
          %p392 = scmp.lt.s32.totalorder %s26, 0
          %s393 = scalar_select %p392, %s26, 0
          %s394 = sadd.s32 %s393, %s391
          %s395 = scalar_lea.vmem %s6, %s394
        $region44: #{tpu_custom_call.1} parent=15 // pred_fallthru
          _
        // Predicated region
        $region45: #{tpu_custom_call.1} parent=15 // pred_check
          %p396 = pneg %p254
        $region46: #{tpu_custom_call.1} parent=15 // pred_check_branch
          %398 = sbr.rel (%p396) target = $region48
        $region47: #{tpu_custom_call.1} parent=15 // pred_region
          %p399 = scmp.lt.s32.totalorder %s24, 1
          %s400 = scalar_select %p399, %s24, 1
          %p401 = scmp.lt.s32.totalorder %s26, 0
          %s402 = scalar_select %p401, %s26, 0
          %s403 = sadd.s32 %s402, %s400
          %s404 = scalar_lea.vmem %s7, %s403
        $region48: #{tpu_custom_call.1} parent=15 // pred_fallthru
          _
      $region16: #{tpu_custom_call.1} parent=5 // pred_fallthru
        _
      %p405 = scmp.le.s32.totalorder 1, %s17
      %p406 = scmp.lt.s32.totalorder %s17, 3
      %p407 = pnand %p405, %p406
      %p408 = pneg %p407
      // Predicated region
      $region49: #{tpu_custom_call.1} parent=5 // pred_check
        _
      $region50: #{tpu_custom_call.1} parent=5 // pred_check_branch
        %410 = sbr.rel (%p407) target = $region52
      $region51: #{tpu_custom_call.1} parent=5 // pred_region
        %s411 = ssub.s32 %s17, 1
        %s412 = smul.u32 16, %s28
        %p413 = scmp.lt.s32.totalorder %s27, 1
        %s414 = scalar_select %p413, %s27, 1
        %p415 = scmp.lt.s32.totalorder %s412, 15
        %s416 = scalar_select %p415, %s412, 15
        %s417 = smul.addr %s414, 16
        %s418 = sadd.s32 %s416, %s417
        %s419 = smul.addr %s418, 8
        %s420 = scalar_lea.vmem %s0, %s419
        %p421 = pneg %p64
        %p422 = pneg %p61
        %s423 = smul.u32 16, %s28
        %p424 = scmp.lt.s32.totalorder %s27, 1
        %s425 = scalar_select %p424, %s27, 1
        %p426 = scmp.lt.s32.totalorder %s423, 15
        %s427 = scalar_select %p426, %s423, 15
        %s428 = smul.addr %s425, 16
        %s429 = sadd.s32 %s427, %s428
        %s430 = smul.addr %s429, 8
        %s431 = scalar_lea.vmem %s1, %s430
        %p432 = pneg %p92
        %p433 = pneg %p89
        %s434 = smul.u32 16, %s28
        %p435 = scmp.lt.s32.totalorder %s27, 1
        %s436 = scalar_select %p435, %s27, 1
        %p437 = scmp.lt.s32.totalorder %s434, 15
        %s438 = scalar_select %p437, %s434, 15
        %s439 = smul.addr %s436, 16
        %s440 = sadd.s32 %s438, %s439
        %s441 = smul.addr %s440, 8
        %s442 = scalar_lea.vmem %s2, %s441
        %p443 = pneg %p120
        %p444 = pneg %p117
        %s445 = smul.u32 16, %s28
        %p446 = scmp.lt.s32.totalorder %s27, 1
        %s447 = scalar_select %p446, %s27, 1
        %p448 = scmp.lt.s32.totalorder %s445, 15
        %s449 = scalar_select %p448, %s445, 15
        %s450 = smul.addr %s447, 16
        %s451 = sadd.s32 %s449, %s450
        %s452 = smul.addr %s451, 8
        %s453 = scalar_lea.vmem %s3, %s452
        %p454 = pneg %p148
        %p455 = pneg %p145
        %s456 = smul.u32 16, %s29
        %p457 = scmp.lt.s32.totalorder %s27, 1
        %s458 = scalar_select %p457, %s27, 1
        %p459 = scmp.lt.s32.totalorder %s456, 15
        %s460 = scalar_select %p459, %s456, 15
        %s461 = smul.addr %s458, 16
        %s462 = sadd.s32 %s460, %s461
        %s463 = smul.addr %s462, 8
        %s464 = scalar_lea.vmem %s4, %s463
        %p465 = pneg %p176
        %p466 = pneg %p173
        %s467 = smul.u32 16, %s29
        %p468 = scmp.lt.s32.totalorder %s27, 1
        %s469 = scalar_select %p468, %s27, 1
        %p470 = scmp.lt.s32.totalorder %s467, 15
        %s471 = scalar_select %p470, %s467, 15
        %s472 = smul.addr %s469, 16
        %s473 = sadd.s32 %s471, %s472
        %s474 = smul.addr %s473, 8
        %s475 = scalar_lea.vmem %s5, %s474
        %p476 = pneg %p204
        %p477 = pneg %p201
        %p478 = scmp.lt.s32.totalorder %s27, 1
        %s479 = scalar_select %p478, %s27, 1
        %p480 = scmp.lt.s32.totalorder %s29, 0
        %s481 = scalar_select %p480, %s29, 0
        %s482 = sadd.s32 %s481, %s479
        %s483 = scalar_lea.vmem %s6, %s482
        %p484 = pneg %p232
        %p485 = pneg %p229
        %p486 = scmp.lt.s32.totalorder %s27, 1
        %s487 = scalar_select %p486, %s27, 1
        %p488 = scmp.lt.s32.totalorder %s29, 0
        %s489 = scalar_select %p488, %s29, 0
        %s490 = sadd.s32 %s489, %s487
        %s491 = scalar_lea.vmem %s7, %s490
        %p492 = pneg %p260
        %p493 = pneg %p257
        %p494 = pneg %p290
        %p495 = pneg %p287
        %s496 = sand.u32 %s277, 1
        %s497 = scalar_lea.sflag [#allocation3], %s496
        %s498 = sand.u32 %s277, 1
        %s499 = smul.addr %s498, 128
        %s500 = scalar_lea.vmem [#allocation2], %s499
        %s501 = smul.u32 16, %s28
        %p502 = scmp.lt.s32.totalorder %s27, 1
        %s503 = scalar_select %p502, %s27, 1
        %p504 = scmp.lt.s32.totalorder %s501, 15
        %s505 = scalar_select %p504, %s501, 15
        %s506 = smul.addr %s503, 16
        %s507 = sadd.s32 %s505, %s506
        %s508 = smul.addr %s507, 8
        %s509 = scalar_lea.vmem %s0, %s508
        %s510 = smul.u32 16, %s28
        %s511 = smul.u32 16, %s28
        %p512 = scmp.lt.s32.totalorder %s27, 1
        %s513 = scalar_select %p512, %s27, 1
        %p514 = scmp.lt.s32.totalorder %s511, 15
        %s515 = scalar_select %p514, %s511, 15
        %s516 = smul.addr %s513, 16
        %s517 = sadd.s32 %s515, %s516
        %s518 = smul.addr %s517, 8
        %s519 = scalar_lea.vmem %s1, %s518
        %s520 = smul.u32 16, %s28
        %s521 = smul.u32 16, %s28
        %p522 = scmp.lt.s32.totalorder %s27, 1
        %s523 = scalar_select %p522, %s27, 1
        %p524 = scmp.lt.s32.totalorder %s521, 15
        %s525 = scalar_select %p524, %s521, 15
        %s526 = smul.addr %s523, 16
        %s527 = sadd.s32 %s525, %s526
        %s528 = smul.addr %s527, 8
        %s529 = scalar_lea.vmem %s2, %s528
        %s530 = smul.u32 16, %s28
        %s531 = smul.u32 16, %s28
        %p532 = scmp.lt.s32.totalorder %s27, 1
        %s533 = scalar_select %p532, %s27, 1
        %p534 = scmp.lt.s32.totalorder %s531, 15
        %s535 = scalar_select %p534, %s531, 15
        %s536 = smul.addr %s533, 16
        %s537 = sadd.s32 %s535, %s536
        %s538 = smul.addr %s537, 8
        %s539 = scalar_lea.vmem %s3, %s538
        %s540 = smul.u32 16, %s28
        %s541 = smul.u32 16, %s29
        %p542 = scmp.lt.s32.totalorder %s27, 1
        %s543 = scalar_select %p542, %s27, 1
        %p544 = scmp.lt.s32.totalorder %s541, 15
        %s545 = scalar_select %p544, %s541, 15
        %s546 = smul.addr %s543, 16
        %s547 = sadd.s32 %s545, %s546
        %s548 = smul.addr %s547, 8
        %s549 = scalar_lea.vmem %s4, %s548
        %s550 = smul.u32 16, %s29
        %s551 = smul.u32 16, %s29
        %p552 = scmp.lt.s32.totalorder %s27, 1
        %s553 = scalar_select %p552, %s27, 1
        %p554 = scmp.lt.s32.totalorder %s551, 15
        %s555 = scalar_select %p554, %s551, 15
        %s556 = smul.addr %s553, 16
        %s557 = sadd.s32 %s555, %s556
        %s558 = smul.addr %s557, 8
        %s559 = scalar_lea.vmem %s5, %s558
        %s560 = smul.u32 16, %s29
        %p561 = scmp.lt.s32.totalorder %s27, 1
        %s562 = scalar_select %p561, %s27, 1
        %p563 = scmp.lt.s32.totalorder %s29, 0
        %s564 = scalar_select %p563, %s29, 0
        %s565 = sadd.s32 %s564, %s562
        %s566 = scalar_lea.vmem %s6, %s565
        %p567 = scmp.lt.s32.totalorder %s27, 1
        %s568 = scalar_select %p567, %s27, 1
        %p569 = scmp.lt.s32.totalorder %s29, 0
        %s570 = scalar_select %p569, %s29, 0
        %s571 = sadd.s32 %s570, %s568
        %s572 = scalar_lea.vmem %s7, %s571
        %s573 = smul.u32 16, %s28
        %v574 = vld [vmem:[%s509] sm:$0xff]
        %v575 = vld [vmem:[%s509 + $0x8] sm:$0xff]
        %v576 = vld [vmem:[%s509 + $0x10] sm:$0xff]
        %v577 = vld [vmem:[%s509 + $0x18] sm:$0xff]
        %v578 = vld [vmem:[%s509 + $0x20] sm:$0xff]
        %v579 = vld [vmem:[%s509 + $0x28] sm:$0xff]
        %v580 = vld [vmem:[%s509 + $0x30] sm:$0xff]
        %v581 = vld [vmem:[%s509 + $0x38] sm:$0xff]
        %v582 = vld [vmem:[%s509 + $0x40] sm:$0xff]
        %v583 = vld [vmem:[%s509 + $0x48] sm:$0xff]
        %v584 = vld [vmem:[%s509 + $0x50] sm:$0xff]
        %v585 = vld [vmem:[%s509 + $0x58] sm:$0xff]
        %v586 = vld [vmem:[%s509 + $0x60] sm:$0xff]
        %v587 = vld [vmem:[%s509 + $0x68] sm:$0xff]
        %v588 = vld [vmem:[%s509 + $0x70] sm:$0xff]
        %v589 = vld [vmem:[%s509 + $0x78] sm:$0xff]
        %v590 = vld [vmem:[%s519] sm:$0xff]
        %v591 = vld [vmem:[%s519 + $0x8] sm:$0xff]
        %v592 = vld [vmem:[%s519 + $0x10] sm:$0xff]
        %v593 = vld [vmem:[%s519 + $0x18] sm:$0xff]
        %v594 = vld [vmem:[%s519 + $0x20] sm:$0xff]
        %v595 = vld [vmem:[%s519 + $0x28] sm:$0xff]
        %v596 = vld [vmem:[%s519 + $0x30] sm:$0xff]
        %v597 = vld [vmem:[%s519 + $0x38] sm:$0xff]
        %v598 = vld [vmem:[%s519 + $0x40] sm:$0xff]
        %v599 = vld [vmem:[%s519 + $0x48] sm:$0xff]
        %v600 = vld [vmem:[%s519 + $0x50] sm:$0xff]
        %v601 = vld [vmem:[%s519 + $0x58] sm:$0xff]
        %v602 = vld [vmem:[%s519 + $0x60] sm:$0xff]
        %v603 = vld [vmem:[%s519 + $0x68] sm:$0xff]
        %v604 = vld [vmem:[%s519 + $0x70] sm:$0xff]
        %v605 = vld [vmem:[%s519 + $0x78] sm:$0xff]
        %v606 = vld [vmem:[%s529] sm:$0xff]
        %v607 = vld [vmem:[%s529 + $0x8] sm:$0xff]
        %v608 = vld [vmem:[%s529 + $0x10] sm:$0xff]
        %v609 = vld [vmem:[%s529 + $0x18] sm:$0xff]
        %v610 = vld [vmem:[%s529 + $0x20] sm:$0xff]
        %v611 = vld [vmem:[%s529 + $0x28] sm:$0xff]
        %v612 = vld [vmem:[%s529 + $0x30] sm:$0xff]
        %v613 = vld [vmem:[%s529 + $0x38] sm:$0xff]
        %v614 = vld [vmem:[%s529 + $0x40] sm:$0xff]
        %v615 = vld [vmem:[%s529 + $0x48] sm:$0xff]
        %v616 = vld [vmem:[%s529 + $0x50] sm:$0xff]
        %v617 = vld [vmem:[%s529 + $0x58] sm:$0xff]
        %v618 = vld [vmem:[%s529 + $0x60] sm:$0xff]
        %v619 = vld [vmem:[%s529 + $0x68] sm:$0xff]
        %v620 = vld [vmem:[%s529 + $0x70] sm:$0xff]
        %v621 = vld [vmem:[%s529 + $0x78] sm:$0xff]
        %v622 = vld [vmem:[%s539] sm:$0xff]
        %v623 = vld [vmem:[%s539 + $0x8] sm:$0xff]
        %v624 = vld [vmem:[%s539 + $0x10] sm:$0xff]
        %v625 = vld [vmem:[%s539 + $0x18] sm:$0xff]
        %v626 = vld [vmem:[%s539 + $0x20] sm:$0xff]
        %v627 = vld [vmem:[%s539 + $0x28] sm:$0xff]
        %v628 = vld [vmem:[%s539 + $0x30] sm:$0xff]
        %v629 = vld [vmem:[%s539 + $0x38] sm:$0xff]
        %v630 = vld [vmem:[%s539 + $0x40] sm:$0xff]
        %v631 = vld [vmem:[%s539 + $0x48] sm:$0xff]
        %v632 = vld [vmem:[%s539 + $0x50] sm:$0xff]
        %v633 = vld [vmem:[%s539 + $0x58] sm:$0xff]
        %v634 = vld [vmem:[%s539 + $0x60] sm:$0xff]
        %v635 = vld [vmem:[%s539 + $0x68] sm:$0xff]
        %v636 = vld [vmem:[%s539 + $0x70] sm:$0xff]
        %v637 = vld [vmem:[%s539 + $0x78] sm:$0xff]
        %v638 = vld [vmem:[%s549] sm:$0xff]
        %v639 = vld [vmem:[%s549 + $0x8] sm:$0xff]
        %v640 = vld [vmem:[%s549 + $0x10] sm:$0xff]
        %v641 = vld [vmem:[%s549 + $0x18] sm:$0xff]
        %v642 = vld [vmem:[%s549 + $0x20] sm:$0xff]
        %v643 = vld [vmem:[%s549 + $0x28] sm:$0xff]
        %v644 = vld [vmem:[%s549 + $0x30] sm:$0xff]
        %v645 = vld [vmem:[%s549 + $0x38] sm:$0xff]
        %v646 = vld [vmem:[%s549 + $0x40] sm:$0xff]
        %v647 = vld [vmem:[%s549 + $0x48] sm:$0xff]
        %v648 = vld [vmem:[%s549 + $0x50] sm:$0xff]
        %v649 = vld [vmem:[%s549 + $0x58] sm:$0xff]
        %v650 = vld [vmem:[%s549 + $0x60] sm:$0xff]
        %v651 = vld [vmem:[%s549 + $0x68] sm:$0xff]
        %v652 = vld [vmem:[%s549 + $0x70] sm:$0xff]
        %v653 = vld [vmem:[%s549 + $0x78] sm:$0xff]
        %v654 = vld [vmem:[%s559] sm:$0xff]
        %v655 = vld [vmem:[%s559 + $0x8] sm:$0xff]
        %v656 = vld [vmem:[%s559 + $0x10] sm:$0xff]
        %v657 = vld [vmem:[%s559 + $0x18] sm:$0xff]
        %v658 = vld [vmem:[%s559 + $0x20] sm:$0xff]
        %v659 = vld [vmem:[%s559 + $0x28] sm:$0xff]
        %v660 = vld [vmem:[%s559 + $0x30] sm:$0xff]
        %v661 = vld [vmem:[%s559 + $0x38] sm:$0xff]
        %v662 = vld [vmem:[%s559 + $0x40] sm:$0xff]
        %v663 = vld [vmem:[%s559 + $0x48] sm:$0xff]
        %v664 = vld [vmem:[%s559 + $0x50] sm:$0xff]
        %v665 = vld [vmem:[%s559 + $0x58] sm:$0xff]
        %v666 = vld [vmem:[%s559 + $0x60] sm:$0xff]
        %v667 = vld [vmem:[%s559 + $0x68] sm:$0xff]
        %v668 = vld [vmem:[%s559 + $0x70] sm:$0xff]
        %v669 = vld [vmem:[%s559 + $0x78] sm:$0xff]
        %v670 = vld [vmem:[%s566] sm:$0x1]
        %v671 = vld [vmem:[%s572] sm:$0x1]
        %vm672 = vcmask 23552
        %v674 = vsel %vm672, %v574, 0
        %v677 = vsel %vm672, %v575, 0
        %v680 = vsel %vm672, %v576, 0
        %v683 = vsel %vm672, %v577, 0
        %v686 = vsel %vm672, %v578, 0
        %v689 = vsel %vm672, %v579, 0
        %v692 = vsel %vm672, %v580, 0
        %v695 = vsel %vm672, %v581, 0
        %v698 = vsel %vm672, %v582, 0
        %v701 = vsel %vm672, %v583, 0
        %v704 = vsel %vm672, %v584, 0
        %v707 = vsel %vm672, %v585, 0
        %v710 = vsel %vm672, %v586, 0
        %v713 = vsel %vm672, %v587, 0
        %v716 = vsel %vm672, %v588, 0
        %v719 = vsel %vm672, %v589, 0
        %v722 = vsel %vm672, %v638, 0
        %v725 = vsel %vm672, %v639, 0
        %v728 = vsel %vm672, %v640, 0
        %v731 = vsel %vm672, %v641, 0
        %v734 = vsel %vm672, %v642, 0
        %v737 = vsel %vm672, %v643, 0
        %v740 = vsel %vm672, %v644, 0
        %v743 = vsel %vm672, %v645, 0
        %v746 = vsel %vm672, %v646, 0
        %v749 = vsel %vm672, %v647, 0
        %v752 = vsel %vm672, %v648, 0
        %v755 = vsel %vm672, %v649, 0
        %v758 = vsel %vm672, %v650, 0
        %v761 = vsel %vm672, %v651, 0
        %v764 = vsel %vm672, %v652, 0
        %v767 = vsel %vm672, %v653, 0
        %769 = vmatprep.subr.mxu0 0.0
        %v770 = vand.u32 %v722, 4294901760
        %771 = vmatpush1.xpose.msra.mxu0 %v770
        %772 = vmatprep.subr.mxu0 0.0
        %v773 = vand.u32 %v725, 4294901760
        %774 = vmatpush1.xpose.msra.mxu0 %v773
        %775 = vmatprep.subr.mxu0 0.0
        %v776 = vand.u32 %v728, 4294901760
        %777 = vmatpush1.xpose.msra.mxu0 %v776
        %778 = vmatprep.subr.mxu0 0.0
        %v779 = vand.u32 %v731, 4294901760
        %780 = vmatpush1.xpose.msra.mxu0 %v779
        %781 = vmatprep.subr.mxu0 0.0
        %v782 = vand.u32 %v734, 4294901760
        %783 = vmatpush1.xpose.msra.mxu0 %v782
        %784 = vmatprep.subr.mxu0 0.0
        %v785 = vand.u32 %v737, 4294901760
        %786 = vmatpush1.xpose.msra.mxu0 %v785
        %787 = vmatprep.subr.mxu0 0.0
        %v788 = vand.u32 %v740, 4294901760
        %789 = vmatpush1.xpose.msra.mxu0 %v788
        %790 = vmatprep.subr.mxu0 0.0
        %v791 = vand.u32 %v743, 4294901760
        %792 = vmatpush1.xpose.msra.mxu0 %v791
        %793 = vmatprep.subr.mxu0 0.0
        %v794 = vand.u32 %v746, 4294901760
        %795 = vmatpush1.xpose.msra.mxu0 %v794
        %796 = vmatprep.subr.mxu0 0.0
        %v797 = vand.u32 %v749, 4294901760
        %798 = vmatpush1.xpose.msra.mxu0 %v797
        %799 = vmatprep.subr.mxu0 0.0
        %v800 = vand.u32 %v752, 4294901760
        %801 = vmatpush1.xpose.msra.mxu0 %v800
        %802 = vmatprep.subr.mxu0 0.0
        %v803 = vand.u32 %v755, 4294901760
        %804 = vmatpush1.xpose.msra.mxu0 %v803
        %805 = vmatprep.subr.mxu0 0.0
        %v806 = vand.u32 %v758, 4294901760
        %807 = vmatpush1.xpose.msra.mxu0 %v806
        %808 = vmatprep.subr.mxu0 0.0
        %v809 = vand.u32 %v761, 4294901760
        %810 = vmatpush1.xpose.msra.mxu0 %v809
        %811 = vmatprep.subr.mxu0 0.0
        %v812 = vand.u32 %v764, 4294901760
        %813 = vmatpush1.xpose.msra.mxu0 %v812
        %814 = vmatprep.subr.mxu0 0.0
        %v815 = vand.u32 %v767, 4294901760
        %816 = vmatpush1.xpose.msra.mxu0 %v815
        %817 = vmatprep.subr.mxu0 0.0
        %818 = vmatpush1.xpose.msra.mxu0 0.0
        %819 = vmatprep.subr.mxu0 0.0
        %820 = vmatpush1.xpose.msra.mxu0 0.0
        %821 = vmatprep.subr.mxu0 0.0
        %822 = vmatpush1.xpose.msra.mxu0 0.0
        %823 = vmatprep.subr.mxu0 0.0
        %824 = vmatpush1.xpose.msra.mxu0 0.0
        %825 = vmatprep.subr.mxu0 0.0
        %826 = vmatpush1.xpose.msra.mxu0 0.0
        %827 = vmatprep.subr.mxu0 0.0
        %828 = vmatpush1.xpose.msra.mxu0 0.0
        %829 = vmatprep.subr.mxu0 0.0
        %830 = vmatpush1.xpose.msra.mxu0 0.0
        %831 = vmatprep.subr.mxu0 0.0
        %832 = vmatpush1.xpose.msra.mxu0 0.0
        %833 = vmatprep.subr.mxu0 0.0
        %834 = vmatpush1.xpose.msra.mxu0 0.0
        %835 = vmatprep.subr.mxu0 0.0
        %836 = vmatpush1.xpose.msra.mxu0 0.0
        %837 = vmatprep.subr.mxu0 0.0
        %838 = vmatpush1.xpose.msra.mxu0 0.0
        %839 = vmatprep.subr.mxu0 0.0
        %840 = vmatpush1.xpose.msra.mxu0 0.0
        %841 = vmatprep.subr.mxu0 0.0
        %842 = vmatpush1.xpose.msra.mxu0 0.0
        %843 = vmatprep.subr.mxu0 0.0
        %844 = vmatpush1.xpose.msra.mxu0 0.0
        %845 = vmatprep.subr.mxu0 0.0
        %846 = vmatpush1.xpose.msra.mxu0 0.0
        %847 = vmatprep.subr.mxu0 0.0
        %848 = vmatpush1.xpose.msra.mxu0 0.0
        %849 = vmatprep.mubr.f32.mxu0 0.0
        %v850 = vand.u32 %v674, 4294901760
        %v851 = vsub.f32 %v674, %v850
        %v852 = vand.u32 %v851, 4294901760
        %v853 = vsub.f32 %v851, %v852
        %v854 = vand.u32 %v853, 4294901760
        %855 = vmatmul.mubr.f32.gmra.mrb[0].mxu0 %v854
        %v856 = vpop.f32.mrb[0].mxu0
        %v857 = vadd.f32 0.0, %v856
        %v858 = vpop.f32.mrb[0].mxu0
        %859 = vmatprep.mubr.f32.mxu0 0.0
        %v860 = vand.u32 %v677, 4294901760
        %v861 = vsub.f32 %v677, %v860
        %v862 = vand.u32 %v861, 4294901760
        %v863 = vsub.f32 %v861, %v862
        %v864 = vand.u32 %v863, 4294901760
        %865 = vmatmul.mubr.f32.gmra.mrb[0].mxu0 %v864
        %v866 = vpop.f32.mrb[0].mxu0
        %v867 = vadd.f32 0.0, %v866
        %v868 = vpop.f32.mrb[0].mxu0
        %869 = vmatprep.mubr.f32.mxu0 0.0
        %v870 = vand.u32 %v680, 4294901760
        %v871 = vsub.f32 %v680, %v870
        %v872 = vand.u32 %v871, 4294901760
        %v873 = vsub.f32 %v871, %v872
        %v874 = vand.u32 %v873, 4294901760
        %875 = vmatmul.mubr.f32.gmra.mrb[0].mxu0 %v874
        %v876 = vpop.f32.mrb[0].mxu0
        %v877 = vadd.f32 0.0, %v876
        %v878 = vpop.f32.mrb[0].mxu0
        %879 = vmatprep.mubr.f32.mxu0 0.0
        %v880 = vand.u32 %v683, 4294901760
        %v881 = vsub.f32 %v683, %v880
        %v882 = vand.u32 %v881, 4294901760
        %v883 = vsub.f32 %v881, %v882
        %v884 = vand.u32 %v883, 4294901760
        %885 = vmatmul.mubr.f32.gmra.mrb[0].mxu0 %v884
        %v886 = vpop.f32.mrb[0].mxu0
        %v887 = vadd.f32 0.0, %v886
        %v888 = vpop.f32.mrb[0].mxu0
        %889 = vmatprep.mubr.f32.mxu0 0.0
        %v890 = vand.u32 %v686, 4294901760
        %v891 = vsub.f32 %v686, %v890
        %v892 = vand.u32 %v891, 4294901760
        %v893 = vsub.f32 %v891, %v892
        %v894 = vand.u32 %v893, 4294901760
        %895 = vmatmul.mubr.f32.gmra.mrb[0].mxu0 %v894
        %v896 = vpop.f32.mrb[0].mxu0
        %v897 = vadd.f32 0.0, %v896
        %v898 = vpop.f32.mrb[0].mxu0
        %899 = vmatprep.mubr.f32.mxu0 0.0
        %v900 = vand.u32 %v689, 4294901760
        %v901 = vsub.f32 %v689, %v900
        %v902 = vand.u32 %v901, 4294901760
        %v903 = vsub.f32 %v901, %v902
        %v904 = vand.u32 %v903, 4294901760
        %905 = vmatmul.mubr.f32.gmra.mrb[0].mxu0 %v904
        %v906 = vpop.f32.mrb[0].mxu0
        %v907 = vadd.f32 0.0, %v906
        %v908 = vpop.f32.mrb[0].mxu0
        %909 = vmatprep.mubr.f32.mxu0 0.0
        %v910 = vand.u32 %v692, 4294901760
        %v911 = vsub.f32 %v692, %v910
        %v912 = vand.u32 %v911, 4294901760
        %v913 = vsub.f32 %v911, %v912
        %v914 = vand.u32 %v913, 4294901760
        %915 = vmatmul.mubr.f32.gmra.mrb[0].mxu0 %v914
        %v916 = vpop.f32.mrb[0].mxu0
        %v917 = vadd.f32 0.0, %v916
        %v918 = vpop.f32.mrb[0].mxu0
        %919 = vmatprep.mubr.f32.mxu0 0.0
        %v920 = vand.u32 %v695, 4294901760
        %v921 = vsub.f32 %v695, %v920
        %v922 = vand.u32 %v921, 4294901760
        %v923 = vsub.f32 %v921, %v922
        %v924 = vand.u32 %v923, 4294901760
        %925 = vmatmul.mubr.f32.gmra.mrb[0].mxu0 %v924
        %v926 = vpop.f32.mrb[0].mxu0
        %v927 = vadd.f32 0.0, %v926
        %v928 = vpop.f32.mrb[0].mxu0
        %929 = vmatprep.mubr.f32.mxu0 0.0
        %v930 = vand.u32 %v698, 4294901760
        %v931 = vsub.f32 %v698, %v930
        %v932 = vand.u32 %v931, 4294901760
        %v933 = vsub.f32 %v931, %v932
        %v934 = vand.u32 %v933, 4294901760
        %935 = vmatmul.mubr.f32.gmra.mrb[0].mxu0 %v934
        %v936 = vpop.f32.mrb[0].mxu0
        %v937 = vadd.f32 0.0, %v936
        %v938 = vpop.f32.mrb[0].mxu0
        %939 = vmatprep.mubr.f32.mxu0 0.0
        %v940 = vand.u32 %v701, 4294901760
        %v941 = vsub.f32 %v701, %v940
        %v942 = vand.u32 %v941, 4294901760
        %v943 = vsub.f32 %v941, %v942
        %v944 = vand.u32 %v943, 4294901760
        %945 = vmatmul.mubr.f32.gmra.mrb[0].mxu0 %v944
        %v946 = vpop.f32.mrb[0].mxu0
        %v947 = vadd.f32 0.0, %v946
        %v948 = vpop.f32.mrb[0].mxu0
        %949 = vmatprep.mubr.f32.mxu0 0.0
        %v950 = vand.u32 %v704, 4294901760
        %v951 = vsub.f32 %v704, %v950
        %v952 = vand.u32 %v951, 4294901760
        %v953 = vsub.f32 %v951, %v952
        %v954 = vand.u32 %v953, 4294901760
        %955 = vmatmul.mubr.f32.gmra.mrb[0].mxu0 %v954
        %v956 = vpop.f32.mrb[0].mxu0
        %v957 = vadd.f32 0.0, %v956
        %v958 = vpop.f32.mrb[0].mxu0
        %959 = vmatprep.mubr.f32.mxu0 0.0
        %v960 = vand.u32 %v707, 4294901760
        %v961 = vsub.f32 %v707, %v960
        %v962 = vand.u32 %v961, 4294901760
        %v963 = vsub.f32 %v961, %v962
        %v964 = vand.u32 %v963, 4294901760
        %965 = vmatmul.mubr.f32.gmra.mrb[0].mxu0 %v964
        %v966 = vpop.f32.mrb[0].mxu0
        %v967 = vadd.f32 0.0, %v966
        %v968 = vpop.f32.mrb[0].mxu0
        %969 = vmatprep.mubr.f32.mxu0 0.0
        %v970 = vand.u32 %v710, 4294901760
        %v971 = vsub.f32 %v710, %v970
        %v972 = vand.u32 %v971, 4294901760
        %v973 = vsub.f32 %v971, %v972
        %v974 = vand.u32 %v973, 4294901760
        %975 = vmatmul.mubr.f32.gmra.mrb[0].mxu0 %v974
        %v976 = vpop.f32.mrb[0].mxu0
        %v977 = vadd.f32 0.0, %v976
        %v978 = vpop.f32.mrb[0].mxu0
        %979 = vmatprep.mubr.f32.mxu0 0.0
        %v980 = vand.u32 %v713, 4294901760
        %v981 = vsub.f32 %v713, %v980
        %v982 = vand.u32 %v981, 4294901760
        %v983 = vsub.f32 %v981, %v982
        %v984 = vand.u32 %v983, 4294901760
        %985 = vmatmul.mubr.f32.gmra.mrb[0].mxu0 %v984
        %v986 = vpop.f32.mrb[0].mxu0
        %v987 = vadd.f32 0.0, %v986
        %v988 = vpop.f32.mrb[0].mxu0
        %989 = vmatprep.mubr.f32.mxu0 0.0
        %v990 = vand.u32 %v716, 4294901760
        %v991 = vsub.f32 %v716, %v990
        %v992 = vand.u32 %v991, 4294901760
        %v993 = vsub.f32 %v991, %v992
        %v994 = vand.u32 %v993, 4294901760
        %995 = vmatmul.mubr.f32.gmra.mrb[0].mxu0 %v994
        %v996 = vpop.f32.mrb[0].mxu0
        %v997 = vadd.f32 0.0, %v996
        %v998 = vpop.f32.mrb[0].mxu0
        %999 = vmatprep.mubr.f32.mxu0 0.0
        %v1000 = vand.u32 %v719, 4294901760
        %v1001 = vsub.f32 %v719, %v1000
        %v1002 = vand.u32 %v1001, 4294901760
        %v1003 = vsub.f32 %v1001, %v1002
        %v1004 = vand.u32 %v1003, 4294901760
        %1005 = vmatmul.mubr.f32.gmra.mrb[0].mxu0 %v1004
        %v1006 = vpop.f32.mrb[0].mxu0
        %v1007 = vadd.f32 0.0, %v1006
        %v1008 = vpop.f32.mrb[0].mxu0
        %1009 = vdwg.mxu0
        %1010 = vmatprep.subr.mxu0 0.0
        %v1011 = vand.u32 %v722, 4294901760
        %v1012 = vsub.f32 %v722, %v1011
        %v1013 = vand.u32 %v1012, 4294901760
        %v1014 = vsub.f32 %v1012, %v1013
        %v1015 = vand.u32 %v1014, 4294901760
        %1016 = vmatpush1.xpose.msra.mxu0 %v1015
        %1017 = vmatprep.subr.mxu0 0.0
        %v1018 = vand.u32 %v725, 4294901760
        %v1019 = vsub.f32 %v725, %v1018
        %v1020 = vand.u32 %v1019, 4294901760
        %v1021 = vsub.f32 %v1019, %v1020
        %v1022 = vand.u32 %v1021, 4294901760
        %1023 = vmatpush1.xpose.msra.mxu0 %v1022
        %1024 = vmatprep.subr.mxu0 0.0
        %v1025 = vand.u32 %v728, 4294901760
        %v1026 = vsub.f32 %v728, %v1025
        %v1027 = vand.u32 %v1026, 4294901760
        %v1028 = vsub.f32 %v1026, %v1027
        %v1029 = vand.u32 %v1028, 4294901760
        %1030 = vmatpush1.xpose.msra.mxu0 %v1029
        %1031 = vmatprep.subr.mxu0 0.0
        %v1032 = vand.u32 %v731, 4294901760
        %v1033 = vsub.f32 %v731, %v1032
        %v1034 = vand.u32 %v1033, 4294901760
        %v1035 = vsub.f32 %v1033, %v1034
        %v1036 = vand.u32 %v1035, 4294901760
        %1037 = vmatpush1.xpose.msra.mxu0 %v1036
        %1038 = vmatprep.subr.mxu0 0.0
        %v1039 = vand.u32 %v734, 4294901760
        %v1040 = vsub.f32 %v734, %v1039
        %v1041 = vand.u32 %v1040, 4294901760
        %v1042 = vsub.f32 %v1040, %v1041
        %v1043 = vand.u32 %v1042, 4294901760
        %1044 = vmatpush1.xpose.msra.mxu0 %v1043
        %1045 = vmatprep.subr.mxu0 0.0
        %v1046 = vand.u32 %v737, 4294901760
        %v1047 = vsub.f32 %v737, %v1046
        %v1048 = vand.u32 %v1047, 4294901760
        %v1049 = vsub.f32 %v1047, %v1048
        %v1050 = vand.u32 %v1049, 4294901760
        %1051 = vmatpush1.xpose.msra.mxu0 %v1050
        %1052 = vmatprep.subr.mxu0 0.0
        %v1053 = vand.u32 %v740, 4294901760
        %v1054 = vsub.f32 %v740, %v1053
        %v1055 = vand.u32 %v1054, 4294901760
        %v1056 = vsub.f32 %v1054, %v1055
        %v1057 = vand.u32 %v1056, 4294901760
        %1058 = vmatpush1.xpose.msra.mxu0 %v1057
        %1059 = vmatprep.subr.mxu0 0.0
        %v1060 = vand.u32 %v743, 4294901760
        %v1061 = vsub.f32 %v743, %v1060
        %v1062 = vand.u32 %v1061, 4294901760
        %v1063 = vsub.f32 %v1061, %v1062
        %v1064 = vand.u32 %v1063, 4294901760
        %1065 = vmatpush1.xpose.msra.mxu0 %v1064
        %1066 = vmatprep.subr.mxu0 0.0
        %v1067 = vand.u32 %v746, 4294901760
        %v1068 = vsub.f32 %v746, %v1067
        %v1069 = vand.u32 %v1068, 4294901760
        %v1070 = vsub.f32 %v1068, %v1069
        %v1071 = vand.u32 %v1070, 4294901760
        %1072 = vmatpush1.xpose.msra.mxu0 %v1071
        %1073 = vmatprep.subr.mxu0 0.0
        %v1074 = vand.u32 %v749, 4294901760
        %v1075 = vsub.f32 %v749, %v1074
        %v1076 = vand.u32 %v1075, 4294901760
        %v1077 = vsub.f32 %v1075, %v1076
        %v1078 = vand.u32 %v1077, 4294901760
        %1079 = vmatpush1.xpose.msra.mxu0 %v1078
        %1080 = vmatprep.subr.mxu0 0.0
        %v1081 = vand.u32 %v752, 4294901760
        %v1082 = vsub.f32 %v752, %v1081
        %v1083 = vand.u32 %v1082, 4294901760
        %v1084 = vsub.f32 %v1082, %v1083
        %v1085 = vand.u32 %v1084, 4294901760
        %1086 = vmatpush1.xpose.msra.mxu0 %v1085
        %1087 = vmatprep.subr.mxu0 0.0
        %v1088 = vand.u32 %v755, 4294901760
        %v1089 = vsub.f32 %v755, %v1088
        %v1090 = vand.u32 %v1089, 4294901760
        %v1091 = vsub.f32 %v1089, %v1090
        %v1092 = vand.u32 %v1091, 4294901760
        %1093 = vmatpush1.xpose.msra.mxu0 %v1092
        %1094 = vmatprep.subr.mxu0 0.0
        %v1095 = vand.u32 %v758, 4294901760
        %v1096 = vsub.f32 %v758, %v1095
        %v1097 = vand.u32 %v1096, 4294901760
        %v1098 = vsub.f32 %v1096, %v1097
        %v1099 = vand.u32 %v1098, 4294901760
        %1100 = vmatpush1.xpose.msra.mxu0 %v1099
        %1101 = vmatprep.subr.mxu0 0.0
        %v1102 = vand.u32 %v761, 4294901760
        %v1103 = vsub.f32 %v761, %v1102
        %v1104 = vand.u32 %v1103, 4294901760
        %v1105 = vsub.f32 %v1103, %v1104
        %v1106 = vand.u32 %v1105, 4294901760
        %1107 = vmatpush1.xpose.msra.mxu0 %v1106
        %1108 = vmatprep.subr.mxu0 0.0
        %v1109 = vand.u32 %v764, 4294901760
        %v1110 = vsub.f32 %v764, %v1109
        %v1111 = vand.u32 %v1110, 4294901760
        %v1112 = vsub.f32 %v1110, %v1111
        %v1113 = vand.u32 %v1112, 4294901760
        %1114 = vmatpush1.xpose.msra.mxu0 %v1113
        %1115 = vmatprep.subr.mxu0 0.0
        %v1116 = vand.u32 %v767, 4294901760
        %v1117 = vsub.f32 %v767, %v1116
        %v1118 = vand.u32 %v1117, 4294901760
        %v1119 = vsub.f32 %v1117, %v1118
        %v1120 = vand.u32 %v1119, 4294901760
        %1121 = vmatpush1.xpose.msra.mxu0 %v1120
        %1122 = vmatprep.subr.mxu0 0.0
        %1123 = vmatpush1.xpose.msra.mxu0 0.0
        %1124 = vmatprep.subr.mxu0 0.0
        %1125 = vmatpush1.xpose.msra.mxu0 0.0
        %1126 = vmatprep.subr.mxu0 0.0
        %1127 = vmatpush1.xpose.msra.mxu0 0.0
        %1128 = vmatprep.subr.mxu0 0.0
        %1129 = vmatpush1.xpose.msra.mxu0 0.0
        %1130 = vmatprep.subr.mxu0 0.0
        %1131 = vmatpush1.xpose.msra.mxu0 0.0
        %1132 = vmatprep.subr.mxu0 0.0
        %1133 = vmatpush1.xpose.msra.mxu0 0.0
        %1134 = vmatprep.subr.mxu0 0.0
        %1135 = vmatpush1.xpose.msra.mxu0 0.0
        %1136 = vmatprep.subr.mxu0 0.0
        %1137 = vmatpush1.xpose.msra.mxu0 0.0
        %1138 = vmatprep.subr.mxu0 0.0
        %1139 = vmatpush1.xpose.msra.mxu0 0.0
        %1140 = vmatprep.subr.mxu0 0.0
        %1141 = vmatpush1.xpose.msra.mxu0 0.0
        %1142 = vmatprep.subr.mxu0 0.0
        %1143 = vmatpush1.xpose.msra.mxu0 0.0
        %1144 = vmatprep.subr.mxu0 0.0
        %1145 = vmatpush1.xpose.msra.mxu0 0.0
        %1146 = vmatprep.subr.mxu0 0.0
        %1147 = vmatpush1.xpose.msra.mxu0 0.0
        %1148 = vmatprep.subr.mxu0 0.0
        %1149 = vmatpush1.xpose.msra.mxu0 0.0
        %1150 = vmatprep.subr.mxu0 0.0
        %1151 = vmatpush1.xpose.msra.mxu0 0.0
        %1152 = vmatprep.subr.mxu0 0.0
        %1153 = vmatpush1.xpose.msra.mxu0 0.0
        %1154 = vmatprep.mubr.f32.mxu0 0.0
        %v1155 = vand.u32 %v674, 4294901760
        %1156 = vmatmul.mubr.f32.gmra.mrb[0].mxu0 %v1155
        %v1157 = vpop.f32.mrb[0].mxu0
        %v1158 = vadd.f32 %v857, %v1157
        %v1159 = vpop.f32.mrb[0].mxu0
        %1160 = vmatprep.mubr.f32.mxu0 0.0
        %v1161 = vand.u32 %v677, 4294901760
        %1162 = vmatmul.mubr.f32.gmra.mrb[0].mxu0 %v1161
        %v1163 = vpop.f32.mrb[0].mxu0
        %v1164 = vadd.f32 %v867, %v1163
        %v1165 = vpop.f32.mrb[0].mxu0
        %1166 = vmatprep.mubr.f32.mxu0 0.0
        %v1167 = vand.u32 %v680, 4294901760
        %1168 = vmatmul.mubr.f32.gmra.mrb[0].mxu0 %v1167
        %v1169 = vpop.f32.mrb[0].mxu0
        %v1170 = vadd.f32 %v877, %v1169
        %v1171 = vpop.f32.mrb[0].mxu0
        %1172 = vmatprep.mubr.f32.mxu0 0.0
        %v1173 = vand.u32 %v683, 4294901760
        %1174 = vmatmul.mubr.f32.gmra.mrb[0].mxu0 %v1173
        %v1175 = vpop.f32.mrb[0].mxu0
        %v1176 = vadd.f32 %v887, %v1175
        %v1177 = vpop.f32.mrb[0].mxu0
        %1178 = vmatprep.mubr.f32.mxu0 0.0
        %v1179 = vand.u32 %v686, 4294901760
        %1180 = vmatmul.mubr.f32.gmra.mrb[0].mxu0 %v1179
        %v1181 = vpop.f32.mrb[0].mxu0
        %v1182 = vadd.f32 %v897, %v1181
        %v1183 = vpop.f32.mrb[0].mxu0
        %1184 = vmatprep.mubr.f32.mxu0 0.0
        %v1185 = vand.u32 %v689, 4294901760
        %1186 = vmatmul.mubr.f32.gmra.mrb[0].mxu0 %v1185
        %v1187 = vpop.f32.mrb[0].mxu0
        %v1188 = vadd.f32 %v907, %v1187
        %v1189 = vpop.f32.mrb[0].mxu0
        %1190 = vmatprep.mubr.f32.mxu0 0.0
        %v1191 = vand.u32 %v692, 4294901760
        %1192 = vmatmul.mubr.f32.gmra.mrb[0].mxu0 %v1191
        %v1193 = vpop.f32.mrb[0].mxu0
        %v1194 = vadd.f32 %v917, %v1193
        %v1195 = vpop.f32.mrb[0].mxu0
        %1196 = vmatprep.mubr.f32.mxu0 0.0
        %v1197 = vand.u32 %v695, 4294901760
        %1198 = vmatmul.mubr.f32.gmra.mrb[0].mxu0 %v1197
        %v1199 = vpop.f32.mrb[0].mxu0
        %v1200 = vadd.f32 %v927, %v1199
        %v1201 = vpop.f32.mrb[0].mxu0
        %1202 = vmatprep.mubr.f32.mxu0 0.0
        %v1203 = vand.u32 %v698, 4294901760
        %1204 = vmatmul.mubr.f32.gmra.mrb[0].mxu0 %v1203
        %v1205 = vpop.f32.mrb[0].mxu0
        %v1206 = vadd.f32 %v937, %v1205
        %v1207 = vpop.f32.mrb[0].mxu0
        %1208 = vmatprep.mubr.f32.mxu0 0.0
        %v1209 = vand.u32 %v701, 4294901760
        %1210 = vmatmul.mubr.f32.gmra.mrb[0].mxu0 %v1209
        %v1211 = vpop.f32.mrb[0].mxu0
        %v1212 = vadd.f32 %v947, %v1211
        %v1213 = vpop.f32.mrb[0].mxu0
        %1214 = vmatprep.mubr.f32.mxu0 0.0
        %v1215 = vand.u32 %v704, 4294901760
        %1216 = vmatmul.mubr.f32.gmra.mrb[0].mxu0 %v1215
        %v1217 = vpop.f32.mrb[0].mxu0
        %v1218 = vadd.f32 %v957, %v1217
        %v1219 = vpop.f32.mrb[0].mxu0
        %1220 = vmatprep.mubr.f32.mxu0 0.0
        %v1221 = vand.u32 %v707, 4294901760
        %1222 = vmatmul.mubr.f32.gmra.mrb[0].mxu0 %v1221
        %v1223 = vpop.f32.mrb[0].mxu0
        %v1224 = vadd.f32 %v967, %v1223
        %v1225 = vpop.f32.mrb[0].mxu0
        %1226 = vmatprep.mubr.f32.mxu0 0.0
        %v1227 = vand.u32 %v710, 4294901760
        %1228 = vmatmul.mubr.f32.gmra.mrb[0].mxu0 %v1227
        %v1229 = vpop.f32.mrb[0].mxu0
        %v1230 = vadd.f32 %v977, %v1229
        %v1231 = vpop.f32.mrb[0].mxu0
        %1232 = vmatprep.mubr.f32.mxu0 0.0
        %v1233 = vand.u32 %v713, 4294901760
        %1234 = vmatmul.mubr.f32.gmra.mrb[0].mxu0 %v1233
        %v1235 = vpop.f32.mrb[0].mxu0
        %v1236 = vadd.f32 %v987, %v1235
        %v1237 = vpop.f32.mrb[0].mxu0
        %1238 = vmatprep.mubr.f32.mxu0 0.0
        %v1239 = vand.u32 %v716, 4294901760
        %1240 = vmatmul.mubr.f32.gmra.mrb[0].mxu0 %v1239
        %v1241 = vpop.f32.mrb[0].mxu0
        %v1242 = vadd.f32 %v997, %v1241
        %v1243 = vpop.f32.mrb[0].mxu0
        %1244 = vmatprep.mubr.f32.mxu0 0.0
        %v1245 = vand.u32 %v719, 4294901760
        %1246 = vmatmul.mubr.f32.gmra.mrb[0].mxu0 %v1245
        %v1247 = vpop.f32.mrb[0].mxu0
        %v1248 = vadd.f32 %v1007, %v1247
        %v1249 = vpop.f32.mrb[0].mxu0
        %1250 = vdwg.mxu0
        %1251 = vmatprep.subr.mxu0 0.0
        %v1252 = vand.u32 %v722, 4294901760
        %v1253 = vsub.f32 %v722, %v1252
        %1254 = vmatpush1.xpose.msra.mxu0 %v1253
        %1255 = vmatprep.subr.mxu0 0.0
        %v1256 = vand.u32 %v725, 4294901760
        %v1257 = vsub.f32 %v725, %v1256
        %1258 = vmatpush1.xpose.msra.mxu0 %v1257
        %1259 = vmatprep.subr.mxu0 0.0
        %v1260 = vand.u32 %v728, 4294901760
        %v1261 = vsub.f32 %v728, %v1260
        %1262 = vmatpush1.xpose.msra.mxu0 %v1261
        %1263 = vmatprep.subr.mxu0 0.0
        %v1264 = vand.u32 %v731, 4294901760
        %v1265 = vsub.f32 %v731, %v1264
        %1266 = vmatpush1.xpose.msra.mxu0 %v1265
        %1267 = vmatprep.subr.mxu0 0.0
        %v1268 = vand.u32 %v734, 4294901760
        %v1269 = vsub.f32 %v734, %v1268
        %1270 = vmatpush1.xpose.msra.mxu0 %v1269
        %1271 = vmatprep.subr.mxu0 0.0
        %v1272 = vand.u32 %v737, 4294901760
        %v1273 = vsub.f32 %v737, %v1272
        %1274 = vmatpush1.xpose.msra.mxu0 %v1273
        %1275 = vmatprep.subr.mxu0 0.0
        %v1276 = vand.u32 %v740, 4294901760
        %v1277 = vsub.f32 %v740, %v1276
        %1278 = vmatpush1.xpose.msra.mxu0 %v1277
        %1279 = vmatprep.subr.mxu0 0.0
        %v1280 = vand.u32 %v743, 4294901760
        %v1281 = vsub.f32 %v743, %v1280
        %1282 = vmatpush1.xpose.msra.mxu0 %v1281
        %1283 = vmatprep.subr.mxu0 0.0
        %v1284 = vand.u32 %v746, 4294901760
        %v1285 = vsub.f32 %v746, %v1284
        %1286 = vmatpush1.xpose.msra.mxu0 %v1285
        %1287 = vmatprep.subr.mxu0 0.0
        %v1288 = vand.u32 %v749, 4294901760
        %v1289 = vsub.f32 %v749, %v1288
        %1290 = vmatpush1.xpose.msra.mxu0 %v1289
        %1291 = vmatprep.subr.mxu0 0.0
        %v1292 = vand.u32 %v752, 4294901760
        %v1293 = vsub.f32 %v752, %v1292
        %1294 = vmatpush1.xpose.msra.mxu0 %v1293
        %1295 = vmatprep.subr.mxu0 0.0
        %v1296 = vand.u32 %v755, 4294901760
        %v1297 = vsub.f32 %v755, %v1296
        %1298 = vmatpush1.xpose.msra.mxu0 %v1297
        %1299 = vmatprep.subr.mxu0 0.0
        %v1300 = vand.u32 %v758, 4294901760
        %v1301 = vsub.f32 %v758, %v1300
        %1302 = vmatpush1.xpose.msra.mxu0 %v1301
        %1303 = vmatprep.subr.mxu0 0.0
        %v1304 = vand.u32 %v761, 4294901760
        %v1305 = vsub.f32 %v761, %v1304
        %1306 = vmatpush1.xpose.msra.mxu0 %v1305
        %1307 = vmatprep.subr.mxu0 0.0
        %v1308 = vand.u32 %v764, 4294901760
        %v1309 = vsub.f32 %v764, %v1308
        %1310 = vmatpush1.xpose.msra.mxu0 %v1309
        %1311 = vmatprep.subr.mxu0 0.0
        %v1312 = vand.u32 %v767, 4294901760
        %v1313 = vsub.f32 %v767, %v1312
        %1314 = vmatpush1.xpose.msra.mxu0 %v1313
        %1315 = vmatprep.subr.mxu0 0.0
        %1316 = vmatpush1.xpose.msra.mxu0 0.0
        %1317 = vmatprep.subr.mxu0 0.0
        %1318 = vmatpush1.xpose.msra.mxu0 0.0
        %1319 = vmatprep.subr.mxu0 0.0
        %1320 = vmatpush1.xpose.msra.mxu0 0.0
        %1321 = vmatprep.subr.mxu0 0.0
        %1322 = vmatpush1.xpose.msra.mxu0 0.0
        %1323 = vmatprep.subr.mxu0 0.0
        %1324 = vmatpush1.xpose.msra.mxu0 0.0
        %1325 = vmatprep.subr.mxu0 0.0
        %1326 = vmatpush1.xpose.msra.mxu0 0.0
        %1327 = vmatprep.subr.mxu0 0.0
        %1328 = vmatpush1.xpose.msra.mxu0 0.0
        %1329 = vmatprep.subr.mxu0 0.0
        %1330 = vmatpush1.xpose.msra.mxu0 0.0
        %1331 = vmatprep.subr.mxu0 0.0
        %1332 = vmatpush1.xpose.msra.mxu0 0.0
        %1333 = vmatprep.subr.mxu0 0.0
        %1334 = vmatpush1.xpose.msra.mxu0 0.0
        %1335 = vmatprep.subr.mxu0 0.0
        %1336 = vmatpush1.xpose.msra.mxu0 0.0
        %1337 = vmatprep.subr.mxu0 0.0
        %1338 = vmatpush1.xpose.msra.mxu0 0.0
        %1339 = vmatprep.subr.mxu0 0.0
        %1340 = vmatpush1.xpose.msra.mxu0 0.0
        %1341 = vmatprep.subr.mxu0 0.0
        %1342 = vmatpush1.xpose.msra.mxu0 0.0
        %1343 = vmatprep.subr.mxu0 0.0
        %1344 = vmatpush1.xpose.msra.mxu0 0.0
        %1345 = vmatprep.subr.mxu0 0.0
        %1346 = vmatpush1.xpose.msra.mxu0 0.0
        %1347 = vmatprep.mubr.f32.mxu0 0.0
        %v1348 = vand.u32 %v674, 4294901760
        %v1349 = vsub.f32 %v674, %v1348
        %1350 = vmatmul.mubr.f32.gmra.mrb[0].mxu0 %v1349
        %v1351 = vpop.f32.mrb[0].mxu0
        %v1352 = vadd.f32 %v1158, %v1351
        %v1353 = vpop.f32.mrb[0].mxu0
        %1354 = vmatprep.mubr.f32.mxu0 0.0
        %v1355 = vand.u32 %v677, 4294901760
        %v1356 = vsub.f32 %v677, %v1355
        %1357 = vmatmul.mubr.f32.gmra.mrb[0].mxu0 %v1356
        %v1358 = vpop.f32.mrb[0].mxu0
        %v1359 = vadd.f32 %v1164, %v1358
        %v1360 = vpop.f32.mrb[0].mxu0
        %1361 = vmatprep.mubr.f32.mxu0 0.0
        %v1362 = vand.u32 %v680, 4294901760
        %v1363 = vsub.f32 %v680, %v1362
        %1364 = vmatmul.mubr.f32.gmra.mrb[0].mxu0 %v1363
        %v1365 = vpop.f32.mrb[0].mxu0
        %v1366 = vadd.f32 %v1170, %v1365
        %v1367 = vpop.f32.mrb[0].mxu0
        %1368 = vmatprep.mubr.f32.mxu0 0.0
        %v1369 = vand.u32 %v683, 4294901760
        %v1370 = vsub.f32 %v683, %v1369
        %1371 = vmatmul.mubr.f32.gmra.mrb[0].mxu0 %v1370
        %v1372 = vpop.f32.mrb[0].mxu0
        %v1373 = vadd.f32 %v1176, %v1372
        %v1374 = vpop.f32.mrb[0].mxu0
        %1375 = vmatprep.mubr.f32.mxu0 0.0
        %v1376 = vand.u32 %v686, 4294901760
        %v1377 = vsub.f32 %v686, %v1376
        %1378 = vmatmul.mubr.f32.gmra.mrb[0].mxu0 %v1377
        %v1379 = vpop.f32.mrb[0].mxu0
        %v1380 = vadd.f32 %v1182, %v1379
        %v1381 = vpop.f32.mrb[0].mxu0
        %1382 = vmatprep.mubr.f32.mxu0 0.0
        %v1383 = vand.u32 %v689, 4294901760
        %v1384 = vsub.f32 %v689, %v1383
        %1385 = vmatmul.mubr.f32.gmra.mrb[0].mxu0 %v1384
        %v1386 = vpop.f32.mrb[0].mxu0
        %v1387 = vadd.f32 %v1188, %v1386
        %v1388 = vpop.f32.mrb[0].mxu0
        %1389 = vmatprep.mubr.f32.mxu0 0.0
        %v1390 = vand.u32 %v692, 4294901760
        %v1391 = vsub.f32 %v692, %v1390
        %1392 = vmatmul.mubr.f32.gmra.mrb[0].mxu0 %v1391
        %v1393 = vpop.f32.mrb[0].mxu0
        %v1394 = vadd.f32 %v1194, %v1393
        %v1395 = vpop.f32.mrb[0].mxu0
        %1396 = vmatprep.mubr.f32.mxu0 0.0
        %v1397 = vand.u32 %v695, 4294901760
        %v1398 = vsub.f32 %v695, %v1397
        %1399 = vmatmul.mubr.f32.gmra.mrb[0].mxu0 %v1398
        %v1400 = vpop.f32.mrb[0].mxu0
        %v1401 = vadd.f32 %v1200, %v1400
        %v1402 = vpop.f32.mrb[0].mxu0
        %1403 = vmatprep.mubr.f32.mxu0 0.0
        %v1404 = vand.u32 %v698, 4294901760
        %v1405 = vsub.f32 %v698, %v1404
        %1406 = vmatmul.mubr.f32.gmra.mrb[0].mxu0 %v1405
        %v1407 = vpop.f32.mrb[0].mxu0
        %v1408 = vadd.f32 %v1206, %v1407
        %v1409 = vpop.f32.mrb[0].mxu0
        %1410 = vmatprep.mubr.f32.mxu0 0.0
        %v1411 = vand.u32 %v701, 4294901760
        %v1412 = vsub.f32 %v701, %v1411
        %1413 = vmatmul.mubr.f32.gmra.mrb[0].mxu0 %v1412
        %v1414 = vpop.f32.mrb[0].mxu0
        %v1415 = vadd.f32 %v1212, %v1414
        %v1416 = vpop.f32.mrb[0].mxu0
        %1417 = vmatprep.mubr.f32.mxu0 0.0
        %v1418 = vand.u32 %v704, 4294901760
        %v1419 = vsub.f32 %v704, %v1418
        %1420 = vmatmul.mubr.f32.gmra.mrb[0].mxu0 %v1419
        %v1421 = vpop.f32.mrb[0].mxu0
        %v1422 = vadd.f32 %v1218, %v1421
        %v1423 = vpop.f32.mrb[0].mxu0
        %1424 = vmatprep.mubr.f32.mxu0 0.0
        %v1425 = vand.u32 %v707, 4294901760
        %v1426 = vsub.f32 %v707, %v1425
        %1427 = vmatmul.mubr.f32.gmra.mrb[0].mxu0 %v1426
        %v1428 = vpop.f32.mrb[0].mxu0
        %v1429 = vadd.f32 %v1224, %v1428
        %v1430 = vpop.f32.mrb[0].mxu0
        %1431 = vmatprep.mubr.f32.mxu0 0.0
        %v1432 = vand.u32 %v710, 4294901760
        %v1433 = vsub.f32 %v710, %v1432
        %1434 = vmatmul.mubr.f32.gmra.mrb[0].mxu0 %v1433
        %v1435 = vpop.f32.mrb[0].mxu0
        %v1436 = vadd.f32 %v1230, %v1435
        %v1437 = vpop.f32.mrb[0].mxu0
        %1438 = vmatprep.mubr.f32.mxu0 0.0
        %v1439 = vand.u32 %v713, 4294901760
        %v1440 = vsub.f32 %v713, %v1439
        %1441 = vmatmul.mubr.f32.gmra.mrb[0].mxu0 %v1440
        %v1442 = vpop.f32.mrb[0].mxu0
        %v1443 = vadd.f32 %v1236, %v1442
        %v1444 = vpop.f32.mrb[0].mxu0
        %1445 = vmatprep.mubr.f32.mxu0 0.0
        %v1446 = vand.u32 %v716, 4294901760
        %v1447 = vsub.f32 %v716, %v1446
        %1448 = vmatmul.mubr.f32.gmra.mrb[0].mxu0 %v1447
        %v1449 = vpop.f32.mrb[0].mxu0
        %v1450 = vadd.f32 %v1242, %v1449
        %v1451 = vpop.f32.mrb[0].mxu0
        %1452 = vmatprep.mubr.f32.mxu0 0.0
        %v1453 = vand.u32 %v719, 4294901760
        %v1454 = vsub.f32 %v719, %v1453
        %1455 = vmatmul.mubr.f32.gmra.mrb[0].mxu0 %v1454
        %v1456 = vpop.f32.mrb[0].mxu0
        %v1457 = vadd.f32 %v1248, %v1456
        %v1458 = vpop.f32.mrb[0].mxu0
        %1459 = vdwg.mxu0
        %1460 = vmatprep.subr.mxu0 0.0
        %v1461 = vand.u32 %v722, 4294901760
        %1462 = vmatpush1.xpose.msra.mxu0 %v1461
        %1463 = vmatprep.subr.mxu0 0.0
        %v1464 = vand.u32 %v725, 4294901760
        %1465 = vmatpush1.xpose.msra.mxu0 %v1464
        %1466 = vmatprep.subr.mxu0 0.0
        %v1467 = vand.u32 %v728, 4294901760
        %1468 = vmatpush1.xpose.msra.mxu0 %v1467
        %1469 = vmatprep.subr.mxu0 0.0
        %v1470 = vand.u32 %v731, 4294901760
        %1471 = vmatpush1.xpose.msra.mxu0 %v1470
        %1472 = vmatprep.subr.mxu0 0.0
        %v1473 = vand.u32 %v734, 4294901760
        %1474 = vmatpush1.xpose.msra.mxu0 %v1473
        %1475 = vmatprep.subr.mxu0 0.0
        %v1476 = vand.u32 %v737, 4294901760
        %1477 = vmatpush1.xpose.msra.mxu0 %v1476
        %1478 = vmatprep.subr.mxu0 0.0
        %v1479 = vand.u32 %v740, 4294901760
        %1480 = vmatpush1.xpose.msra.mxu0 %v1479
        %1481 = vmatprep.subr.mxu0 0.0
        %v1482 = vand.u32 %v743, 4294901760
        %1483 = vmatpush1.xpose.msra.mxu0 %v1482
        %1484 = vmatprep.subr.mxu0 0.0
        %v1485 = vand.u32 %v746, 4294901760
        %1486 = vmatpush1.xpose.msra.mxu0 %v1485
        %1487 = vmatprep.subr.mxu0 0.0
        %v1488 = vand.u32 %v749, 4294901760
        %1489 = vmatpush1.xpose.msra.mxu0 %v1488
        %1490 = vmatprep.subr.mxu0 0.0
        %v1491 = vand.u32 %v752, 4294901760
        %1492 = vmatpush1.xpose.msra.mxu0 %v1491
        %1493 = vmatprep.subr.mxu0 0.0
        %v1494 = vand.u32 %v755, 4294901760
        %1495 = vmatpush1.xpose.msra.mxu0 %v1494
        %1496 = vmatprep.subr.mxu0 0.0
        %v1497 = vand.u32 %v758, 4294901760
        %1498 = vmatpush1.xpose.msra.mxu0 %v1497
        %1499 = vmatprep.subr.mxu0 0.0
        %v1500 = vand.u32 %v761, 4294901760
        %1501 = vmatpush1.xpose.msra.mxu0 %v1500
        %1502 = vmatprep.subr.mxu0 0.0
        %v1503 = vand.u32 %v764, 4294901760
        %1504 = vmatpush1.xpose.msra.mxu0 %v1503
        %1505 = vmatprep.subr.mxu0 0.0
        %v1506 = vand.u32 %v767, 4294901760
        %1507 = vmatpush1.xpose.msra.mxu0 %v1506
        %1508 = vmatprep.subr.mxu0 0.0
        %1509 = vmatpush1.xpose.msra.mxu0 0.0
        %1510 = vmatprep.subr.mxu0 0.0
        %1511 = vmatpush1.xpose.msra.mxu0 0.0
        %1512 = vmatprep.subr.mxu0 0.0
        %1513 = vmatpush1.xpose.msra.mxu0 0.0
        %1514 = vmatprep.subr.mxu0 0.0
        %1515 = vmatpush1.xpose.msra.mxu0 0.0
        %1516 = vmatprep.subr.mxu0 0.0
        %1517 = vmatpush1.xpose.msra.mxu0 0.0
        %1518 = vmatprep.subr.mxu0 0.0
        %1519 = vmatpush1.xpose.msra.mxu0 0.0
        %1520 = vmatprep.subr.mxu0 0.0
        %1521 = vmatpush1.xpose.msra.mxu0 0.0
        %1522 = vmatprep.subr.mxu0 0.0
        %1523 = vmatpush1.xpose.msra.mxu0 0.0
        %1524 = vmatprep.subr.mxu0 0.0
        %1525 = vmatpush1.xpose.msra.mxu0 0.0
        %1526 = vmatprep.subr.mxu0 0.0
        %1527 = vmatpush1.xpose.msra.mxu0 0.0
        %1528 = vmatprep.subr.mxu0 0.0
        %1529 = vmatpush1.xpose.msra.mxu0 0.0
        %1530 = vmatprep.subr.mxu0 0.0
        %1531 = vmatpush1.xpose.msra.mxu0 0.0
        %1532 = vmatprep.subr.mxu0 0.0
        %1533 = vmatpush1.xpose.msra.mxu0 0.0
        %1534 = vmatprep.subr.mxu0 0.0
        %1535 = vmatpush1.xpose.msra.mxu0 0.0
        %1536 = vmatprep.subr.mxu0 0.0
        %1537 = vmatpush1.xpose.msra.mxu0 0.0
        %1538 = vmatprep.subr.mxu0 0.0
        %1539 = vmatpush1.xpose.msra.mxu0 0.0
        %1540 = vmatprep.mubr.f32.mxu0 0.0
        %v1541 = vand.u32 %v674, 4294901760
        %v1542 = vsub.f32 %v674, %v1541
        %v1543 = vand.u32 %v1542, 4294901760
        %1544 = vmatmul.mubr.f32.gmra.mrb[0].mxu0 %v1543
        %v1545 = vpop.f32.mrb[0].mxu0
        %v1546 = vadd.f32 %v1352, %v1545
        %v1547 = vpop.f32.mrb[0].mxu0
        %1548 = vmatprep.mubr.f32.mxu0 0.0
        %v1549 = vand.u32 %v677, 4294901760
        %v1550 = vsub.f32 %v677, %v1549
        %v1551 = vand.u32 %v1550, 4294901760
        %1552 = vmatmul.mubr.f32.gmra.mrb[0].mxu0 %v1551
        %v1553 = vpop.f32.mrb[0].mxu0
        %v1554 = vadd.f32 %v1359, %v1553
        %v1555 = vpop.f32.mrb[0].mxu0
        %1556 = vmatprep.mubr.f32.mxu0 0.0
        %v1557 = vand.u32 %v680, 4294901760
        %v1558 = vsub.f32 %v680, %v1557
        %v1559 = vand.u32 %v1558, 4294901760
        %1560 = vmatmul.mubr.f32.gmra.mrb[0].mxu0 %v1559
        %v1561 = vpop.f32.mrb[0].mxu0
        %v1562 = vadd.f32 %v1366, %v1561
        %v1563 = vpop.f32.mrb[0].mxu0
        %1564 = vmatprep.mubr.f32.mxu0 0.0
        %v1565 = vand.u32 %v683, 4294901760
        %v1566 = vsub.f32 %v683, %v1565
        %v1567 = vand.u32 %v1566, 4294901760
        %1568 = vmatmul.mubr.f32.gmra.mrb[0].mxu0 %v1567
        %v1569 = vpop.f32.mrb[0].mxu0
        %v1570 = vadd.f32 %v1373, %v1569
        %v1571 = vpop.f32.mrb[0].mxu0
        %1572 = vmatprep.mubr.f32.mxu0 0.0
        %v1573 = vand.u32 %v686, 4294901760
        %v1574 = vsub.f32 %v686, %v1573
        %v1575 = vand.u32 %v1574, 4294901760
        %1576 = vmatmul.mubr.f32.gmra.mrb[0].mxu0 %v1575
        %v1577 = vpop.f32.mrb[0].mxu0
        %v1578 = vadd.f32 %v1380, %v1577
        %v1579 = vpop.f32.mrb[0].mxu0
        %1580 = vmatprep.mubr.f32.mxu0 0.0
        %v1581 = vand.u32 %v689, 4294901760
        %v1582 = vsub.f32 %v689, %v1581
        %v1583 = vand.u32 %v1582, 4294901760
        %1584 = vmatmul.mubr.f32.gmra.mrb[0].mxu0 %v1583
        %v1585 = vpop.f32.mrb[0].mxu0
        %v1586 = vadd.f32 %v1387, %v1585
        %v1587 = vpop.f32.mrb[0].mxu0
        %1588 = vmatprep.mubr.f32.mxu0 0.0
        %v1589 = vand.u32 %v692, 4294901760
        %v1590 = vsub.f32 %v692, %v1589
        %v1591 = vand.u32 %v1590, 4294901760
        %1592 = vmatmul.mubr.f32.gmra.mrb[0].mxu0 %v1591
        %v1593 = vpop.f32.mrb[0].mxu0
        %v1594 = vadd.f32 %v1394, %v1593
        %v1595 = vpop.f32.mrb[0].mxu0
        %1596 = vmatprep.mubr.f32.mxu0 0.0
        %v1597 = vand.u32 %v695, 4294901760
        %v1598 = vsub.f32 %v695, %v1597
        %v1599 = vand.u32 %v1598, 4294901760
        %1600 = vmatmul.mubr.f32.gmra.mrb[0].mxu0 %v1599
        %v1601 = vpop.f32.mrb[0].mxu0
        %v1602 = vadd.f32 %v1401, %v1601
        %v1603 = vpop.f32.mrb[0].mxu0
        %1604 = vmatprep.mubr.f32.mxu0 0.0
        %v1605 = vand.u32 %v698, 4294901760
        %v1606 = vsub.f32 %v698, %v1605
        %v1607 = vand.u32 %v1606, 4294901760
        %1608 = vmatmul.mubr.f32.gmra.mrb[0].mxu0 %v1607
        %v1609 = vpop.f32.mrb[0].mxu0
        %v1610 = vadd.f32 %v1408, %v1609
        %v1611 = vpop.f32.mrb[0].mxu0
        %1612 = vmatprep.mubr.f32.mxu0 0.0
        %v1613 = vand.u32 %v701, 4294901760
        %v1614 = vsub.f32 %v701, %v1613
        %v1615 = vand.u32 %v1614, 4294901760
        %1616 = vmatmul.mubr.f32.gmra.mrb[0].mxu0 %v1615
        %v1617 = vpop.f32.mrb[0].mxu0
        %v1618 = vadd.f32 %v1415, %v1617
        %v1619 = vpop.f32.mrb[0].mxu0
        %1620 = vmatprep.mubr.f32.mxu0 0.0
        %v1621 = vand.u32 %v704, 4294901760
        %v1622 = vsub.f32 %v704, %v1621
        %v1623 = vand.u32 %v1622, 4294901760
        %1624 = vmatmul.mubr.f32.gmra.mrb[0].mxu0 %v1623
        %v1625 = vpop.f32.mrb[0].mxu0
        %v1626 = vadd.f32 %v1422, %v1625
        %v1627 = vpop.f32.mrb[0].mxu0
        %1628 = vmatprep.mubr.f32.mxu0 0.0
        %v1629 = vand.u32 %v707, 4294901760
        %v1630 = vsub.f32 %v707, %v1629
        %v1631 = vand.u32 %v1630, 4294901760
        %1632 = vmatmul.mubr.f32.gmra.mrb[0].mxu0 %v1631
        %v1633 = vpop.f32.mrb[0].mxu0
        %v1634 = vadd.f32 %v1429, %v1633
        %v1635 = vpop.f32.mrb[0].mxu0
        %1636 = vmatprep.mubr.f32.mxu0 0.0
        %v1637 = vand.u32 %v710, 4294901760
        %v1638 = vsub.f32 %v710, %v1637
        %v1639 = vand.u32 %v1638, 4294901760
        %1640 = vmatmul.mubr.f32.gmra.mrb[0].mxu0 %v1639
        %v1641 = vpop.f32.mrb[0].mxu0
        %v1642 = vadd.f32 %v1436, %v1641
        %v1643 = vpop.f32.mrb[0].mxu0
        %1644 = vmatprep.mubr.f32.mxu0 0.0
        %v1645 = vand.u32 %v713, 4294901760
        %v1646 = vsub.f32 %v713, %v1645
        %v1647 = vand.u32 %v1646, 4294901760
        %1648 = vmatmul.mubr.f32.gmra.mrb[0].mxu0 %v1647
        %v1649 = vpop.f32.mrb[0].mxu0
        %v1650 = vadd.f32 %v1443, %v1649
        %v1651 = vpop.f32.mrb[0].mxu0
        %1652 = vmatprep.mubr.f32.mxu0 0.0
        %v1653 = vand.u32 %v716, 4294901760
        %v1654 = vsub.f32 %v716, %v1653
        %v1655 = vand.u32 %v1654, 4294901760
        %1656 = vmatmul.mubr.f32.gmra.mrb[0].mxu0 %v1655
        %v1657 = vpop.f32.mrb[0].mxu0
        %v1658 = vadd.f32 %v1450, %v1657
        %v1659 = vpop.f32.mrb[0].mxu0
        %1660 = vmatprep.mubr.f32.mxu0 0.0
        %v1661 = vand.u32 %v719, 4294901760
        %v1662 = vsub.f32 %v719, %v1661
        %v1663 = vand.u32 %v1662, 4294901760
        %1664 = vmatmul.mubr.f32.gmra.mrb[0].mxu0 %v1663
        %v1665 = vpop.f32.mrb[0].mxu0
        %v1666 = vadd.f32 %v1457, %v1665
        %v1667 = vpop.f32.mrb[0].mxu0
        %1668 = vdwg.mxu0
        %1669 = vmatprep.subr.mxu0 0.0
        %v1670 = vand.u32 %v722, 4294901760
        %v1671 = vsub.f32 %v722, %v1670
        %v1672 = vand.u32 %v1671, 4294901760
        %1673 = vmatpush1.xpose.msra.mxu0 %v1672
        %1674 = vmatprep.subr.mxu0 0.0
        %v1675 = vand.u32 %v725, 4294901760
        %v1676 = vsub.f32 %v725, %v1675
        %v1677 = vand.u32 %v1676, 4294901760
        %1678 = vmatpush1.xpose.msra.mxu0 %v1677
        %1679 = vmatprep.subr.mxu0 0.0
        %v1680 = vand.u32 %v728, 4294901760
        %v1681 = vsub.f32 %v728, %v1680
        %v1682 = vand.u32 %v1681, 4294901760
        %1683 = vmatpush1.xpose.msra.mxu0 %v1682
        %1684 = vmatprep.subr.mxu0 0.0
        %v1685 = vand.u32 %v731, 4294901760
        %v1686 = vsub.f32 %v731, %v1685
        %v1687 = vand.u32 %v1686, 4294901760
        %1688 = vmatpush1.xpose.msra.mxu0 %v1687
        %1689 = vmatprep.subr.mxu0 0.0
        %v1690 = vand.u32 %v734, 4294901760
        %v1691 = vsub.f32 %v734, %v1690
        %v1692 = vand.u32 %v1691, 4294901760
        %1693 = vmatpush1.xpose.msra.mxu0 %v1692
        %1694 = vmatprep.subr.mxu0 0.0
        %v1695 = vand.u32 %v737, 4294901760
        %v1696 = vsub.f32 %v737, %v1695
        %v1697 = vand.u32 %v1696, 4294901760
        %1698 = vmatpush1.xpose.msra.mxu0 %v1697
        %1699 = vmatprep.subr.mxu0 0.0
        %v1700 = vand.u32 %v740, 4294901760
        %v1701 = vsub.f32 %v740, %v1700
        %v1702 = vand.u32 %v1701, 4294901760
        %1703 = vmatpush1.xpose.msra.mxu0 %v1702
        %1704 = vmatprep.subr.mxu0 0.0
        %v1705 = vand.u32 %v743, 4294901760
        %v1706 = vsub.f32 %v743, %v1705
        %v1707 = vand.u32 %v1706, 4294901760
        %1708 = vmatpush1.xpose.msra.mxu0 %v1707
        %1709 = vmatprep.subr.mxu0 0.0
        %v1710 = vand.u32 %v746, 4294901760
        %v1711 = vsub.f32 %v746, %v1710
        %v1712 = vand.u32 %v1711, 4294901760
        %1713 = vmatpush1.xpose.msra.mxu0 %v1712
        %1714 = vmatprep.subr.mxu0 0.0
        %v1715 = vand.u32 %v749, 4294901760
        %v1716 = vsub.f32 %v749, %v1715
        %v1717 = vand.u32 %v1716, 4294901760
        %1718 = vmatpush1.xpose.msra.mxu0 %v1717
        %1719 = vmatprep.subr.mxu0 0.0
        %v1720 = vand.u32 %v752, 4294901760
        %v1721 = vsub.f32 %v752, %v1720
        %v1722 = vand.u32 %v1721, 4294901760
        %1723 = vmatpush1.xpose.msra.mxu0 %v1722
        %1724 = vmatprep.subr.mxu0 0.0
        %v1725 = vand.u32 %v755, 4294901760
        %v1726 = vsub.f32 %v755, %v1725
        %v1727 = vand.u32 %v1726, 4294901760
        %1728 = vmatpush1.xpose.msra.mxu0 %v1727
        %1729 = vmatprep.subr.mxu0 0.0
        %v1730 = vand.u32 %v758, 4294901760
        %v1731 = vsub.f32 %v758, %v1730
        %v1732 = vand.u32 %v1731, 4294901760
        %1733 = vmatpush1.xpose.msra.mxu0 %v1732
        %1734 = vmatprep.subr.mxu0 0.0
        %v1735 = vand.u32 %v761, 4294901760
        %v1736 = vsub.f32 %v761, %v1735
        %v1737 = vand.u32 %v1736, 4294901760
        %1738 = vmatpush1.xpose.msra.mxu0 %v1737
        %1739 = vmatprep.subr.mxu0 0.0
        %v1740 = vand.u32 %v764, 4294901760
        %v1741 = vsub.f32 %v764, %v1740
        %v1742 = vand.u32 %v1741, 4294901760
        %1743 = vmatpush1.xpose.msra.mxu0 %v1742
        %1744 = vmatprep.subr.mxu0 0.0
        %v1745 = vand.u32 %v767, 4294901760
        %v1746 = vsub.f32 %v767, %v1745
        %v1747 = vand.u32 %v1746, 4294901760
        %1748 = vmatpush1.xpose.msra.mxu0 %v1747
        %1749 = vmatprep.subr.mxu0 0.0
        %1750 = vmatpush1.xpose.msra.mxu0 0.0
        %1751 = vmatprep.subr.mxu0 0.0
        %1752 = vmatpush1.xpose.msra.mxu0 0.0
        %1753 = vmatprep.subr.mxu0 0.0
        %1754 = vmatpush1.xpose.msra.mxu0 0.0
        %1755 = vmatprep.subr.mxu0 0.0
        %1756 = vmatpush1.xpose.msra.mxu0 0.0
        %1757 = vmatprep.subr.mxu0 0.0
        %1758 = vmatpush1.xpose.msra.mxu0 0.0
        %1759 = vmatprep.subr.mxu0 0.0
        %1760 = vmatpush1.xpose.msra.mxu0 0.0
        %1761 = vmatprep.subr.mxu0 0.0
        %1762 = vmatpush1.xpose.msra.mxu0 0.0
        %1763 = vmatprep.subr.mxu0 0.0
        %1764 = vmatpush1.xpose.msra.mxu0 0.0
        %1765 = vmatprep.subr.mxu0 0.0
        %1766 = vmatpush1.xpose.msra.mxu0 0.0
        %1767 = vmatprep.subr.mxu0 0.0
        %1768 = vmatpush1.xpose.msra.mxu0 0.0
        %1769 = vmatprep.subr.mxu0 0.0
        %1770 = vmatpush1.xpose.msra.mxu0 0.0
        %1771 = vmatprep.subr.mxu0 0.0
        %1772 = vmatpush1.xpose.msra.mxu0 0.0
        %1773 = vmatprep.subr.mxu0 0.0
        %1774 = vmatpush1.xpose.msra.mxu0 0.0
        %1775 = vmatprep.subr.mxu0 0.0
        %1776 = vmatpush1.xpose.msra.mxu0 0.0
        %1777 = vmatprep.subr.mxu0 0.0
        %1778 = vmatpush1.xpose.msra.mxu0 0.0
        %1779 = vmatprep.subr.mxu0 0.0
        %1780 = vmatpush1.xpose.msra.mxu0 0.0
        %1781 = vmatprep.mubr.f32.mxu0 0.0
        %v1782 = vand.u32 %v674, 4294901760
        %1783 = vmatmul.mubr.f32.gmra.mrb[0].mxu0 %v1782
        %v1784 = vpop.f32.mrb[0].mxu0
        %v1785 = vadd.f32 %v1546, %v1784
        %v1786 = vpop.f32.mrb[0].mxu0
        %1787 = vmatprep.mubr.f32.mxu0 0.0
        %v1788 = vand.u32 %v677, 4294901760
        %1789 = vmatmul.mubr.f32.gmra.mrb[0].mxu0 %v1788
        %v1790 = vpop.f32.mrb[0].mxu0
        %v1791 = vadd.f32 %v1554, %v1790
        %v1792 = vpop.f32.mrb[0].mxu0
        %1793 = vmatprep.mubr.f32.mxu0 0.0
        %v1794 = vand.u32 %v680, 4294901760
        %1795 = vmatmul.mubr.f32.gmra.mrb[0].mxu0 %v1794
        %v1796 = vpop.f32.mrb[0].mxu0
        %v1797 = vadd.f32 %v1562, %v1796
        %v1798 = vpop.f32.mrb[0].mxu0
        %1799 = vmatprep.mubr.f32.mxu0 0.0
        %v1800 = vand.u32 %v683, 4294901760
        %1801 = vmatmul.mubr.f32.gmra.mrb[0].mxu0 %v1800
        %v1802 = vpop.f32.mrb[0].mxu0
        %v1803 = vadd.f32 %v1570, %v1802
        %v1804 = vpop.f32.mrb[0].mxu0
        %1805 = vmatprep.mubr.f32.mxu0 0.0
        %v1806 = vand.u32 %v686, 4294901760
        %1807 = vmatmul.mubr.f32.gmra.mrb[0].mxu0 %v1806
        %v1808 = vpop.f32.mrb[0].mxu0
        %v1809 = vadd.f32 %v1578, %v1808
        %v1810 = vpop.f32.mrb[0].mxu0
        %1811 = vmatprep.mubr.f32.mxu0 0.0
        %v1812 = vand.u32 %v689, 4294901760
        %1813 = vmatmul.mubr.f32.gmra.mrb[0].mxu0 %v1812
        %v1814 = vpop.f32.mrb[0].mxu0
        %v1815 = vadd.f32 %v1586, %v1814
        %v1816 = vpop.f32.mrb[0].mxu0
        %1817 = vmatprep.mubr.f32.mxu0 0.0
        %v1818 = vand.u32 %v692, 4294901760
        %1819 = vmatmul.mubr.f32.gmra.mrb[0].mxu0 %v1818
        %v1820 = vpop.f32.mrb[0].mxu0
        %v1821 = vadd.f32 %v1594, %v1820
        %v1822 = vpop.f32.mrb[0].mxu0
        %1823 = vmatprep.mubr.f32.mxu0 0.0
        %v1824 = vand.u32 %v695, 4294901760
        %1825 = vmatmul.mubr.f32.gmra.mrb[0].mxu0 %v1824
        %v1826 = vpop.f32.mrb[0].mxu0
        %v1827 = vadd.f32 %v1602, %v1826
        %v1828 = vpop.f32.mrb[0].mxu0
        %1829 = vmatprep.mubr.f32.mxu0 0.0
        %v1830 = vand.u32 %v698, 4294901760
        %1831 = vmatmul.mubr.f32.gmra.mrb[0].mxu0 %v1830
        %v1832 = vpop.f32.mrb[0].mxu0
        %v1833 = vadd.f32 %v1610, %v1832
        %v1834 = vpop.f32.mrb[0].mxu0
        %1835 = vmatprep.mubr.f32.mxu0 0.0
        %v1836 = vand.u32 %v701, 4294901760
        %1837 = vmatmul.mubr.f32.gmra.mrb[0].mxu0 %v1836
        %v1838 = vpop.f32.mrb[0].mxu0
        %v1839 = vadd.f32 %v1618, %v1838
        %v1840 = vpop.f32.mrb[0].mxu0
        %1841 = vmatprep.mubr.f32.mxu0 0.0
        %v1842 = vand.u32 %v704, 4294901760
        %1843 = vmatmul.mubr.f32.gmra.mrb[0].mxu0 %v1842
        %v1844 = vpop.f32.mrb[0].mxu0
        %v1845 = vadd.f32 %v1626, %v1844
        %v1846 = vpop.f32.mrb[0].mxu0
        %1847 = vmatprep.mubr.f32.mxu0 0.0
        %v1848 = vand.u32 %v707, 4294901760
        %1849 = vmatmul.mubr.f32.gmra.mrb[0].mxu0 %v1848
        %v1850 = vpop.f32.mrb[0].mxu0
        %v1851 = vadd.f32 %v1634, %v1850
        %v1852 = vpop.f32.mrb[0].mxu0
        %1853 = vmatprep.mubr.f32.mxu0 0.0
        %v1854 = vand.u32 %v710, 4294901760
        %1855 = vmatmul.mubr.f32.gmra.mrb[0].mxu0 %v1854
        %v1856 = vpop.f32.mrb[0].mxu0
        %v1857 = vadd.f32 %v1642, %v1856
        %v1858 = vpop.f32.mrb[0].mxu0
        %1859 = vmatprep.mubr.f32.mxu0 0.0
        %v1860 = vand.u32 %v713, 4294901760
        %1861 = vmatmul.mubr.f32.gmra.mrb[0].mxu0 %v1860
        %v1862 = vpop.f32.mrb[0].mxu0
        %v1863 = vadd.f32 %v1650, %v1862
        %v1864 = vpop.f32.mrb[0].mxu0
        %1865 = vmatprep.mubr.f32.mxu0 0.0
        %v1866 = vand.u32 %v716, 4294901760
        %1867 = vmatmul.mubr.f32.gmra.mrb[0].mxu0 %v1866
        %v1868 = vpop.f32.mrb[0].mxu0
        %v1869 = vadd.f32 %v1658, %v1868
        %v1870 = vpop.f32.mrb[0].mxu0
        %1871 = vmatprep.mubr.f32.mxu0 0.0
        %v1872 = vand.u32 %v719, 4294901760
        %1873 = vmatmul.mubr.f32.gmra.mrb[0].mxu0 %v1872
        %v1874 = vpop.f32.mrb[0].mxu0
        %v1875 = vadd.f32 %v1666, %v1874
        %v1876 = vpop.f32.mrb[0].mxu0
        %1877 = vdwg.mxu0
        %1878 = vmatprep.subr.mxu0 0.0
        %v1879 = vand.u32 %v722, 4294901760
        %1880 = vmatpush1.xpose.msra.mxu0 %v1879
        %1881 = vmatprep.subr.mxu0 0.0
        %v1882 = vand.u32 %v725, 4294901760
        %1883 = vmatpush1.xpose.msra.mxu0 %v1882
        %1884 = vmatprep.subr.mxu0 0.0
        %v1885 = vand.u32 %v728, 4294901760
        %1886 = vmatpush1.xpose.msra.mxu0 %v1885
        %1887 = vmatprep.subr.mxu0 0.0
        %v1888 = vand.u32 %v731, 4294901760
        %1889 = vmatpush1.xpose.msra.mxu0 %v1888
        %1890 = vmatprep.subr.mxu0 0.0
        %v1891 = vand.u32 %v734, 4294901760
        %1892 = vmatpush1.xpose.msra.mxu0 %v1891
        %1893 = vmatprep.subr.mxu0 0.0
        %v1894 = vand.u32 %v737, 4294901760
        %1895 = vmatpush1.xpose.msra.mxu0 %v1894
        %1896 = vmatprep.subr.mxu0 0.0
        %v1897 = vand.u32 %v740, 4294901760
        %1898 = vmatpush1.xpose.msra.mxu0 %v1897
        %1899 = vmatprep.subr.mxu0 0.0
        %v1900 = vand.u32 %v743, 4294901760
        %1901 = vmatpush1.xpose.msra.mxu0 %v1900
        %1902 = vmatprep.subr.mxu0 0.0
        %v1903 = vand.u32 %v746, 4294901760
        %1904 = vmatpush1.xpose.msra.mxu0 %v1903
        %1905 = vmatprep.subr.mxu0 0.0
        %v1906 = vand.u32 %v749, 4294901760
        %1907 = vmatpush1.xpose.msra.mxu0 %v1906
        %1908 = vmatprep.subr.mxu0 0.0
        %v1909 = vand.u32 %v752, 4294901760
        %1910 = vmatpush1.xpose.msra.mxu0 %v1909
        %1911 = vmatprep.subr.mxu0 0.0
        %v1912 = vand.u32 %v755, 4294901760
        %1913 = vmatpush1.xpose.msra.mxu0 %v1912
        %1914 = vmatprep.subr.mxu0 0.0
        %v1915 = vand.u32 %v758, 4294901760
        %1916 = vmatpush1.xpose.msra.mxu0 %v1915
        %1917 = vmatprep.subr.mxu0 0.0
        %v1918 = vand.u32 %v761, 4294901760
        %1919 = vmatpush1.xpose.msra.mxu0 %v1918
        %1920 = vmatprep.subr.mxu0 0.0
        %v1921 = vand.u32 %v764, 4294901760
        %1922 = vmatpush1.xpose.msra.mxu0 %v1921
        %1923 = vmatprep.subr.mxu0 0.0
        %v1924 = vand.u32 %v767, 4294901760
        %1925 = vmatpush1.xpose.msra.mxu0 %v1924
        %1926 = vmatprep.subr.mxu0 0.0
        %1927 = vmatpush1.xpose.msra.mxu0 0.0
        %1928 = vmatprep.subr.mxu0 0.0
        %1929 = vmatpush1.xpose.msra.mxu0 0.0
        %1930 = vmatprep.subr.mxu0 0.0
        %1931 = vmatpush1.xpose.msra.mxu0 0.0
        %1932 = vmatprep.subr.mxu0 0.0
        %1933 = vmatpush1.xpose.msra.mxu0 0.0
        %1934 = vmatprep.subr.mxu0 0.0
        %1935 = vmatpush1.xpose.msra.mxu0 0.0
        %1936 = vmatprep.subr.mxu0 0.0
        %1937 = vmatpush1.xpose.msra.mxu0 0.0
        %1938 = vmatprep.subr.mxu0 0.0
        %1939 = vmatpush1.xpose.msra.mxu0 0.0
        %1940 = vmatprep.subr.mxu0 0.0
        %1941 = vmatpush1.xpose.msra.mxu0 0.0
        %1942 = vmatprep.subr.mxu0 0.0
        %1943 = vmatpush1.xpose.msra.mxu0 0.0
        %1944 = vmatprep.subr.mxu0 0.0
        %1945 = vmatpush1.xpose.msra.mxu0 0.0
        %1946 = vmatprep.subr.mxu0 0.0
        %1947 = vmatpush1.xpose.msra.mxu0 0.0
        %1948 = vmatprep.subr.mxu0 0.0
        %1949 = vmatpush1.xpose.msra.mxu0 0.0
        %1950 = vmatprep.subr.mxu0 0.0
        %1951 = vmatpush1.xpose.msra.mxu0 0.0
        %1952 = vmatprep.subr.mxu0 0.0
        %1953 = vmatpush1.xpose.msra.mxu0 0.0
        %1954 = vmatprep.subr.mxu0 0.0
        %1955 = vmatpush1.xpose.msra.mxu0 0.0
        %1956 = vmatprep.subr.mxu0 0.0
        %1957 = vmatpush1.xpose.msra.mxu0 0.0
        %1958 = vmatprep.mubr.f32.mxu0 0.0
        %v1959 = vand.u32 %v674, 4294901760
        %1960 = vmatmul.mubr.f32.gmra.mrb[0].mxu0 %v1959
        %v1961 = vpop.f32.mrb[0].mxu0
        %v1962 = vadd.f32 %v1785, %v1961
        %v1963 = vpop.f32.mrb[0].mxu0
        %1964 = vmatprep.mubr.f32.mxu0 0.0
        %v1965 = vand.u32 %v677, 4294901760
        %1966 = vmatmul.mubr.f32.gmra.mrb[0].mxu0 %v1965
        %v1967 = vpop.f32.mrb[0].mxu0
        %v1968 = vadd.f32 %v1791, %v1967
        %v1969 = vpop.f32.mrb[0].mxu0
        %1970 = vmatprep.mubr.f32.mxu0 0.0
        %v1971 = vand.u32 %v680, 4294901760
        %1972 = vmatmul.mubr.f32.gmra.mrb[0].mxu0 %v1971
        %v1973 = vpop.f32.mrb[0].mxu0
        %v1974 = vadd.f32 %v1797, %v1973
        %v1975 = vpop.f32.mrb[0].mxu0
        %1976 = vmatprep.mubr.f32.mxu0 0.0
        %v1977 = vand.u32 %v683, 4294901760
        %1978 = vmatmul.mubr.f32.gmra.mrb[0].mxu0 %v1977
        %v1979 = vpop.f32.mrb[0].mxu0
        %v1980 = vadd.f32 %v1803, %v1979
        %v1981 = vpop.f32.mrb[0].mxu0
        %1982 = vmatprep.mubr.f32.mxu0 0.0
        %v1983 = vand.u32 %v686, 4294901760
        %1984 = vmatmul.mubr.f32.gmra.mrb[0].mxu0 %v1983
        %v1985 = vpop.f32.mrb[0].mxu0
        %v1986 = vadd.f32 %v1809, %v1985
        %v1987 = vpop.f32.mrb[0].mxu0
        %1988 = vmatprep.mubr.f32.mxu0 0.0
        %v1989 = vand.u32 %v689, 4294901760
        %1990 = vmatmul.mubr.f32.gmra.mrb[0].mxu0 %v1989
        %v1991 = vpop.f32.mrb[0].mxu0
        %v1992 = vadd.f32 %v1815, %v1991
        %v1993 = vpop.f32.mrb[0].mxu0
        %1994 = vmatprep.mubr.f32.mxu0 0.0
        %v1995 = vand.u32 %v692, 4294901760
        %1996 = vmatmul.mubr.f32.gmra.mrb[0].mxu0 %v1995
        %v1997 = vpop.f32.mrb[0].mxu0
        %v1998 = vadd.f32 %v1821, %v1997
        %v1999 = vpop.f32.mrb[0].mxu0
        %2000 = vmatprep.mubr.f32.mxu0 0.0
        %v2001 = vand.u32 %v695, 4294901760
        %2002 = vmatmul.mubr.f32.gmra.mrb[0].mxu0 %v2001
        %v2003 = vpop.f32.mrb[0].mxu0
        %v2004 = vadd.f32 %v1827, %v2003
        %v2005 = vpop.f32.mrb[0].mxu0
        %2006 = vmatprep.mubr.f32.mxu0 0.0
        %v2007 = vand.u32 %v698, 4294901760
        %2008 = vmatmul.mubr.f32.gmra.mrb[0].mxu0 %v2007
        %v2009 = vpop.f32.mrb[0].mxu0
        %v2010 = vadd.f32 %v1833, %v2009
        %v2011 = vpop.f32.mrb[0].mxu0
        %2012 = vmatprep.mubr.f32.mxu0 0.0
        %v2013 = vand.u32 %v701, 4294901760
        %2014 = vmatmul.mubr.f32.gmra.mrb[0].mxu0 %v2013
        %v2015 = vpop.f32.mrb[0].mxu0
        %v2016 = vadd.f32 %v1839, %v2015
        %v2017 = vpop.f32.mrb[0].mxu0
        %2018 = vmatprep.mubr.f32.mxu0 0.0
        %v2019 = vand.u32 %v704, 4294901760
        %2020 = vmatmul.mubr.f32.gmra.mrb[0].mxu0 %v2019
        %v2021 = vpop.f32.mrb[0].mxu0
        %v2022 = vadd.f32 %v1845, %v2021
        %v2023 = vpop.f32.mrb[0].mxu0
        %2024 = vmatprep.mubr.f32.mxu0 0.0
        %v2025 = vand.u32 %v707, 4294901760
        %2026 = vmatmul.mubr.f32.gmra.mrb[0].mxu0 %v2025
        %v2027 = vpop.f32.mrb[0].mxu0
        %v2028 = vadd.f32 %v1851, %v2027
        %v2029 = vpop.f32.mrb[0].mxu0
        %2030 = vmatprep.mubr.f32.mxu0 0.0
        %v2031 = vand.u32 %v710, 4294901760
        %2032 = vmatmul.mubr.f32.gmra.mrb[0].mxu0 %v2031
        %v2033 = vpop.f32.mrb[0].mxu0
        %v2034 = vadd.f32 %v1857, %v2033
        %v2035 = vpop.f32.mrb[0].mxu0
        %2036 = vmatprep.mubr.f32.mxu0 0.0
        %v2037 = vand.u32 %v713, 4294901760
        %2038 = vmatmul.mubr.f32.gmra.mrb[0].mxu0 %v2037
        %v2039 = vpop.f32.mrb[0].mxu0
        %v2040 = vadd.f32 %v1863, %v2039
        %v2041 = vpop.f32.mrb[0].mxu0
        %2042 = vmatprep.mubr.f32.mxu0 0.0
        %v2043 = vand.u32 %v716, 4294901760
        %2044 = vmatmul.mubr.f32.gmra.mrb[0].mxu0 %v2043
        %v2045 = vpop.f32.mrb[0].mxu0
        %v2046 = vadd.f32 %v1869, %v2045
        %v2047 = vpop.f32.mrb[0].mxu0
        %2048 = vmatprep.mubr.f32.mxu0 0.0
        %v2049 = vand.u32 %v719, 4294901760
        %2050 = vmatmul.mubr.f32.gmra.mrb[0].mxu0 %v2049
        %v2051 = vpop.f32.mrb[0].mxu0
        %v2052 = vadd.f32 %v1875, %v2051
        %v2053 = vpop.f32.mrb[0].mxu0
        %2054 = vdwg.mxu0
        %2056 = vset.pattern.permute.xlu0 0
        %2057 = vperm.xlu0 %2056, %v606
        %v2058 = vpop.permute.xlu0 %2057
        %2061 = vset.pattern.permute.xlu0 0
        %2062 = vperm.xlu0 %2061, %v607
        %v2063 = vpop.permute.xlu0 %2062
        %2066 = vset.pattern.permute.xlu0 0
        %2067 = vperm.xlu0 %2066, %v608
        %v2068 = vpop.permute.xlu0 %2067
        %2071 = vset.pattern.permute.xlu0 0
        %2072 = vperm.xlu0 %2071, %v609
        %v2073 = vpop.permute.xlu0 %2072
        %2076 = vset.pattern.permute.xlu0 0
        %2077 = vperm.xlu0 %2076, %v610
        %v2078 = vpop.permute.xlu0 %2077
        %2081 = vset.pattern.permute.xlu0 0
        %2082 = vperm.xlu0 %2081, %v611
        %v2083 = vpop.permute.xlu0 %2082
        %2086 = vset.pattern.permute.xlu0 0
        %2087 = vperm.xlu0 %2086, %v612
        %v2088 = vpop.permute.xlu0 %2087
        %2091 = vset.pattern.permute.xlu0 0
        %2092 = vperm.xlu0 %2091, %v613
        %v2093 = vpop.permute.xlu0 %2092
        %2096 = vset.pattern.permute.xlu0 0
        %2097 = vperm.xlu0 %2096, %v614
        %v2098 = vpop.permute.xlu0 %2097
        %2101 = vset.pattern.permute.xlu0 0
        %2102 = vperm.xlu0 %2101, %v615
        %v2103 = vpop.permute.xlu0 %2102
        %2106 = vset.pattern.permute.xlu0 0
        %2107 = vperm.xlu0 %2106, %v616
        %v2108 = vpop.permute.xlu0 %2107
        %2111 = vset.pattern.permute.xlu0 0
        %2112 = vperm.xlu0 %2111, %v617
        %v2113 = vpop.permute.xlu0 %2112
        %2116 = vset.pattern.permute.xlu0 0
        %2117 = vperm.xlu0 %2116, %v618
        %v2118 = vpop.permute.xlu0 %2117
        %2121 = vset.pattern.permute.xlu0 0
        %2122 = vperm.xlu0 %2121, %v619
        %v2123 = vpop.permute.xlu0 %2122
        %2126 = vset.pattern.permute.xlu0 0
        %2127 = vperm.xlu0 %2126, %v620
        %v2128 = vpop.permute.xlu0 %2127
        %2131 = vset.pattern.permute.xlu0 0
        %2132 = vperm.xlu0 %2131, %v621
        %v2133 = vpop.permute.xlu0 %2132
        %v2136 = vlaneseq
        %v2137 = vshrl.u32 %v2136, 7
        %v2138 = vsub.s32 0, %v2137
        %v2139 = vrot.slane %v670, %v2138
        %v2141 = vadd.f32 %v2058, %v2139
        %v2142 = vadd.f32 %v2063, %v2139
        %v2143 = vadd.f32 %v2068, %v2139
        %v2144 = vadd.f32 %v2073, %v2139
        %v2145 = vadd.f32 %v2078, %v2139
        %v2146 = vadd.f32 %v2083, %v2139
        %v2147 = vadd.f32 %v2088, %v2139
        %v2148 = vadd.f32 %v2093, %v2139
        %v2149 = vadd.f32 %v2098, %v2139
        %v2150 = vadd.f32 %v2103, %v2139
        %v2151 = vadd.f32 %v2108, %v2139
        %v2152 = vadd.f32 %v2113, %v2139
        %v2153 = vadd.f32 %v2118, %v2139
        %v2154 = vadd.f32 %v2123, %v2139
        %v2155 = vadd.f32 %v2128, %v2139
        %v2156 = vadd.f32 %v2133, %v2139
        %v2157 = vmul.f32 %v1962, 2.0
        %v2158 = vmul.f32 %v1968, 2.0
        %v2159 = vmul.f32 %v1974, 2.0
        %v2160 = vmul.f32 %v1980, 2.0
        %v2161 = vmul.f32 %v1986, 2.0
        %v2162 = vmul.f32 %v1992, 2.0
        %v2163 = vmul.f32 %v1998, 2.0
        %v2164 = vmul.f32 %v2004, 2.0
        %v2165 = vmul.f32 %v2010, 2.0
        %v2166 = vmul.f32 %v2016, 2.0
        %v2167 = vmul.f32 %v2022, 2.0
        %v2168 = vmul.f32 %v2028, 2.0
        %v2169 = vmul.f32 %v2034, 2.0
        %v2170 = vmul.f32 %v2040, 2.0
        %v2171 = vmul.f32 %v2046, 2.0
        %v2172 = vmul.f32 %v2052, 2.0
        %v2173 = vsub.f32 %v2141, %v2157
        %v2174 = vsub.f32 %v2142, %v2158
        %v2175 = vsub.f32 %v2143, %v2159
        %v2176 = vsub.f32 %v2144, %v2160
        %v2177 = vsub.f32 %v2145, %v2161
        %v2178 = vsub.f32 %v2146, %v2162
        %v2179 = vsub.f32 %v2147, %v2163
        %v2180 = vsub.f32 %v2148, %v2164
        %v2181 = vsub.f32 %v2149, %v2165
        %v2182 = vsub.f32 %v2150, %v2166
        %v2183 = vsub.f32 %v2151, %v2167
        %v2184 = vsub.f32 %v2152, %v2168
        %v2185 = vsub.f32 %v2153, %v2169
        %v2186 = vsub.f32 %v2154, %v2170
        %v2187 = vsub.f32 %v2155, %v2171
        %v2188 = vsub.f32 %v2156, %v2172
        %v2189 = vmax.f32 %v2173, 0.0
        %v2190 = vmax.f32 %v2174, 0.0
        %v2191 = vmax.f32 %v2175, 0.0
        %v2192 = vmax.f32 %v2176, 0.0
        %v2193 = vmax.f32 %v2177, 0.0
        %v2194 = vmax.f32 %v2178, 0.0
        %v2195 = vmax.f32 %v2179, 0.0
        %v2196 = vmax.f32 %v2180, 0.0
        %v2197 = vmax.f32 %v2181, 0.0
        %v2198 = vmax.f32 %v2182, 0.0
        %v2199 = vmax.f32 %v2183, 0.0
        %v2200 = vmax.f32 %v2184, 0.0
        %v2201 = vmax.f32 %v2185, 0.0
        %v2202 = vmax.f32 %v2186, 0.0
        %v2203 = vmax.f32 %v2187, 0.0
        %v2204 = vmax.f32 %v2188, 0.0
        %v2206 = vsel %vm672, %v590, 0
        %v2209 = vsel %vm672, %v591, 0
        %v2212 = vsel %vm672, %v592, 0
        %v2215 = vsel %vm672, %v593, 0
        %v2218 = vsel %vm672, %v594, 0
        %v2221 = vsel %vm672, %v595, 0
        %v2224 = vsel %vm672, %v596, 0
        %v2227 = vsel %vm672, %v597, 0
        %v2230 = vsel %vm672, %v598, 0
        %v2233 = vsel %vm672, %v599, 0
        %v2236 = vsel %vm672, %v600, 0
        %v2239 = vsel %vm672, %v601, 0
        %v2242 = vsel %vm672, %v602, 0
        %v2245 = vsel %vm672, %v603, 0
        %v2248 = vsel %vm672, %v604, 0
        %v2251 = vsel %vm672, %v605, 0
        %v2254 = vsel %vm672, %v654, 0
        %v2257 = vsel %vm672, %v655, 0
        %v2260 = vsel %vm672, %v656, 0
        %v2263 = vsel %vm672, %v657, 0
        %v2266 = vsel %vm672, %v658, 0
        %v2269 = vsel %vm672, %v659, 0
        %v2272 = vsel %vm672, %v660, 0
        %v2275 = vsel %vm672, %v661, 0
        %v2278 = vsel %vm672, %v662, 0
        %v2281 = vsel %vm672, %v663, 0
        %v2284 = vsel %vm672, %v664, 0
        %v2287 = vsel %vm672, %v665, 0
        %v2290 = vsel %vm672, %v666, 0
        %v2293 = vsel %vm672, %v667, 0
        %v2296 = vsel %vm672, %v668, 0
        %v2299 = vsel %vm672, %v669, 0
        %2301 = vmatprep.subr.mxu0 0.0
        %v2302 = vand.u32 %v2254, 4294901760
        %2303 = vmatpush1.xpose.msra.mxu0 %v2302
        %2304 = vmatprep.subr.mxu0 0.0
        %v2305 = vand.u32 %v2257, 4294901760
        %2306 = vmatpush1.xpose.msra.mxu0 %v2305
        %2307 = vmatprep.subr.mxu0 0.0
        %v2308 = vand.u32 %v2260, 4294901760
        %2309 = vmatpush1.xpose.msra.mxu0 %v2308
        %2310 = vmatprep.subr.mxu0 0.0
        %v2311 = vand.u32 %v2263, 4294901760
        %2312 = vmatpush1.xpose.msra.mxu0 %v2311
        %2313 = vmatprep.subr.mxu0 0.0
        %v2314 = vand.u32 %v2266, 4294901760
        %2315 = vmatpush1.xpose.msra.mxu0 %v2314
        %2316 = vmatprep.subr.mxu0 0.0
        %v2317 = vand.u32 %v2269, 4294901760
        %2318 = vmatpush1.xpose.msra.mxu0 %v2317
        %2319 = vmatprep.subr.mxu0 0.0
        %v2320 = vand.u32 %v2272, 4294901760
        %2321 = vmatpush1.xpose.msra.mxu0 %v2320
        %2322 = vmatprep.subr.mxu0 0.0
        %v2323 = vand.u32 %v2275, 4294901760
        %2324 = vmatpush1.xpose.msra.mxu0 %v2323
        %2325 = vmatprep.subr.mxu0 0.0
        %v2326 = vand.u32 %v2278, 4294901760
        %2327 = vmatpush1.xpose.msra.mxu0 %v2326
        %2328 = vmatprep.subr.mxu0 0.0
        %v2329 = vand.u32 %v2281, 4294901760
        %2330 = vmatpush1.xpose.msra.mxu0 %v2329
        %2331 = vmatprep.subr.mxu0 0.0
        %v2332 = vand.u32 %v2284, 4294901760
        %2333 = vmatpush1.xpose.msra.mxu0 %v2332
        %2334 = vmatprep.subr.mxu0 0.0
        %v2335 = vand.u32 %v2287, 4294901760
        %2336 = vmatpush1.xpose.msra.mxu0 %v2335
        %2337 = vmatprep.subr.mxu0 0.0
        %v2338 = vand.u32 %v2290, 4294901760
        %2339 = vmatpush1.xpose.msra.mxu0 %v2338
        %2340 = vmatprep.subr.mxu0 0.0
        %v2341 = vand.u32 %v2293, 4294901760
        %2342 = vmatpush1.xpose.msra.mxu0 %v2341
        %2343 = vmatprep.subr.mxu0 0.0
        %v2344 = vand.u32 %v2296, 4294901760
        %2345 = vmatpush1.xpose.msra.mxu0 %v2344
        %2346 = vmatprep.subr.mxu0 0.0
        %v2347 = vand.u32 %v2299, 4294901760
        %2348 = vmatpush1.xpose.msra.mxu0 %v2347
        %2349 = vmatprep.subr.mxu0 0.0
        %2350 = vmatpush1.xpose.msra.mxu0 0.0
        %2351 = vmatprep.subr.mxu0 0.0
        %2352 = vmatpush1.xpose.msra.mxu0 0.0
        %2353 = vmatprep.subr.mxu0 0.0
        %2354 = vmatpush1.xpose.msra.mxu0 0.0
        %2355 = vmatprep.subr.mxu0 0.0
        %2356 = vmatpush1.xpose.msra.mxu0 0.0
        %2357 = vmatprep.subr.mxu0 0.0
        %2358 = vmatpush1.xpose.msra.mxu0 0.0
        %2359 = vmatprep.subr.mxu0 0.0
        %2360 = vmatpush1.xpose.msra.mxu0 0.0
        %2361 = vmatprep.subr.mxu0 0.0
        %2362 = vmatpush1.xpose.msra.mxu0 0.0
        %2363 = vmatprep.subr.mxu0 0.0
        %2364 = vmatpush1.xpose.msra.mxu0 0.0
        %2365 = vmatprep.subr.mxu0 0.0
        %2366 = vmatpush1.xpose.msra.mxu0 0.0
        %2367 = vmatprep.subr.mxu0 0.0
        %2368 = vmatpush1.xpose.msra.mxu0 0.0
        %2369 = vmatprep.subr.mxu0 0.0
        %2370 = vmatpush1.xpose.msra.mxu0 0.0
        %2371 = vmatprep.subr.mxu0 0.0
        %2372 = vmatpush1.xpose.msra.mxu0 0.0
        %2373 = vmatprep.subr.mxu0 0.0
        %2374 = vmatpush1.xpose.msra.mxu0 0.0
        %2375 = vmatprep.subr.mxu0 0.0
        %2376 = vmatpush1.xpose.msra.mxu0 0.0
        %2377 = vmatprep.subr.mxu0 0.0
        %2378 = vmatpush1.xpose.msra.mxu0 0.0
        %2379 = vmatprep.subr.mxu0 0.0
        %2380 = vmatpush1.xpose.msra.mxu0 0.0
        %2381 = vmatprep.mubr.f32.mxu0 0.0
        %v2382 = vand.u32 %v2206, 4294901760
        %v2383 = vsub.f32 %v2206, %v2382
        %v2384 = vand.u32 %v2383, 4294901760
        %v2385 = vsub.f32 %v2383, %v2384
        %v2386 = vand.u32 %v2385, 4294901760
        %2387 = vmatmul.mubr.f32.gmra.mrb[0].mxu0 %v2386
        %v2388 = vpop.f32.mrb[0].mxu0
        %v2389 = vadd.f32 0.0, %v2388
        %v2390 = vpop.f32.mrb[0].mxu0
        %2391 = vmatprep.mubr.f32.mxu0 0.0
        %v2392 = vand.u32 %v2209, 4294901760
        %v2393 = vsub.f32 %v2209, %v2392
        %v2394 = vand.u32 %v2393, 4294901760
        %v2395 = vsub.f32 %v2393, %v2394
        %v2396 = vand.u32 %v2395, 4294901760
        %2397 = vmatmul.mubr.f32.gmra.mrb[0].mxu0 %v2396
        %v2398 = vpop.f32.mrb[0].mxu0
        %v2399 = vadd.f32 0.0, %v2398
        %v2400 = vpop.f32.mrb[0].mxu0
        %2401 = vmatprep.mubr.f32.mxu0 0.0
        %v2402 = vand.u32 %v2212, 4294901760
        %v2403 = vsub.f32 %v2212, %v2402
        %v2404 = vand.u32 %v2403, 4294901760
        %v2405 = vsub.f32 %v2403, %v2404
        %v2406 = vand.u32 %v2405, 4294901760
        %2407 = vmatmul.mubr.f32.gmra.mrb[0].mxu0 %v2406
        %v2408 = vpop.f32.mrb[0].mxu0
        %v2409 = vadd.f32 0.0, %v2408
        %v2410 = vpop.f32.mrb[0].mxu0
        %2411 = vmatprep.mubr.f32.mxu0 0.0
        %v2412 = vand.u32 %v2215, 4294901760
        %v2413 = vsub.f32 %v2215, %v2412
        %v2414 = vand.u32 %v2413, 4294901760
        %v2415 = vsub.f32 %v2413, %v2414
        %v2416 = vand.u32 %v2415, 4294901760
        %2417 = vmatmul.mubr.f32.gmra.mrb[0].mxu0 %v2416
        %v2418 = vpop.f32.mrb[0].mxu0
        %v2419 = vadd.f32 0.0, %v2418
        %v2420 = vpop.f32.mrb[0].mxu0
        %2421 = vmatprep.mubr.f32.mxu0 0.0
        %v2422 = vand.u32 %v2218, 4294901760
        %v2423 = vsub.f32 %v2218, %v2422
        %v2424 = vand.u32 %v2423, 4294901760
        %v2425 = vsub.f32 %v2423, %v2424
        %v2426 = vand.u32 %v2425, 4294901760
        %2427 = vmatmul.mubr.f32.gmra.mrb[0].mxu0 %v2426
        %v2428 = vpop.f32.mrb[0].mxu0
        %v2429 = vadd.f32 0.0, %v2428
        %v2430 = vpop.f32.mrb[0].mxu0
        %2431 = vmatprep.mubr.f32.mxu0 0.0
        %v2432 = vand.u32 %v2221, 4294901760
        %v2433 = vsub.f32 %v2221, %v2432
        %v2434 = vand.u32 %v2433, 4294901760
        %v2435 = vsub.f32 %v2433, %v2434
        %v2436 = vand.u32 %v2435, 4294901760
        %2437 = vmatmul.mubr.f32.gmra.mrb[0].mxu0 %v2436
        %v2438 = vpop.f32.mrb[0].mxu0
        %v2439 = vadd.f32 0.0, %v2438
        %v2440 = vpop.f32.mrb[0].mxu0
        %2441 = vmatprep.mubr.f32.mxu0 0.0
        %v2442 = vand.u32 %v2224, 4294901760
        %v2443 = vsub.f32 %v2224, %v2442
        %v2444 = vand.u32 %v2443, 4294901760
        %v2445 = vsub.f32 %v2443, %v2444
        %v2446 = vand.u32 %v2445, 4294901760
        %2447 = vmatmul.mubr.f32.gmra.mrb[0].mxu0 %v2446
        %v2448 = vpop.f32.mrb[0].mxu0
        %v2449 = vadd.f32 0.0, %v2448
        %v2450 = vpop.f32.mrb[0].mxu0
        %2451 = vmatprep.mubr.f32.mxu0 0.0
        %v2452 = vand.u32 %v2227, 4294901760
        %v2453 = vsub.f32 %v2227, %v2452
        %v2454 = vand.u32 %v2453, 4294901760
        %v2455 = vsub.f32 %v2453, %v2454
        %v2456 = vand.u32 %v2455, 4294901760
        %2457 = vmatmul.mubr.f32.gmra.mrb[0].mxu0 %v2456
        %v2458 = vpop.f32.mrb[0].mxu0
        %v2459 = vadd.f32 0.0, %v2458
        %v2460 = vpop.f32.mrb[0].mxu0
        %2461 = vmatprep.mubr.f32.mxu0 0.0
        %v2462 = vand.u32 %v2230, 4294901760
        %v2463 = vsub.f32 %v2230, %v2462
        %v2464 = vand.u32 %v2463, 4294901760
        %v2465 = vsub.f32 %v2463, %v2464
        %v2466 = vand.u32 %v2465, 4294901760
        %2467 = vmatmul.mubr.f32.gmra.mrb[0].mxu0 %v2466
        %v2468 = vpop.f32.mrb[0].mxu0
        %v2469 = vadd.f32 0.0, %v2468
        %v2470 = vpop.f32.mrb[0].mxu0
        %2471 = vmatprep.mubr.f32.mxu0 0.0
        %v2472 = vand.u32 %v2233, 4294901760
        %v2473 = vsub.f32 %v2233, %v2472
        %v2474 = vand.u32 %v2473, 4294901760
        %v2475 = vsub.f32 %v2473, %v2474
        %v2476 = vand.u32 %v2475, 4294901760
        %2477 = vmatmul.mubr.f32.gmra.mrb[0].mxu0 %v2476
        %v2478 = vpop.f32.mrb[0].mxu0
        %v2479 = vadd.f32 0.0, %v2478
        %v2480 = vpop.f32.mrb[0].mxu0
        %2481 = vmatprep.mubr.f32.mxu0 0.0
        %v2482 = vand.u32 %v2236, 4294901760
        %v2483 = vsub.f32 %v2236, %v2482
        %v2484 = vand.u32 %v2483, 4294901760
        %v2485 = vsub.f32 %v2483, %v2484
        %v2486 = vand.u32 %v2485, 4294901760
        %2487 = vmatmul.mubr.f32.gmra.mrb[0].mxu0 %v2486
        %v2488 = vpop.f32.mrb[0].mxu0
        %v2489 = vadd.f32 0.0, %v2488
        %v2490 = vpop.f32.mrb[0].mxu0
        %2491 = vmatprep.mubr.f32.mxu0 0.0
        %v2492 = vand.u32 %v2239, 4294901760
        %v2493 = vsub.f32 %v2239, %v2492
        %v2494 = vand.u32 %v2493, 4294901760
        %v2495 = vsub.f32 %v2493, %v2494
        %v2496 = vand.u32 %v2495, 4294901760
        %2497 = vmatmul.mubr.f32.gmra.mrb[0].mxu0 %v2496
        %v2498 = vpop.f32.mrb[0].mxu0
        %v2499 = vadd.f32 0.0, %v2498
        %v2500 = vpop.f32.mrb[0].mxu0
        %2501 = vmatprep.mubr.f32.mxu0 0.0
        %v2502 = vand.u32 %v2242, 4294901760
        %v2503 = vsub.f32 %v2242, %v2502
        %v2504 = vand.u32 %v2503, 4294901760
        %v2505 = vsub.f32 %v2503, %v2504
        %v2506 = vand.u32 %v2505, 4294901760
        %2507 = vmatmul.mubr.f32.gmra.mrb[0].mxu0 %v2506
        %v2508 = vpop.f32.mrb[0].mxu0
        %v2509 = vadd.f32 0.0, %v2508
        %v2510 = vpop.f32.mrb[0].mxu0
        %2511 = vmatprep.mubr.f32.mxu0 0.0
        %v2512 = vand.u32 %v2245, 4294901760
        %v2513 = vsub.f32 %v2245, %v2512
        %v2514 = vand.u32 %v2513, 4294901760
        %v2515 = vsub.f32 %v2513, %v2514
        %v2516 = vand.u32 %v2515, 4294901760
        %2517 = vmatmul.mubr.f32.gmra.mrb[0].mxu0 %v2516
        %v2518 = vpop.f32.mrb[0].mxu0
        %v2519 = vadd.f32 0.0, %v2518
        %v2520 = vpop.f32.mrb[0].mxu0
        %2521 = vmatprep.mubr.f32.mxu0 0.0
        %v2522 = vand.u32 %v2248, 4294901760
        %v2523 = vsub.f32 %v2248, %v2522
        %v2524 = vand.u32 %v2523, 4294901760
        %v2525 = vsub.f32 %v2523, %v2524
        %v2526 = vand.u32 %v2525, 4294901760
        %2527 = vmatmul.mubr.f32.gmra.mrb[0].mxu0 %v2526
        %v2528 = vpop.f32.mrb[0].mxu0
        %v2529 = vadd.f32 0.0, %v2528
        %v2530 = vpop.f32.mrb[0].mxu0
        %2531 = vmatprep.mubr.f32.mxu0 0.0
        %v2532 = vand.u32 %v2251, 4294901760
        %v2533 = vsub.f32 %v2251, %v2532
        %v2534 = vand.u32 %v2533, 4294901760
        %v2535 = vsub.f32 %v2533, %v2534
        %v2536 = vand.u32 %v2535, 4294901760
        %2537 = vmatmul.mubr.f32.gmra.mrb[0].mxu0 %v2536
        %v2538 = vpop.f32.mrb[0].mxu0
        %v2539 = vadd.f32 0.0, %v2538
        %v2540 = vpop.f32.mrb[0].mxu0
        %2541 = vdwg.mxu0
        %2542 = vmatprep.subr.mxu0 0.0
        %v2543 = vand.u32 %v2254, 4294901760
        %v2544 = vsub.f32 %v2254, %v2543
        %v2545 = vand.u32 %v2544, 4294901760
        %v2546 = vsub.f32 %v2544, %v2545
        %v2547 = vand.u32 %v2546, 4294901760
        %2548 = vmatpush1.xpose.msra.mxu0 %v2547
        %2549 = vmatprep.subr.mxu0 0.0
        %v2550 = vand.u32 %v2257, 4294901760
        %v2551 = vsub.f32 %v2257, %v2550
        %v2552 = vand.u32 %v2551, 4294901760
        %v2553 = vsub.f32 %v2551, %v2552
        %v2554 = vand.u32 %v2553, 4294901760
        %2555 = vmatpush1.xpose.msra.mxu0 %v2554
        %2556 = vmatprep.subr.mxu0 0.0
        %v2557 = vand.u32 %v2260, 4294901760
        %v2558 = vsub.f32 %v2260, %v2557
        %v2559 = vand.u32 %v2558, 4294901760
        %v2560 = vsub.f32 %v2558, %v2559
        %v2561 = vand.u32 %v2560, 4294901760
        %2562 = vmatpush1.xpose.msra.mxu0 %v2561
        %2563 = vmatprep.subr.mxu0 0.0
        %v2564 = vand.u32 %v2263, 4294901760
        %v2565 = vsub.f32 %v2263, %v2564
        %v2566 = vand.u32 %v2565, 4294901760
        %v2567 = vsub.f32 %v2565, %v2566
        %v2568 = vand.u32 %v2567, 4294901760
        %2569 = vmatpush1.xpose.msra.mxu0 %v2568
        %2570 = vmatprep.subr.mxu0 0.0
        %v2571 = vand.u32 %v2266, 4294901760
        %v2572 = vsub.f32 %v2266, %v2571
        %v2573 = vand.u32 %v2572, 4294901760
        %v2574 = vsub.f32 %v2572, %v2573
        %v2575 = vand.u32 %v2574, 4294901760
        %2576 = vmatpush1.xpose.msra.mxu0 %v2575
        %2577 = vmatprep.subr.mxu0 0.0
        %v2578 = vand.u32 %v2269, 4294901760
        %v2579 = vsub.f32 %v2269, %v2578
        %v2580 = vand.u32 %v2579, 4294901760
        %v2581 = vsub.f32 %v2579, %v2580
        %v2582 = vand.u32 %v2581, 4294901760
        %2583 = vmatpush1.xpose.msra.mxu0 %v2582
        %2584 = vmatprep.subr.mxu0 0.0
        %v2585 = vand.u32 %v2272, 4294901760
        %v2586 = vsub.f32 %v2272, %v2585
        %v2587 = vand.u32 %v2586, 4294901760
        %v2588 = vsub.f32 %v2586, %v2587
        %v2589 = vand.u32 %v2588, 4294901760
        %2590 = vmatpush1.xpose.msra.mxu0 %v2589
        %2591 = vmatprep.subr.mxu0 0.0
        %v2592 = vand.u32 %v2275, 4294901760
        %v2593 = vsub.f32 %v2275, %v2592
        %v2594 = vand.u32 %v2593, 4294901760
        %v2595 = vsub.f32 %v2593, %v2594
        %v2596 = vand.u32 %v2595, 4294901760
        %2597 = vmatpush1.xpose.msra.mxu0 %v2596
        %2598 = vmatprep.subr.mxu0 0.0
        %v2599 = vand.u32 %v2278, 4294901760
        %v2600 = vsub.f32 %v2278, %v2599
        %v2601 = vand.u32 %v2600, 4294901760
        %v2602 = vsub.f32 %v2600, %v2601
        %v2603 = vand.u32 %v2602, 4294901760
        %2604 = vmatpush1.xpose.msra.mxu0 %v2603
        %2605 = vmatprep.subr.mxu0 0.0
        %v2606 = vand.u32 %v2281, 4294901760
        %v2607 = vsub.f32 %v2281, %v2606
        %v2608 = vand.u32 %v2607, 4294901760
        %v2609 = vsub.f32 %v2607, %v2608
        %v2610 = vand.u32 %v2609, 4294901760
        %2611 = vmatpush1.xpose.msra.mxu0 %v2610
        %2612 = vmatprep.subr.mxu0 0.0
        %v2613 = vand.u32 %v2284, 4294901760
        %v2614 = vsub.f32 %v2284, %v2613
        %v2615 = vand.u32 %v2614, 4294901760
        %v2616 = vsub.f32 %v2614, %v2615
        %v2617 = vand.u32 %v2616, 4294901760
        %2618 = vmatpush1.xpose.msra.mxu0 %v2617
        %2619 = vmatprep.subr.mxu0 0.0
        %v2620 = vand.u32 %v2287, 4294901760
        %v2621 = vsub.f32 %v2287, %v2620
        %v2622 = vand.u32 %v2621, 4294901760
        %v2623 = vsub.f32 %v2621, %v2622
        %v2624 = vand.u32 %v2623, 4294901760
        %2625 = vmatpush1.xpose.msra.mxu0 %v2624
        %2626 = vmatprep.subr.mxu0 0.0
        %v2627 = vand.u32 %v2290, 4294901760
        %v2628 = vsub.f32 %v2290, %v2627
        %v2629 = vand.u32 %v2628, 4294901760
        %v2630 = vsub.f32 %v2628, %v2629
        %v2631 = vand.u32 %v2630, 4294901760
        %2632 = vmatpush1.xpose.msra.mxu0 %v2631
        %2633 = vmatprep.subr.mxu0 0.0
        %v2634 = vand.u32 %v2293, 4294901760
        %v2635 = vsub.f32 %v2293, %v2634
        %v2636 = vand.u32 %v2635, 4294901760
        %v2637 = vsub.f32 %v2635, %v2636
        %v2638 = vand.u32 %v2637, 4294901760
        %2639 = vmatpush1.xpose.msra.mxu0 %v2638
        %2640 = vmatprep.subr.mxu0 0.0
        %v2641 = vand.u32 %v2296, 4294901760
        %v2642 = vsub.f32 %v2296, %v2641
        %v2643 = vand.u32 %v2642, 4294901760
        %v2644 = vsub.f32 %v2642, %v2643
        %v2645 = vand.u32 %v2644, 4294901760
        %2646 = vmatpush1.xpose.msra.mxu0 %v2645
        %2647 = vmatprep.subr.mxu0 0.0
        %v2648 = vand.u32 %v2299, 4294901760
        %v2649 = vsub.f32 %v2299, %v2648
        %v2650 = vand.u32 %v2649, 4294901760
        %v2651 = vsub.f32 %v2649, %v2650
        %v2652 = vand.u32 %v2651, 4294901760
        %2653 = vmatpush1.xpose.msra.mxu0 %v2652
        %2654 = vmatprep.subr.mxu0 0.0
        %2655 = vmatpush1.xpose.msra.mxu0 0.0
        %2656 = vmatprep.subr.mxu0 0.0
        %2657 = vmatpush1.xpose.msra.mxu0 0.0
        %2658 = vmatprep.subr.mxu0 0.0
        %2659 = vmatpush1.xpose.msra.mxu0 0.0
        %2660 = vmatprep.subr.mxu0 0.0
        %2661 = vmatpush1.xpose.msra.mxu0 0.0
        %2662 = vmatprep.subr.mxu0 0.0
        %2663 = vmatpush1.xpose.msra.mxu0 0.0
        %2664 = vmatprep.subr.mxu0 0.0
        %2665 = vmatpush1.xpose.msra.mxu0 0.0
        %2666 = vmatprep.subr.mxu0 0.0
        %2667 = vmatpush1.xpose.msra.mxu0 0.0
        %2668 = vmatprep.subr.mxu0 0.0
        %2669 = vmatpush1.xpose.msra.mxu0 0.0
        %2670 = vmatprep.subr.mxu0 0.0
        %2671 = vmatpush1.xpose.msra.mxu0 0.0
        %2672 = vmatprep.subr.mxu0 0.0
        %2673 = vmatpush1.xpose.msra.mxu0 0.0
        %2674 = vmatprep.subr.mxu0 0.0
        %2675 = vmatpush1.xpose.msra.mxu0 0.0
        %2676 = vmatprep.subr.mxu0 0.0
        %2677 = vmatpush1.xpose.msra.mxu0 0.0
        %2678 = vmatprep.subr.mxu0 0.0
        %2679 = vmatpush1.xpose.msra.mxu0 0.0
        %2680 = vmatprep.subr.mxu0 0.0
        %2681 = vmatpush1.xpose.msra.mxu0 0.0
        %2682 = vmatprep.subr.mxu0 0.0
        %2683 = vmatpush1.xpose.msra.mxu0 0.0
        %2684 = vmatprep.subr.mxu0 0.0
        %2685 = vmatpush1.xpose.msra.mxu0 0.0
        %2686 = vmatprep.mubr.f32.mxu0 0.0
        %v2687 = vand.u32 %v2206, 4294901760
        %2688 = vmatmul.mubr.f32.gmra.mrb[0].mxu0 %v2687
        %v2689 = vpop.f32.mrb[0].mxu0
        %v2690 = vadd.f32 %v2389, %v2689
        %v2691 = vpop.f32.mrb[0].mxu0
        %2692 = vmatprep.mubr.f32.mxu0 0.0
        %v2693 = vand.u32 %v2209, 4294901760
        %2694 = vmatmul.mubr.f32.gmra.mrb[0].mxu0 %v2693
        %v2695 = vpop.f32.mrb[0].mxu0
        %v2696 = vadd.f32 %v2399, %v2695
        %v2697 = vpop.f32.mrb[0].mxu0
        %2698 = vmatprep.mubr.f32.mxu0 0.0
        %v2699 = vand.u32 %v2212, 4294901760
        %2700 = vmatmul.mubr.f32.gmra.mrb[0].mxu0 %v2699
        %v2701 = vpop.f32.mrb[0].mxu0
        %v2702 = vadd.f32 %v2409, %v2701
        %v2703 = vpop.f32.mrb[0].mxu0
        %2704 = vmatprep.mubr.f32.mxu0 0.0
        %v2705 = vand.u32 %v2215, 4294901760
        %2706 = vmatmul.mubr.f32.gmra.mrb[0].mxu0 %v2705
        %v2707 = vpop.f32.mrb[0].mxu0
        %v2708 = vadd.f32 %v2419, %v2707
        %v2709 = vpop.f32.mrb[0].mxu0
        %2710 = vmatprep.mubr.f32.mxu0 0.0
        %v2711 = vand.u32 %v2218, 4294901760
        %2712 = vmatmul.mubr.f32.gmra.mrb[0].mxu0 %v2711
        %v2713 = vpop.f32.mrb[0].mxu0
        %v2714 = vadd.f32 %v2429, %v2713
        %v2715 = vpop.f32.mrb[0].mxu0
        %2716 = vmatprep.mubr.f32.mxu0 0.0
        %v2717 = vand.u32 %v2221, 4294901760
        %2718 = vmatmul.mubr.f32.gmra.mrb[0].mxu0 %v2717
        %v2719 = vpop.f32.mrb[0].mxu0
        %v2720 = vadd.f32 %v2439, %v2719
        %v2721 = vpop.f32.mrb[0].mxu0
        %2722 = vmatprep.mubr.f32.mxu0 0.0
        %v2723 = vand.u32 %v2224, 4294901760
        %2724 = vmatmul.mubr.f32.gmra.mrb[0].mxu0 %v2723
        %v2725 = vpop.f32.mrb[0].mxu0
        %v2726 = vadd.f32 %v2449, %v2725
        %v2727 = vpop.f32.mrb[0].mxu0
        %2728 = vmatprep.mubr.f32.mxu0 0.0
        %v2729 = vand.u32 %v2227, 4294901760
        %2730 = vmatmul.mubr.f32.gmra.mrb[0].mxu0 %v2729
        %v2731 = vpop.f32.mrb[0].mxu0
        %v2732 = vadd.f32 %v2459, %v2731
        %v2733 = vpop.f32.mrb[0].mxu0
        %2734 = vmatprep.mubr.f32.mxu0 0.0
        %v2735 = vand.u32 %v2230, 4294901760
        %2736 = vmatmul.mubr.f32.gmra.mrb[0].mxu0 %v2735
        %v2737 = vpop.f32.mrb[0].mxu0
        %v2738 = vadd.f32 %v2469, %v2737
        %v2739 = vpop.f32.mrb[0].mxu0
        %2740 = vmatprep.mubr.f32.mxu0 0.0
        %v2741 = vand.u32 %v2233, 4294901760
        %2742 = vmatmul.mubr.f32.gmra.mrb[0].mxu0 %v2741
        %v2743 = vpop.f32.mrb[0].mxu0
        %v2744 = vadd.f32 %v2479, %v2743
        %v2745 = vpop.f32.mrb[0].mxu0
        %2746 = vmatprep.mubr.f32.mxu0 0.0
        %v2747 = vand.u32 %v2236, 4294901760
        %2748 = vmatmul.mubr.f32.gmra.mrb[0].mxu0 %v2747
        %v2749 = vpop.f32.mrb[0].mxu0
        %v2750 = vadd.f32 %v2489, %v2749
        %v2751 = vpop.f32.mrb[0].mxu0
        %2752 = vmatprep.mubr.f32.mxu0 0.0
        %v2753 = vand.u32 %v2239, 4294901760
        %2754 = vmatmul.mubr.f32.gmra.mrb[0].mxu0 %v2753
        %v2755 = vpop.f32.mrb[0].mxu0
        %v2756 = vadd.f32 %v2499, %v2755
        %v2757 = vpop.f32.mrb[0].mxu0
        %2758 = vmatprep.mubr.f32.mxu0 0.0
        %v2759 = vand.u32 %v2242, 4294901760
        %2760 = vmatmul.mubr.f32.gmra.mrb[0].mxu0 %v2759
        %v2761 = vpop.f32.mrb[0].mxu0
        %v2762 = vadd.f32 %v2509, %v2761
        %v2763 = vpop.f32.mrb[0].mxu0
        %2764 = vmatprep.mubr.f32.mxu0 0.0
        %v2765 = vand.u32 %v2245, 4294901760
        %2766 = vmatmul.mubr.f32.gmra.mrb[0].mxu0 %v2765
        %v2767 = vpop.f32.mrb[0].mxu0
        %v2768 = vadd.f32 %v2519, %v2767
        %v2769 = vpop.f32.mrb[0].mxu0
        %2770 = vmatprep.mubr.f32.mxu0 0.0
        %v2771 = vand.u32 %v2248, 4294901760
        %2772 = vmatmul.mubr.f32.gmra.mrb[0].mxu0 %v2771
        %v2773 = vpop.f32.mrb[0].mxu0
        %v2774 = vadd.f32 %v2529, %v2773
        %v2775 = vpop.f32.mrb[0].mxu0
        %2776 = vmatprep.mubr.f32.mxu0 0.0
        %v2777 = vand.u32 %v2251, 4294901760
        %2778 = vmatmul.mubr.f32.gmra.mrb[0].mxu0 %v2777
        %v2779 = vpop.f32.mrb[0].mxu0
        %v2780 = vadd.f32 %v2539, %v2779
        %v2781 = vpop.f32.mrb[0].mxu0
        %2782 = vdwg.mxu0
        %2783 = vmatprep.subr.mxu0 0.0
        %v2784 = vand.u32 %v2254, 4294901760
        %v2785 = vsub.f32 %v2254, %v2784
        %2786 = vmatpush1.xpose.msra.mxu0 %v2785
        %2787 = vmatprep.subr.mxu0 0.0
        %v2788 = vand.u32 %v2257, 4294901760
        %v2789 = vsub.f32 %v2257, %v2788
        %2790 = vmatpush1.xpose.msra.mxu0 %v2789
        %2791 = vmatprep.subr.mxu0 0.0
        %v2792 = vand.u32 %v2260, 4294901760
        %v2793 = vsub.f32 %v2260, %v2792
        %2794 = vmatpush1.xpose.msra.mxu0 %v2793
        %2795 = vmatprep.subr.mxu0 0.0
        %v2796 = vand.u32 %v2263, 4294901760
        %v2797 = vsub.f32 %v2263, %v2796
        %2798 = vmatpush1.xpose.msra.mxu0 %v2797
        %2799 = vmatprep.subr.mxu0 0.0
        %v2800 = vand.u32 %v2266, 4294901760
        %v2801 = vsub.f32 %v2266, %v2800
        %2802 = vmatpush1.xpose.msra.mxu0 %v2801
        %2803 = vmatprep.subr.mxu0 0.0
        %v2804 = vand.u32 %v2269, 4294901760
        %v2805 = vsub.f32 %v2269, %v2804
        %2806 = vmatpush1.xpose.msra.mxu0 %v2805
        %2807 = vmatprep.subr.mxu0 0.0
        %v2808 = vand.u32 %v2272, 4294901760
        %v2809 = vsub.f32 %v2272, %v2808
        %2810 = vmatpush1.xpose.msra.mxu0 %v2809
        %2811 = vmatprep.subr.mxu0 0.0
        %v2812 = vand.u32 %v2275, 4294901760
        %v2813 = vsub.f32 %v2275, %v2812
        %2814 = vmatpush1.xpose.msra.mxu0 %v2813
        %2815 = vmatprep.subr.mxu0 0.0
        %v2816 = vand.u32 %v2278, 4294901760
        %v2817 = vsub.f32 %v2278, %v2816
        %2818 = vmatpush1.xpose.msra.mxu0 %v2817
        %2819 = vmatprep.subr.mxu0 0.0
        %v2820 = vand.u32 %v2281, 4294901760
        %v2821 = vsub.f32 %v2281, %v2820
        %2822 = vmatpush1.xpose.msra.mxu0 %v2821
        %2823 = vmatprep.subr.mxu0 0.0
        %v2824 = vand.u32 %v2284, 4294901760
        %v2825 = vsub.f32 %v2284, %v2824
        %2826 = vmatpush1.xpose.msra.mxu0 %v2825
        %2827 = vmatprep.subr.mxu0 0.0
        %v2828 = vand.u32 %v2287, 4294901760
        %v2829 = vsub.f32 %v2287, %v2828
        %2830 = vmatpush1.xpose.msra.mxu0 %v2829
        %2831 = vmatprep.subr.mxu0 0.0
        %v2832 = vand.u32 %v2290, 4294901760
        %v2833 = vsub.f32 %v2290, %v2832
        %2834 = vmatpush1.xpose.msra.mxu0 %v2833
        %2835 = vmatprep.subr.mxu0 0.0
        %v2836 = vand.u32 %v2293, 4294901760
        %v2837 = vsub.f32 %v2293, %v2836
        %2838 = vmatpush1.xpose.msra.mxu0 %v2837
        %2839 = vmatprep.subr.mxu0 0.0
        %v2840 = vand.u32 %v2296, 4294901760
        %v2841 = vsub.f32 %v2296, %v2840
        %2842 = vmatpush1.xpose.msra.mxu0 %v2841
        %2843 = vmatprep.subr.mxu0 0.0
        %v2844 = vand.u32 %v2299, 4294901760
        %v2845 = vsub.f32 %v2299, %v2844
        %2846 = vmatpush1.xpose.msra.mxu0 %v2845
        %2847 = vmatprep.subr.mxu0 0.0
        %2848 = vmatpush1.xpose.msra.mxu0 0.0
        %2849 = vmatprep.subr.mxu0 0.0
        %2850 = vmatpush1.xpose.msra.mxu0 0.0
        %2851 = vmatprep.subr.mxu0 0.0
        %2852 = vmatpush1.xpose.msra.mxu0 0.0
        %2853 = vmatprep.subr.mxu0 0.0
        %2854 = vmatpush1.xpose.msra.mxu0 0.0
        %2855 = vmatprep.subr.mxu0 0.0
        %2856 = vmatpush1.xpose.msra.mxu0 0.0
        %2857 = vmatprep.subr.mxu0 0.0
        %2858 = vmatpush1.xpose.msra.mxu0 0.0
        %2859 = vmatprep.subr.mxu0 0.0
        %2860 = vmatpush1.xpose.msra.mxu0 0.0
        %2861 = vmatprep.subr.mxu0 0.0
        %2862 = vmatpush1.xpose.msra.mxu0 0.0
        %2863 = vmatprep.subr.mxu0 0.0
        %2864 = vmatpush1.xpose.msra.mxu0 0.0
        %2865 = vmatprep.subr.mxu0 0.0
        %2866 = vmatpush1.xpose.msra.mxu0 0.0
        %2867 = vmatprep.subr.mxu0 0.0
        %2868 = vmatpush1.xpose.msra.mxu0 0.0
        %2869 = vmatprep.subr.mxu0 0.0
        %2870 = vmatpush1.xpose.msra.mxu0 0.0
        %2871 = vmatprep.subr.mxu0 0.0
        %2872 = vmatpush1.xpose.msra.mxu0 0.0
        %2873 = vmatprep.subr.mxu0 0.0
        %2874 = vmatpush1.xpose.msra.mxu0 0.0
        %2875 = vmatprep.subr.mxu0 0.0
        %2876 = vmatpush1.xpose.msra.mxu0 0.0
        %2877 = vmatprep.subr.mxu0 0.0
        %2878 = vmatpush1.xpose.msra.mxu0 0.0
        %2879 = vmatprep.mubr.f32.mxu0 0.0
        %v2880 = vand.u32 %v2206, 4294901760
        %v2881 = vsub.f32 %v2206, %v2880
        %2882 = vmatmul.mubr.f32.gmra.mrb[0].mxu0 %v2881
        %v2883 = vpop.f32.mrb[0].mxu0
        %v2884 = vadd.f32 %v2690, %v2883
        %v2885 = vpop.f32.mrb[0].mxu0
        %2886 = vmatprep.mubr.f32.mxu0 0.0
        %v2887 = vand.u32 %v2209, 4294901760
        %v2888 = vsub.f32 %v2209, %v2887
        %2889 = vmatmul.mubr.f32.gmra.mrb[0].mxu0 %v2888
        %v2890 = vpop.f32.mrb[0].mxu0
        %v2891 = vadd.f32 %v2696, %v2890
        %v2892 = vpop.f32.mrb[0].mxu0
        %2893 = vmatprep.mubr.f32.mxu0 0.0
        %v2894 = vand.u32 %v2212, 4294901760
        %v2895 = vsub.f32 %v2212, %v2894
        %2896 = vmatmul.mubr.f32.gmra.mrb[0].mxu0 %v2895
        %v2897 = vpop.f32.mrb[0].mxu0
        %v2898 = vadd.f32 %v2702, %v2897
        %v2899 = vpop.f32.mrb[0].mxu0
        %2900 = vmatprep.mubr.f32.mxu0 0.0
        %v2901 = vand.u32 %v2215, 4294901760
        %v2902 = vsub.f32 %v2215, %v2901
        %2903 = vmatmul.mubr.f32.gmra.mrb[0].mxu0 %v2902
        %v2904 = vpop.f32.mrb[0].mxu0
        %v2905 = vadd.f32 %v2708, %v2904
        %v2906 = vpop.f32.mrb[0].mxu0
        %2907 = vmatprep.mubr.f32.mxu0 0.0
        %v2908 = vand.u32 %v2218, 4294901760
        %v2909 = vsub.f32 %v2218, %v2908
        %2910 = vmatmul.mubr.f32.gmra.mrb[0].mxu0 %v2909
        %v2911 = vpop.f32.mrb[0].mxu0
        %v2912 = vadd.f32 %v2714, %v2911
        %v2913 = vpop.f32.mrb[0].mxu0
        %2914 = vmatprep.mubr.f32.mxu0 0.0
        %v2915 = vand.u32 %v2221, 4294901760
        %v2916 = vsub.f32 %v2221, %v2915
        %2917 = vmatmul.mubr.f32.gmra.mrb[0].mxu0 %v2916
        %v2918 = vpop.f32.mrb[0].mxu0
        %v2919 = vadd.f32 %v2720, %v2918
        %v2920 = vpop.f32.mrb[0].mxu0
        %2921 = vmatprep.mubr.f32.mxu0 0.0
        %v2922 = vand.u32 %v2224, 4294901760
        %v2923 = vsub.f32 %v2224, %v2922
        %2924 = vmatmul.mubr.f32.gmra.mrb[0].mxu0 %v2923
        %v2925 = vpop.f32.mrb[0].mxu0
        %v2926 = vadd.f32 %v2726, %v2925
        %v2927 = vpop.f32.mrb[0].mxu0
        %2928 = vmatprep.mubr.f32.mxu0 0.0
        %v2929 = vand.u32 %v2227, 4294901760
        %v2930 = vsub.f32 %v2227, %v2929
        %2931 = vmatmul.mubr.f32.gmra.mrb[0].mxu0 %v2930
        %v2932 = vpop.f32.mrb[0].mxu0
        %v2933 = vadd.f32 %v2732, %v2932
        %v2934 = vpop.f32.mrb[0].mxu0
        %2935 = vmatprep.mubr.f32.mxu0 0.0
        %v2936 = vand.u32 %v2230, 4294901760
        %v2937 = vsub.f32 %v2230, %v2936
        %2938 = vmatmul.mubr.f32.gmra.mrb[0].mxu0 %v2937
        %v2939 = vpop.f32.mrb[0].mxu0
        %v2940 = vadd.f32 %v2738, %v2939
        %v2941 = vpop.f32.mrb[0].mxu0
        %2942 = vmatprep.mubr.f32.mxu0 0.0
        %v2943 = vand.u32 %v2233, 4294901760
        %v2944 = vsub.f32 %v2233, %v2943
        %2945 = vmatmul.mubr.f32.gmra.mrb[0].mxu0 %v2944
        %v2946 = vpop.f32.mrb[0].mxu0
        %v2947 = vadd.f32 %v2744, %v2946
        %v2948 = vpop.f32.mrb[0].mxu0
        %2949 = vmatprep.mubr.f32.mxu0 0.0
        %v2950 = vand.u32 %v2236, 4294901760
        %v2951 = vsub.f32 %v2236, %v2950
        %2952 = vmatmul.mubr.f32.gmra.mrb[0].mxu0 %v2951
        %v2953 = vpop.f32.mrb[0].mxu0
        %v2954 = vadd.f32 %v2750, %v2953
        %v2955 = vpop.f32.mrb[0].mxu0
        %2956 = vmatprep.mubr.f32.mxu0 0.0
        %v2957 = vand.u32 %v2239, 4294901760
        %v2958 = vsub.f32 %v2239, %v2957
        %2959 = vmatmul.mubr.f32.gmra.mrb[0].mxu0 %v2958
        %v2960 = vpop.f32.mrb[0].mxu0
        %v2961 = vadd.f32 %v2756, %v2960
        %v2962 = vpop.f32.mrb[0].mxu0
        %2963 = vmatprep.mubr.f32.mxu0 0.0
        %v2964 = vand.u32 %v2242, 4294901760
        %v2965 = vsub.f32 %v2242, %v2964
        %2966 = vmatmul.mubr.f32.gmra.mrb[0].mxu0 %v2965
        %v2967 = vpop.f32.mrb[0].mxu0
        %v2968 = vadd.f32 %v2762, %v2967
        %v2969 = vpop.f32.mrb[0].mxu0
        %2970 = vmatprep.mubr.f32.mxu0 0.0
        %v2971 = vand.u32 %v2245, 4294901760
        %v2972 = vsub.f32 %v2245, %v2971
        %2973 = vmatmul.mubr.f32.gmra.mrb[0].mxu0 %v2972
        %v2974 = vpop.f32.mrb[0].mxu0
        %v2975 = vadd.f32 %v2768, %v2974
        %v2976 = vpop.f32.mrb[0].mxu0
        %2977 = vmatprep.mubr.f32.mxu0 0.0
        %v2978 = vand.u32 %v2248, 4294901760
        %v2979 = vsub.f32 %v2248, %v2978
        %2980 = vmatmul.mubr.f32.gmra.mrb[0].mxu0 %v2979
        %v2981 = vpop.f32.mrb[0].mxu0
        %v2982 = vadd.f32 %v2774, %v2981
        %v2983 = vpop.f32.mrb[0].mxu0
        %2984 = vmatprep.mubr.f32.mxu0 0.0
        %v2985 = vand.u32 %v2251, 4294901760
        %v2986 = vsub.f32 %v2251, %v2985
        %2987 = vmatmul.mubr.f32.gmra.mrb[0].mxu0 %v2986
        %v2988 = vpop.f32.mrb[0].mxu0
        %v2989 = vadd.f32 %v2780, %v2988
        %v2990 = vpop.f32.mrb[0].mxu0
        %2991 = vdwg.mxu0
        %2992 = vmatprep.subr.mxu0 0.0
        %v2993 = vand.u32 %v2254, 4294901760
        %2994 = vmatpush1.xpose.msra.mxu0 %v2993
        %2995 = vmatprep.subr.mxu0 0.0
        %v2996 = vand.u32 %v2257, 4294901760
        %2997 = vmatpush1.xpose.msra.mxu0 %v2996
        %2998 = vmatprep.subr.mxu0 0.0
        %v2999 = vand.u32 %v2260, 4294901760
        %3000 = vmatpush1.xpose.msra.mxu0 %v2999
        %3001 = vmatprep.subr.mxu0 0.0
        %v3002 = vand.u32 %v2263, 4294901760
        %3003 = vmatpush1.xpose.msra.mxu0 %v3002
        %3004 = vmatprep.subr.mxu0 0.0
        %v3005 = vand.u32 %v2266, 4294901760
        %3006 = vmatpush1.xpose.msra.mxu0 %v3005
        %3007 = vmatprep.subr.mxu0 0.0
        %v3008 = vand.u32 %v2269, 4294901760
        %3009 = vmatpush1.xpose.msra.mxu0 %v3008
        %3010 = vmatprep.subr.mxu0 0.0
        %v3011 = vand.u32 %v2272, 4294901760
        %3012 = vmatpush1.xpose.msra.mxu0 %v3011
        %3013 = vmatprep.subr.mxu0 0.0
        %v3014 = vand.u32 %v2275, 4294901760
        %3015 = vmatpush1.xpose.msra.mxu0 %v3014
        %3016 = vmatprep.subr.mxu0 0.0
        %v3017 = vand.u32 %v2278, 4294901760
        %3018 = vmatpush1.xpose.msra.mxu0 %v3017
        %3019 = vmatprep.subr.mxu0 0.0
        %v3020 = vand.u32 %v2281, 4294901760
        %3021 = vmatpush1.xpose.msra.mxu0 %v3020
        %3022 = vmatprep.subr.mxu0 0.0
        %v3023 = vand.u32 %v2284, 4294901760
        %3024 = vmatpush1.xpose.msra.mxu0 %v3023
        %3025 = vmatprep.subr.mxu0 0.0
        %v3026 = vand.u32 %v2287, 4294901760
        %3027 = vmatpush1.xpose.msra.mxu0 %v3026
        %3028 = vmatprep.subr.mxu0 0.0
        %v3029 = vand.u32 %v2290, 4294901760
        %3030 = vmatpush1.xpose.msra.mxu0 %v3029
        %3031 = vmatprep.subr.mxu0 0.0
        %v3032 = vand.u32 %v2293, 4294901760
        %3033 = vmatpush1.xpose.msra.mxu0 %v3032
        %3034 = vmatprep.subr.mxu0 0.0
        %v3035 = vand.u32 %v2296, 4294901760
        %3036 = vmatpush1.xpose.msra.mxu0 %v3035
        %3037 = vmatprep.subr.mxu0 0.0
        %v3038 = vand.u32 %v2299, 4294901760
        %3039 = vmatpush1.xpose.msra.mxu0 %v3038
        %3040 = vmatprep.subr.mxu0 0.0
        %3041 = vmatpush1.xpose.msra.mxu0 0.0
        %3042 = vmatprep.subr.mxu0 0.0
        %3043 = vmatpush1.xpose.msra.mxu0 0.0
        %3044 = vmatprep.subr.mxu0 0.0
        %3045 = vmatpush1.xpose.msra.mxu0 0.0
        %3046 = vmatprep.subr.mxu0 0.0
        %3047 = vmatpush1.xpose.msra.mxu0 0.0
        %3048 = vmatprep.subr.mxu0 0.0
        %3049 = vmatpush1.xpose.msra.mxu0 0.0
        %3050 = vmatprep.subr.mxu0 0.0
        %3051 = vmatpush1.xpose.msra.mxu0 0.0
        %3052 = vmatprep.subr.mxu0 0.0
        %3053 = vmatpush1.xpose.msra.mxu0 0.0
        %3054 = vmatprep.subr.mxu0 0.0
        %3055 = vmatpush1.xpose.msra.mxu0 0.0
        %3056 = vmatprep.subr.mxu0 0.0
        %3057 = vmatpush1.xpose.msra.mxu0 0.0
        %3058 = vmatprep.subr.mxu0 0.0
        %3059 = vmatpush1.xpose.msra.mxu0 0.0
        %3060 = vmatprep.subr.mxu0 0.0
        %3061 = vmatpush1.xpose.msra.mxu0 0.0
        %3062 = vmatprep.subr.mxu0 0.0
        %3063 = vmatpush1.xpose.msra.mxu0 0.0
        %3064 = vmatprep.subr.mxu0 0.0
        %3065 = vmatpush1.xpose.msra.mxu0 0.0
        %3066 = vmatprep.subr.mxu0 0.0
        %3067 = vmatpush1.xpose.msra.mxu0 0.0
        %3068 = vmatprep.subr.mxu0 0.0
        %3069 = vmatpush1.xpose.msra.mxu0 0.0
        %3070 = vmatprep.subr.mxu0 0.0
        %3071 = vmatpush1.xpose.msra.mxu0 0.0
        %3072 = vmatprep.mubr.f32.mxu0 0.0
        %v3073 = vand.u32 %v2206, 4294901760
        %v3074 = vsub.f32 %v2206, %v3073
        %v3075 = vand.u32 %v3074, 4294901760
        %3076 = vmatmul.mubr.f32.gmra.mrb[0].mxu0 %v3075
        %v3077 = vpop.f32.mrb[0].mxu0
        %v3078 = vadd.f32 %v2884, %v3077
        %v3079 = vpop.f32.mrb[0].mxu0
        %3080 = vmatprep.mubr.f32.mxu0 0.0
        %v3081 = vand.u32 %v2209, 4294901760
        %v3082 = vsub.f32 %v2209, %v3081
        %v3083 = vand.u32 %v3082, 4294901760
        %3084 = vmatmul.mubr.f32.gmra.mrb[0].mxu0 %v3083
        %v3085 = vpop.f32.mrb[0].mxu0
        %v3086 = vadd.f32 %v2891, %v3085
        %v3087 = vpop.f32.mrb[0].mxu0
        %3088 = vmatprep.mubr.f32.mxu0 0.0
        %v3089 = vand.u32 %v2212, 4294901760
        %v3090 = vsub.f32 %v2212, %v3089
        %v3091 = vand.u32 %v3090, 4294901760
        %3092 = vmatmul.mubr.f32.gmra.mrb[0].mxu0 %v3091
        %v3093 = vpop.f32.mrb[0].mxu0
        %v3094 = vadd.f32 %v2898, %v3093
        %v3095 = vpop.f32.mrb[0].mxu0
        %3096 = vmatprep.mubr.f32.mxu0 0.0
        %v3097 = vand.u32 %v2215, 4294901760
        %v3098 = vsub.f32 %v2215, %v3097
        %v3099 = vand.u32 %v3098, 4294901760
        %3100 = vmatmul.mubr.f32.gmra.mrb[0].mxu0 %v3099
        %v3101 = vpop.f32.mrb[0].mxu0
        %v3102 = vadd.f32 %v2905, %v3101
        %v3103 = vpop.f32.mrb[0].mxu0
        %3104 = vmatprep.mubr.f32.mxu0 0.0
        %v3105 = vand.u32 %v2218, 4294901760
        %v3106 = vsub.f32 %v2218, %v3105
        %v3107 = vand.u32 %v3106, 4294901760
        %3108 = vmatmul.mubr.f32.gmra.mrb[0].mxu0 %v3107
        %v3109 = vpop.f32.mrb[0].mxu0
        %v3110 = vadd.f32 %v2912, %v3109
        %v3111 = vpop.f32.mrb[0].mxu0
        %3112 = vmatprep.mubr.f32.mxu0 0.0
        %v3113 = vand.u32 %v2221, 4294901760
        %v3114 = vsub.f32 %v2221, %v3113
        %v3115 = vand.u32 %v3114, 4294901760
        %3116 = vmatmul.mubr.f32.gmra.mrb[0].mxu0 %v3115
        %v3117 = vpop.f32.mrb[0].mxu0
        %v3118 = vadd.f32 %v2919, %v3117
        %v3119 = vpop.f32.mrb[0].mxu0
        %3120 = vmatprep.mubr.f32.mxu0 0.0
        %v3121 = vand.u32 %v2224, 4294901760
        %v3122 = vsub.f32 %v2224, %v3121
        %v3123 = vand.u32 %v3122, 4294901760
        %3124 = vmatmul.mubr.f32.gmra.mrb[0].mxu0 %v3123
        %v3125 = vpop.f32.mrb[0].mxu0
        %v3126 = vadd.f32 %v2926, %v3125
        %v3127 = vpop.f32.mrb[0].mxu0
        %3128 = vmatprep.mubr.f32.mxu0 0.0
        %v3129 = vand.u32 %v2227, 4294901760
        %v3130 = vsub.f32 %v2227, %v3129
        %v3131 = vand.u32 %v3130, 4294901760
        %3132 = vmatmul.mubr.f32.gmra.mrb[0].mxu0 %v3131
        %v3133 = vpop.f32.mrb[0].mxu0
        %v3134 = vadd.f32 %v2933, %v3133
        %v3135 = vpop.f32.mrb[0].mxu0
        %3136 = vmatprep.mubr.f32.mxu0 0.0
        %v3137 = vand.u32 %v2230, 4294901760
        %v3138 = vsub.f32 %v2230, %v3137
        %v3139 = vand.u32 %v3138, 4294901760
        %3140 = vmatmul.mubr.f32.gmra.mrb[0].mxu0 %v3139
        %v3141 = vpop.f32.mrb[0].mxu0
        %v3142 = vadd.f32 %v2940, %v3141
        %v3143 = vpop.f32.mrb[0].mxu0
        %3144 = vmatprep.mubr.f32.mxu0 0.0
        %v3145 = vand.u32 %v2233, 4294901760
        %v3146 = vsub.f32 %v2233, %v3145
        %v3147 = vand.u32 %v3146, 4294901760
        %3148 = vmatmul.mubr.f32.gmra.mrb[0].mxu0 %v3147
        %v3149 = vpop.f32.mrb[0].mxu0
        %v3150 = vadd.f32 %v2947, %v3149
        %v3151 = vpop.f32.mrb[0].mxu0
        %3152 = vmatprep.mubr.f32.mxu0 0.0
        %v3153 = vand.u32 %v2236, 4294901760
        %v3154 = vsub.f32 %v2236, %v3153
        %v3155 = vand.u32 %v3154, 4294901760
        %3156 = vmatmul.mubr.f32.gmra.mrb[0].mxu0 %v3155
        %v3157 = vpop.f32.mrb[0].mxu0
        %v3158 = vadd.f32 %v2954, %v3157
        %v3159 = vpop.f32.mrb[0].mxu0
        %3160 = vmatprep.mubr.f32.mxu0 0.0
        %v3161 = vand.u32 %v2239, 4294901760
        %v3162 = vsub.f32 %v2239, %v3161
        %v3163 = vand.u32 %v3162, 4294901760
        %3164 = vmatmul.mubr.f32.gmra.mrb[0].mxu0 %v3163
        %v3165 = vpop.f32.mrb[0].mxu0
        %v3166 = vadd.f32 %v2961, %v3165
        %v3167 = vpop.f32.mrb[0].mxu0
        %3168 = vmatprep.mubr.f32.mxu0 0.0
        %v3169 = vand.u32 %v2242, 4294901760
        %v3170 = vsub.f32 %v2242, %v3169
        %v3171 = vand.u32 %v3170, 4294901760
        %3172 = vmatmul.mubr.f32.gmra.mrb[0].mxu0 %v3171
        %v3173 = vpop.f32.mrb[0].mxu0
        %v3174 = vadd.f32 %v2968, %v3173
        %v3175 = vpop.f32.mrb[0].mxu0
        %3176 = vmatprep.mubr.f32.mxu0 0.0
        %v3177 = vand.u32 %v2245, 4294901760
        %v3178 = vsub.f32 %v2245, %v3177
        %v3179 = vand.u32 %v3178, 4294901760
        %3180 = vmatmul.mubr.f32.gmra.mrb[0].mxu0 %v3179
        %v3181 = vpop.f32.mrb[0].mxu0
        %v3182 = vadd.f32 %v2975, %v3181
        %v3183 = vpop.f32.mrb[0].mxu0
        %3184 = vmatprep.mubr.f32.mxu0 0.0
        %v3185 = vand.u32 %v2248, 4294901760
        %v3186 = vsub.f32 %v2248, %v3185
        %v3187 = vand.u32 %v3186, 4294901760
        %3188 = vmatmul.mubr.f32.gmra.mrb[0].mxu0 %v3187
        %v3189 = vpop.f32.mrb[0].mxu0
        %v3190 = vadd.f32 %v2982, %v3189
        %v3191 = vpop.f32.mrb[0].mxu0
        %3192 = vmatprep.mubr.f32.mxu0 0.0
        %v3193 = vand.u32 %v2251, 4294901760
        %v3194 = vsub.f32 %v2251, %v3193
        %v3195 = vand.u32 %v3194, 4294901760
        %3196 = vmatmul.mubr.f32.gmra.mrb[0].mxu0 %v3195
        %v3197 = vpop.f32.mrb[0].mxu0
        %v3198 = vadd.f32 %v2989, %v3197
        %v3199 = vpop.f32.mrb[0].mxu0
        %3200 = vdwg.mxu0
        %3201 = vmatprep.subr.mxu0 0.0
        %v3202 = vand.u32 %v2254, 4294901760
        %v3203 = vsub.f32 %v2254, %v3202
        %v3204 = vand.u32 %v3203, 4294901760
        %3205 = vmatpush1.xpose.msra.mxu0 %v3204
        %3206 = vmatprep.subr.mxu0 0.0
        %v3207 = vand.u32 %v2257, 4294901760
        %v3208 = vsub.f32 %v2257, %v3207
        %v3209 = vand.u32 %v3208, 4294901760
        %3210 = vmatpush1.xpose.msra.mxu0 %v3209
        %3211 = vmatprep.subr.mxu0 0.0
        %v3212 = vand.u32 %v2260, 4294901760
        %v3213 = vsub.f32 %v2260, %v3212
        %v3214 = vand.u32 %v3213, 4294901760
        %3215 = vmatpush1.xpose.msra.mxu0 %v3214
        %3216 = vmatprep.subr.mxu0 0.0
        %v3217 = vand.u32 %v2263, 4294901760
        %v3218 = vsub.f32 %v2263, %v3217
        %v3219 = vand.u32 %v3218, 4294901760
        %3220 = vmatpush1.xpose.msra.mxu0 %v3219
        %3221 = vmatprep.subr.mxu0 0.0
        %v3222 = vand.u32 %v2266, 4294901760
        %v3223 = vsub.f32 %v2266, %v3222
        %v3224 = vand.u32 %v3223, 4294901760
        %3225 = vmatpush1.xpose.msra.mxu0 %v3224
        %3226 = vmatprep.subr.mxu0 0.0
        %v3227 = vand.u32 %v2269, 4294901760
        %v3228 = vsub.f32 %v2269, %v3227
        %v3229 = vand.u32 %v3228, 4294901760
        %3230 = vmatpush1.xpose.msra.mxu0 %v3229
        %3231 = vmatprep.subr.mxu0 0.0
        %v3232 = vand.u32 %v2272, 4294901760
        %v3233 = vsub.f32 %v2272, %v3232
        %v3234 = vand.u32 %v3233, 4294901760
        %3235 = vmatpush1.xpose.msra.mxu0 %v3234
        %3236 = vmatprep.subr.mxu0 0.0
        %v3237 = vand.u32 %v2275, 4294901760
        %v3238 = vsub.f32 %v2275, %v3237
        %v3239 = vand.u32 %v3238, 4294901760
        %3240 = vmatpush1.xpose.msra.mxu0 %v3239
        %3241 = vmatprep.subr.mxu0 0.0
        %v3242 = vand.u32 %v2278, 4294901760
        %v3243 = vsub.f32 %v2278, %v3242
        %v3244 = vand.u32 %v3243, 4294901760
        %3245 = vmatpush1.xpose.msra.mxu0 %v3244
        %3246 = vmatprep.subr.mxu0 0.0
        %v3247 = vand.u32 %v2281, 4294901760
        %v3248 = vsub.f32 %v2281, %v3247
        %v3249 = vand.u32 %v3248, 4294901760
        %3250 = vmatpush1.xpose.msra.mxu0 %v3249
        %3251 = vmatprep.subr.mxu0 0.0
        %v3252 = vand.u32 %v2284, 4294901760
        %v3253 = vsub.f32 %v2284, %v3252
        %v3254 = vand.u32 %v3253, 4294901760
        %3255 = vmatpush1.xpose.msra.mxu0 %v3254
        %3256 = vmatprep.subr.mxu0 0.0
        %v3257 = vand.u32 %v2287, 4294901760
        %v3258 = vsub.f32 %v2287, %v3257
        %v3259 = vand.u32 %v3258, 4294901760
        %3260 = vmatpush1.xpose.msra.mxu0 %v3259
        %3261 = vmatprep.subr.mxu0 0.0
        %v3262 = vand.u32 %v2290, 4294901760
        %v3263 = vsub.f32 %v2290, %v3262
        %v3264 = vand.u32 %v3263, 4294901760
        %3265 = vmatpush1.xpose.msra.mxu0 %v3264
        %3266 = vmatprep.subr.mxu0 0.0
        %v3267 = vand.u32 %v2293, 4294901760
        %v3268 = vsub.f32 %v2293, %v3267
        %v3269 = vand.u32 %v3268, 4294901760
        %3270 = vmatpush1.xpose.msra.mxu0 %v3269
        %3271 = vmatprep.subr.mxu0 0.0
        %v3272 = vand.u32 %v2296, 4294901760
        %v3273 = vsub.f32 %v2296, %v3272
        %v3274 = vand.u32 %v3273, 4294901760
        %3275 = vmatpush1.xpose.msra.mxu0 %v3274
        %3276 = vmatprep.subr.mxu0 0.0
        %v3277 = vand.u32 %v2299, 4294901760
        %v3278 = vsub.f32 %v2299, %v3277
        %v3279 = vand.u32 %v3278, 4294901760
        %3280 = vmatpush1.xpose.msra.mxu0 %v3279
        %3281 = vmatprep.subr.mxu0 0.0
        %3282 = vmatpush1.xpose.msra.mxu0 0.0
        %3283 = vmatprep.subr.mxu0 0.0
        %3284 = vmatpush1.xpose.msra.mxu0 0.0
        %3285 = vmatprep.subr.mxu0 0.0
        %3286 = vmatpush1.xpose.msra.mxu0 0.0
        %3287 = vmatprep.subr.mxu0 0.0
        %3288 = vmatpush1.xpose.msra.mxu0 0.0
        %3289 = vmatprep.subr.mxu0 0.0
        %3290 = vmatpush1.xpose.msra.mxu0 0.0
        %3291 = vmatprep.subr.mxu0 0.0
        %3292 = vmatpush1.xpose.msra.mxu0 0.0
        %3293 = vmatprep.subr.mxu0 0.0
        %3294 = vmatpush1.xpose.msra.mxu0 0.0
        %3295 = vmatprep.subr.mxu0 0.0
        %3296 = vmatpush1.xpose.msra.mxu0 0.0
        %3297 = vmatprep.subr.mxu0 0.0
        %3298 = vmatpush1.xpose.msra.mxu0 0.0
        %3299 = vmatprep.subr.mxu0 0.0
        %3300 = vmatpush1.xpose.msra.mxu0 0.0
        %3301 = vmatprep.subr.mxu0 0.0
        %3302 = vmatpush1.xpose.msra.mxu0 0.0
        %3303 = vmatprep.subr.mxu0 0.0
        %3304 = vmatpush1.xpose.msra.mxu0 0.0
        %3305 = vmatprep.subr.mxu0 0.0
        %3306 = vmatpush1.xpose.msra.mxu0 0.0
        %3307 = vmatprep.subr.mxu0 0.0
        %3308 = vmatpush1.xpose.msra.mxu0 0.0
        %3309 = vmatprep.subr.mxu0 0.0
        %3310 = vmatpush1.xpose.msra.mxu0 0.0
        %3311 = vmatprep.subr.mxu0 0.0
        %3312 = vmatpush1.xpose.msra.mxu0 0.0
        %3313 = vmatprep.mubr.f32.mxu0 0.0
        %v3314 = vand.u32 %v2206, 4294901760
        %3315 = vmatmul.mubr.f32.gmra.mrb[0].mxu0 %v3314
        %v3316 = vpop.f32.mrb[0].mxu0
        %v3317 = vadd.f32 %v3078, %v3316
        %v3318 = vpop.f32.mrb[0].mxu0
        %3319 = vmatprep.mubr.f32.mxu0 0.0
        %v3320 = vand.u32 %v2209, 4294901760
        %3321 = vmatmul.mubr.f32.gmra.mrb[0].mxu0 %v3320
        %v3322 = vpop.f32.mrb[0].mxu0
        %v3323 = vadd.f32 %v3086, %v3322
        %v3324 = vpop.f32.mrb[0].mxu0
        %3325 = vmatprep.mubr.f32.mxu0 0.0
        %v3326 = vand.u32 %v2212, 4294901760
        %3327 = vmatmul.mubr.f32.gmra.mrb[0].mxu0 %v3326
        %v3328 = vpop.f32.mrb[0].mxu0
        %v3329 = vadd.f32 %v3094, %v3328
        %v3330 = vpop.f32.mrb[0].mxu0
        %3331 = vmatprep.mubr.f32.mxu0 0.0
        %v3332 = vand.u32 %v2215, 4294901760
        %3333 = vmatmul.mubr.f32.gmra.mrb[0].mxu0 %v3332
        %v3334 = vpop.f32.mrb[0].mxu0
        %v3335 = vadd.f32 %v3102, %v3334
        %v3336 = vpop.f32.mrb[0].mxu0
        %3337 = vmatprep.mubr.f32.mxu0 0.0
        %v3338 = vand.u32 %v2218, 4294901760
        %3339 = vmatmul.mubr.f32.gmra.mrb[0].mxu0 %v3338
        %v3340 = vpop.f32.mrb[0].mxu0
        %v3341 = vadd.f32 %v3110, %v3340
        %v3342 = vpop.f32.mrb[0].mxu0
        %3343 = vmatprep.mubr.f32.mxu0 0.0
        %v3344 = vand.u32 %v2221, 4294901760
        %3345 = vmatmul.mubr.f32.gmra.mrb[0].mxu0 %v3344
        %v3346 = vpop.f32.mrb[0].mxu0
        %v3347 = vadd.f32 %v3118, %v3346
        %v3348 = vpop.f32.mrb[0].mxu0
        %3349 = vmatprep.mubr.f32.mxu0 0.0
        %v3350 = vand.u32 %v2224, 4294901760
        %3351 = vmatmul.mubr.f32.gmra.mrb[0].mxu0 %v3350
        %v3352 = vpop.f32.mrb[0].mxu0
        %v3353 = vadd.f32 %v3126, %v3352
        %v3354 = vpop.f32.mrb[0].mxu0
        %3355 = vmatprep.mubr.f32.mxu0 0.0
        %v3356 = vand.u32 %v2227, 4294901760
        %3357 = vmatmul.mubr.f32.gmra.mrb[0].mxu0 %v3356
        %v3358 = vpop.f32.mrb[0].mxu0
        %v3359 = vadd.f32 %v3134, %v3358
        %v3360 = vpop.f32.mrb[0].mxu0
        %3361 = vmatprep.mubr.f32.mxu0 0.0
        %v3362 = vand.u32 %v2230, 4294901760
        %3363 = vmatmul.mubr.f32.gmra.mrb[0].mxu0 %v3362
        %v3364 = vpop.f32.mrb[0].mxu0
        %v3365 = vadd.f32 %v3142, %v3364
        %v3366 = vpop.f32.mrb[0].mxu0
        %3367 = vmatprep.mubr.f32.mxu0 0.0
        %v3368 = vand.u32 %v2233, 4294901760
        %3369 = vmatmul.mubr.f32.gmra.mrb[0].mxu0 %v3368
        %v3370 = vpop.f32.mrb[0].mxu0
        %v3371 = vadd.f32 %v3150, %v3370
        %v3372 = vpop.f32.mrb[0].mxu0
        %3373 = vmatprep.mubr.f32.mxu0 0.0
        %v3374 = vand.u32 %v2236, 4294901760
        %3375 = vmatmul.mubr.f32.gmra.mrb[0].mxu0 %v3374
        %v3376 = vpop.f32.mrb[0].mxu0
        %v3377 = vadd.f32 %v3158, %v3376
        %v3378 = vpop.f32.mrb[0].mxu0
        %3379 = vmatprep.mubr.f32.mxu0 0.0
        %v3380 = vand.u32 %v2239, 4294901760
        %3381 = vmatmul.mubr.f32.gmra.mrb[0].mxu0 %v3380
        %v3382 = vpop.f32.mrb[0].mxu0
        %v3383 = vadd.f32 %v3166, %v3382
        %v3384 = vpop.f32.mrb[0].mxu0
        %3385 = vmatprep.mubr.f32.mxu0 0.0
        %v3386 = vand.u32 %v2242, 4294901760
        %3387 = vmatmul.mubr.f32.gmra.mrb[0].mxu0 %v3386
        %v3388 = vpop.f32.mrb[0].mxu0
        %v3389 = vadd.f32 %v3174, %v3388
        %v3390 = vpop.f32.mrb[0].mxu0
        %3391 = vmatprep.mubr.f32.mxu0 0.0
        %v3392 = vand.u32 %v2245, 4294901760
        %3393 = vmatmul.mubr.f32.gmra.mrb[0].mxu0 %v3392
        %v3394 = vpop.f32.mrb[0].mxu0
        %v3395 = vadd.f32 %v3182, %v3394
        %v3396 = vpop.f32.mrb[0].mxu0
        %3397 = vmatprep.mubr.f32.mxu0 0.0
        %v3398 = vand.u32 %v2248, 4294901760
        %3399 = vmatmul.mubr.f32.gmra.mrb[0].mxu0 %v3398
        %v3400 = vpop.f32.mrb[0].mxu0
        %v3401 = vadd.f32 %v3190, %v3400
        %v3402 = vpop.f32.mrb[0].mxu0
        %3403 = vmatprep.mubr.f32.mxu0 0.0
        %v3404 = vand.u32 %v2251, 4294901760
        %3405 = vmatmul.mubr.f32.gmra.mrb[0].mxu0 %v3404
        %v3406 = vpop.f32.mrb[0].mxu0
        %v3407 = vadd.f32 %v3198, %v3406
        %v3408 = vpop.f32.mrb[0].mxu0
        %3409 = vdwg.mxu0
        %3410 = vmatprep.subr.mxu0 0.0
        %v3411 = vand.u32 %v2254, 4294901760
        %3412 = vmatpush1.xpose.msra.mxu0 %v3411
        %3413 = vmatprep.subr.mxu0 0.0
        %v3414 = vand.u32 %v2257, 4294901760
        %3415 = vmatpush1.xpose.msra.mxu0 %v3414
        %3416 = vmatprep.subr.mxu0 0.0
        %v3417 = vand.u32 %v2260, 4294901760
        %3418 = vmatpush1.xpose.msra.mxu0 %v3417
        %3419 = vmatprep.subr.mxu0 0.0
        %v3420 = vand.u32 %v2263, 4294901760
        %3421 = vmatpush1.xpose.msra.mxu0 %v3420
        %3422 = vmatprep.subr.mxu0 0.0
        %v3423 = vand.u32 %v2266, 4294901760
        %3424 = vmatpush1.xpose.msra.mxu0 %v3423
        %3425 = vmatprep.subr.mxu0 0.0
        %v3426 = vand.u32 %v2269, 4294901760
        %3427 = vmatpush1.xpose.msra.mxu0 %v3426
        %3428 = vmatprep.subr.mxu0 0.0
        %v3429 = vand.u32 %v2272, 4294901760
        %3430 = vmatpush1.xpose.msra.mxu0 %v3429
        %3431 = vmatprep.subr.mxu0 0.0
        %v3432 = vand.u32 %v2275, 4294901760
        %3433 = vmatpush1.xpose.msra.mxu0 %v3432
        %3434 = vmatprep.subr.mxu0 0.0
        %v3435 = vand.u32 %v2278, 4294901760
        %3436 = vmatpush1.xpose.msra.mxu0 %v3435
        %3437 = vmatprep.subr.mxu0 0.0
        %v3438 = vand.u32 %v2281, 4294901760
        %3439 = vmatpush1.xpose.msra.mxu0 %v3438
        %3440 = vmatprep.subr.mxu0 0.0
        %v3441 = vand.u32 %v2284, 4294901760
        %3442 = vmatpush1.xpose.msra.mxu0 %v3441
        %3443 = vmatprep.subr.mxu0 0.0
        %v3444 = vand.u32 %v2287, 4294901760
        %3445 = vmatpush1.xpose.msra.mxu0 %v3444
        %3446 = vmatprep.subr.mxu0 0.0
        %v3447 = vand.u32 %v2290, 4294901760
        %3448 = vmatpush1.xpose.msra.mxu0 %v3447
        %3449 = vmatprep.subr.mxu0 0.0
        %v3450 = vand.u32 %v2293, 4294901760
        %3451 = vmatpush1.xpose.msra.mxu0 %v3450
        %3452 = vmatprep.subr.mxu0 0.0
        %v3453 = vand.u32 %v2296, 4294901760
        %3454 = vmatpush1.xpose.msra.mxu0 %v3453
        %3455 = vmatprep.subr.mxu0 0.0
        %v3456 = vand.u32 %v2299, 4294901760
        %3457 = vmatpush1.xpose.msra.mxu0 %v3456
        %3458 = vmatprep.subr.mxu0 0.0
        %3459 = vmatpush1.xpose.msra.mxu0 0.0
        %3460 = vmatprep.subr.mxu0 0.0
        %3461 = vmatpush1.xpose.msra.mxu0 0.0
        %3462 = vmatprep.subr.mxu0 0.0
        %3463 = vmatpush1.xpose.msra.mxu0 0.0
        %3464 = vmatprep.subr.mxu0 0.0
        %3465 = vmatpush1.xpose.msra.mxu0 0.0
        %3466 = vmatprep.subr.mxu0 0.0
        %3467 = vmatpush1.xpose.msra.mxu0 0.0
        %3468 = vmatprep.subr.mxu0 0.0
        %3469 = vmatpush1.xpose.msra.mxu0 0.0
        %3470 = vmatprep.subr.mxu0 0.0
        %3471 = vmatpush1.xpose.msra.mxu0 0.0
        %3472 = vmatprep.subr.mxu0 0.0
        %3473 = vmatpush1.xpose.msra.mxu0 0.0
        %3474 = vmatprep.subr.mxu0 0.0
        %3475 = vmatpush1.xpose.msra.mxu0 0.0
        %3476 = vmatprep.subr.mxu0 0.0
        %3477 = vmatpush1.xpose.msra.mxu0 0.0
        %3478 = vmatprep.subr.mxu0 0.0
        %3479 = vmatpush1.xpose.msra.mxu0 0.0
        %3480 = vmatprep.subr.mxu0 0.0
        %3481 = vmatpush1.xpose.msra.mxu0 0.0
        %3482 = vmatprep.subr.mxu0 0.0
        %3483 = vmatpush1.xpose.msra.mxu0 0.0
        %3484 = vmatprep.subr.mxu0 0.0
        %3485 = vmatpush1.xpose.msra.mxu0 0.0
        %3486 = vmatprep.subr.mxu0 0.0
        %3487 = vmatpush1.xpose.msra.mxu0 0.0
        %3488 = vmatprep.subr.mxu0 0.0
        %3489 = vmatpush1.xpose.msra.mxu0 0.0
        %3490 = vmatprep.mubr.f32.mxu0 0.0
        %v3491 = vand.u32 %v2206, 4294901760
        %3492 = vmatmul.mubr.f32.gmra.mrb[0].mxu0 %v3491
        %v3493 = vpop.f32.mrb[0].mxu0
        %v3494 = vadd.f32 %v3317, %v3493
        %v3495 = vpop.f32.mrb[0].mxu0
        %3496 = vmatprep.mubr.f32.mxu0 0.0
        %v3497 = vand.u32 %v2209, 4294901760
        %3498 = vmatmul.mubr.f32.gmra.mrb[0].mxu0 %v3497
        %v3499 = vpop.f32.mrb[0].mxu0
        %v3500 = vadd.f32 %v3323, %v3499
        %v3501 = vpop.f32.mrb[0].mxu0
        %3502 = vmatprep.mubr.f32.mxu0 0.0
        %v3503 = vand.u32 %v2212, 4294901760
        %3504 = vmatmul.mubr.f32.gmra.mrb[0].mxu0 %v3503
        %v3505 = vpop.f32.mrb[0].mxu0
        %v3506 = vadd.f32 %v3329, %v3505
        %v3507 = vpop.f32.mrb[0].mxu0
        %3508 = vmatprep.mubr.f32.mxu0 0.0
        %v3509 = vand.u32 %v2215, 4294901760
        %3510 = vmatmul.mubr.f32.gmra.mrb[0].mxu0 %v3509
        %v3511 = vpop.f32.mrb[0].mxu0
        %v3512 = vadd.f32 %v3335, %v3511
        %v3513 = vpop.f32.mrb[0].mxu0
        %3514 = vmatprep.mubr.f32.mxu0 0.0
        %v3515 = vand.u32 %v2218, 4294901760
        %3516 = vmatmul.mubr.f32.gmra.mrb[0].mxu0 %v3515
        %v3517 = vpop.f32.mrb[0].mxu0
        %v3518 = vadd.f32 %v3341, %v3517
        %v3519 = vpop.f32.mrb[0].mxu0
        %3520 = vmatprep.mubr.f32.mxu0 0.0
        %v3521 = vand.u32 %v2221, 4294901760
        %3522 = vmatmul.mubr.f32.gmra.mrb[0].mxu0 %v3521
        %v3523 = vpop.f32.mrb[0].mxu0
        %v3524 = vadd.f32 %v3347, %v3523
        %v3525 = vpop.f32.mrb[0].mxu0
        %3526 = vmatprep.mubr.f32.mxu0 0.0
        %v3527 = vand.u32 %v2224, 4294901760
        %3528 = vmatmul.mubr.f32.gmra.mrb[0].mxu0 %v3527
        %v3529 = vpop.f32.mrb[0].mxu0
        %v3530 = vadd.f32 %v3353, %v3529
        %v3531 = vpop.f32.mrb[0].mxu0
        %3532 = vmatprep.mubr.f32.mxu0 0.0
        %v3533 = vand.u32 %v2227, 4294901760
        %3534 = vmatmul.mubr.f32.gmra.mrb[0].mxu0 %v3533
        %v3535 = vpop.f32.mrb[0].mxu0
        %v3536 = vadd.f32 %v3359, %v3535
        %v3537 = vpop.f32.mrb[0].mxu0
        %3538 = vmatprep.mubr.f32.mxu0 0.0
        %v3539 = vand.u32 %v2230, 4294901760
        %3540 = vmatmul.mubr.f32.gmra.mrb[0].mxu0 %v3539
        %v3541 = vpop.f32.mrb[0].mxu0
        %v3542 = vadd.f32 %v3365, %v3541
        %v3543 = vpop.f32.mrb[0].mxu0
        %3544 = vmatprep.mubr.f32.mxu0 0.0
        %v3545 = vand.u32 %v2233, 4294901760
        %3546 = vmatmul.mubr.f32.gmra.mrb[0].mxu0 %v3545
        %v3547 = vpop.f32.mrb[0].mxu0
        %v3548 = vadd.f32 %v3371, %v3547
        %v3549 = vpop.f32.mrb[0].mxu0
        %3550 = vmatprep.mubr.f32.mxu0 0.0
        %v3551 = vand.u32 %v2236, 4294901760
        %3552 = vmatmul.mubr.f32.gmra.mrb[0].mxu0 %v3551
        %v3553 = vpop.f32.mrb[0].mxu0
        %v3554 = vadd.f32 %v3377, %v3553
        %v3555 = vpop.f32.mrb[0].mxu0
        %3556 = vmatprep.mubr.f32.mxu0 0.0
        %v3557 = vand.u32 %v2239, 4294901760
        %3558 = vmatmul.mubr.f32.gmra.mrb[0].mxu0 %v3557
        %v3559 = vpop.f32.mrb[0].mxu0
        %v3560 = vadd.f32 %v3383, %v3559
        %v3561 = vpop.f32.mrb[0].mxu0
        %3562 = vmatprep.mubr.f32.mxu0 0.0
        %v3563 = vand.u32 %v2242, 4294901760
        %3564 = vmatmul.mubr.f32.gmra.mrb[0].mxu0 %v3563
        %v3565 = vpop.f32.mrb[0].mxu0
        %v3566 = vadd.f32 %v3389, %v3565
        %v3567 = vpop.f32.mrb[0].mxu0
        %3568 = vmatprep.mubr.f32.mxu0 0.0
        %v3569 = vand.u32 %v2245, 4294901760
        %3570 = vmatmul.mubr.f32.gmra.mrb[0].mxu0 %v3569
        %v3571 = vpop.f32.mrb[0].mxu0
        %v3572 = vadd.f32 %v3395, %v3571
        %v3573 = vpop.f32.mrb[0].mxu0
        %3574 = vmatprep.mubr.f32.mxu0 0.0
        %v3575 = vand.u32 %v2248, 4294901760
        %3576 = vmatmul.mubr.f32.gmra.mrb[0].mxu0 %v3575
        %v3577 = vpop.f32.mrb[0].mxu0
        %v3578 = vadd.f32 %v3401, %v3577
        %v3579 = vpop.f32.mrb[0].mxu0
        %3580 = vmatprep.mubr.f32.mxu0 0.0
        %v3581 = vand.u32 %v2251, 4294901760
        %3582 = vmatmul.mubr.f32.gmra.mrb[0].mxu0 %v3581
        %v3583 = vpop.f32.mrb[0].mxu0
        %v3584 = vadd.f32 %v3407, %v3583
        %v3585 = vpop.f32.mrb[0].mxu0
        %3586 = vdwg.mxu0
        %3588 = vset.pattern.permute.xlu0 0
        %3589 = vperm.xlu0 %3588, %v622
        %v3590 = vpop.permute.xlu0 %3589
        %3593 = vset.pattern.permute.xlu0 0
        %3594 = vperm.xlu0 %3593, %v623
        %v3595 = vpop.permute.xlu0 %3594
        %3598 = vset.pattern.permute.xlu0 0
        %3599 = vperm.xlu0 %3598, %v624
        %v3600 = vpop.permute.xlu0 %3599
        %3603 = vset.pattern.permute.xlu0 0
        %3604 = vperm.xlu0 %3603, %v625
        %v3605 = vpop.permute.xlu0 %3604
        %3608 = vset.pattern.permute.xlu0 0
        %3609 = vperm.xlu0 %3608, %v626
        %v3610 = vpop.permute.xlu0 %3609
        %3613 = vset.pattern.permute.xlu0 0
        %3614 = vperm.xlu0 %3613, %v627
        %v3615 = vpop.permute.xlu0 %3614
        %3618 = vset.pattern.permute.xlu0 0
        %3619 = vperm.xlu0 %3618, %v628
        %v3620 = vpop.permute.xlu0 %3619
        %3623 = vset.pattern.permute.xlu0 0
        %3624 = vperm.xlu0 %3623, %v629
        %v3625 = vpop.permute.xlu0 %3624
        %3628 = vset.pattern.permute.xlu0 0
        %3629 = vperm.xlu0 %3628, %v630
        %v3630 = vpop.permute.xlu0 %3629
        %3633 = vset.pattern.permute.xlu0 0
        %3634 = vperm.xlu0 %3633, %v631
        %v3635 = vpop.permute.xlu0 %3634
        %3638 = vset.pattern.permute.xlu0 0
        %3639 = vperm.xlu0 %3638, %v632
        %v3640 = vpop.permute.xlu0 %3639
        %3643 = vset.pattern.permute.xlu0 0
        %3644 = vperm.xlu0 %3643, %v633
        %v3645 = vpop.permute.xlu0 %3644
        %3648 = vset.pattern.permute.xlu0 0
        %3649 = vperm.xlu0 %3648, %v634
        %v3650 = vpop.permute.xlu0 %3649
        %3653 = vset.pattern.permute.xlu0 0
        %3654 = vperm.xlu0 %3653, %v635
        %v3655 = vpop.permute.xlu0 %3654
        %3658 = vset.pattern.permute.xlu0 0
        %3659 = vperm.xlu0 %3658, %v636
        %v3660 = vpop.permute.xlu0 %3659
        %3663 = vset.pattern.permute.xlu0 0
        %3664 = vperm.xlu0 %3663, %v637
        %v3665 = vpop.permute.xlu0 %3664
        %v3668 = vlaneseq
        %v3669 = vshrl.u32 %v3668, 7
        %v3670 = vsub.s32 0, %v3669
        %v3671 = vrot.slane %v671, %v3670
        %v3673 = vadd.f32 %v3590, %v3671
        %v3674 = vadd.f32 %v3595, %v3671
        %v3675 = vadd.f32 %v3600, %v3671
        %v3676 = vadd.f32 %v3605, %v3671
        %v3677 = vadd.f32 %v3610, %v3671
        %v3678 = vadd.f32 %v3615, %v3671
        %v3679 = vadd.f32 %v3620, %v3671
        %v3680 = vadd.f32 %v3625, %v3671
        %v3681 = vadd.f32 %v3630, %v3671
        %v3682 = vadd.f32 %v3635, %v3671
        %v3683 = vadd.f32 %v3640, %v3671
        %v3684 = vadd.f32 %v3645, %v3671
        %v3685 = vadd.f32 %v3650, %v3671
        %v3686 = vadd.f32 %v3655, %v3671
        %v3687 = vadd.f32 %v3660, %v3671
        %v3688 = vadd.f32 %v3665, %v3671
        %v3689 = vmul.f32 %v3494, 2.0
        %v3690 = vmul.f32 %v3500, 2.0
        %v3691 = vmul.f32 %v3506, 2.0
        %v3692 = vmul.f32 %v3512, 2.0
        %v3693 = vmul.f32 %v3518, 2.0
        %v3694 = vmul.f32 %v3524, 2.0
        %v3695 = vmul.f32 %v3530, 2.0
        %v3696 = vmul.f32 %v3536, 2.0
        %v3697 = vmul.f32 %v3542, 2.0
        %v3698 = vmul.f32 %v3548, 2.0
        %v3699 = vmul.f32 %v3554, 2.0
        %v3700 = vmul.f32 %v3560, 2.0
        %v3701 = vmul.f32 %v3566, 2.0
        %v3702 = vmul.f32 %v3572, 2.0
        %v3703 = vmul.f32 %v3578, 2.0
        %v3704 = vmul.f32 %v3584, 2.0
        %v3705 = vsub.f32 %v3673, %v3689
        %v3706 = vsub.f32 %v3674, %v3690
        %v3707 = vsub.f32 %v3675, %v3691
        %v3708 = vsub.f32 %v3676, %v3692
        %v3709 = vsub.f32 %v3677, %v3693
        %v3710 = vsub.f32 %v3678, %v3694
        %v3711 = vsub.f32 %v3679, %v3695
        %v3712 = vsub.f32 %v3680, %v3696
        %v3713 = vsub.f32 %v3681, %v3697
        %v3714 = vsub.f32 %v3682, %v3698
        %v3715 = vsub.f32 %v3683, %v3699
        %v3716 = vsub.f32 %v3684, %v3700
        %v3717 = vsub.f32 %v3685, %v3701
        %v3718 = vsub.f32 %v3686, %v3702
        %v3719 = vsub.f32 %v3687, %v3703
        %v3720 = vsub.f32 %v3688, %v3704
        %v3721 = vmax.f32 %v3705, 0.0
        %v3722 = vmax.f32 %v3706, 0.0
        %v3723 = vmax.f32 %v3707, 0.0
        %v3724 = vmax.f32 %v3708, 0.0
        %v3725 = vmax.f32 %v3709, 0.0
        %v3726 = vmax.f32 %v3710, 0.0
        %v3727 = vmax.f32 %v3711, 0.0
        %v3728 = vmax.f32 %v3712, 0.0
        %v3729 = vmax.f32 %v3713, 0.0
        %v3730 = vmax.f32 %v3714, 0.0
        %v3731 = vmax.f32 %v3715, 0.0
        %v3732 = vmax.f32 %v3716, 0.0
        %v3733 = vmax.f32 %v3717, 0.0
        %v3734 = vmax.f32 %v3718, 0.0
        %v3735 = vmax.f32 %v3719, 0.0
        %v3736 = vmax.f32 %v3720, 0.0
        %v3737 = vadd.f32 %v2189, %v3721
        %v3738 = vadd.f32 %v2190, %v3722
        %v3739 = vadd.f32 %v2191, %v3723
        %v3740 = vadd.f32 %v2192, %v3724
        %v3741 = vadd.f32 %v2193, %v3725
        %v3742 = vadd.f32 %v2194, %v3726
        %v3743 = vadd.f32 %v2195, %v3727
        %v3744 = vadd.f32 %v2196, %v3728
        %v3745 = vadd.f32 %v2197, %v3729
        %v3746 = vadd.f32 %v2198, %v3730
        %v3747 = vadd.f32 %v2199, %v3731
        %v3748 = vadd.f32 %v2200, %v3732
        %v3749 = vadd.f32 %v2201, %v3733
        %v3750 = vadd.f32 %v2202, %v3734
        %v3751 = vadd.f32 %v2203, %v3735
        %v3752 = vadd.f32 %v2204, %v3736
        %v3753 = vmul.f32 %v2189, %v3721
        %v3754 = vmul.f32 %v2190, %v3722
        %v3755 = vmul.f32 %v2191, %v3723
        %v3756 = vmul.f32 %v2192, %v3724
        %v3757 = vmul.f32 %v2193, %v3725
        %v3758 = vmul.f32 %v2194, %v3726
        %v3759 = vmul.f32 %v2195, %v3727
        %v3760 = vmul.f32 %v2196, %v3728
        %v3761 = vmul.f32 %v2197, %v3729
        %v3762 = vmul.f32 %v2198, %v3730
        %v3763 = vmul.f32 %v2199, %v3731
        %v3764 = vmul.f32 %v2200, %v3732
        %v3765 = vmul.f32 %v2201, %v3733
        %v3766 = vmul.f32 %v2202, %v3734
        %v3767 = vmul.f32 %v2203, %v3735
        %v3768 = vmul.f32 %v2204, %v3736
        %v3769 = vrsqrt.pop %v3753
        %v3770 = vmul.f32 %v3753, %v3769
        %vm3771 = vcmp.eq.f32.partialorder %v3753, inf
        %v3772 = vsel %vm3771, %v3753, %v3770
        %vm3773 = vcmp.eq.f32.partialorder %v3753, 0.0
        %v3774 = vand.u32 %v3753, 2147483648
        %v3775 = vsel %vm3773, %v3774, %v3772
        %v3776 = vrsqrt.pop %v3754
        %v3777 = vmul.f32 %v3754, %v3776
        %vm3778 = vcmp.eq.f32.partialorder %v3754, inf
        %v3779 = vsel %vm3778, %v3754, %v3777
        %vm3780 = vcmp.eq.f32.partialorder %v3754, 0.0
        %v3781 = vand.u32 %v3754, 2147483648
        %v3782 = vsel %vm3780, %v3781, %v3779
        %v3783 = vrsqrt.pop %v3755
        %v3784 = vmul.f32 %v3755, %v3783
        %vm3785 = vcmp.eq.f32.partialorder %v3755, inf
        %v3786 = vsel %vm3785, %v3755, %v3784
        %vm3787 = vcmp.eq.f32.partialorder %v3755, 0.0
        %v3788 = vand.u32 %v3755, 2147483648
        %v3789 = vsel %vm3787, %v3788, %v3786
        %v3790 = vrsqrt.pop %v3756
        %v3791 = vmul.f32 %v3756, %v3790
        %vm3792 = vcmp.eq.f32.partialorder %v3756, inf
        %v3793 = vsel %vm3792, %v3756, %v3791
        %vm3794 = vcmp.eq.f32.partialorder %v3756, 0.0
        %v3795 = vand.u32 %v3756, 2147483648
        %v3796 = vsel %vm3794, %v3795, %v3793
        %v3797 = vrsqrt.pop %v3757
        %v3798 = vmul.f32 %v3757, %v3797
        %vm3799 = vcmp.eq.f32.partialorder %v3757, inf
        %v3800 = vsel %vm3799, %v3757, %v3798
        %vm3801 = vcmp.eq.f32.partialorder %v3757, 0.0
        %v3802 = vand.u32 %v3757, 2147483648
        %v3803 = vsel %vm3801, %v3802, %v3800
        %v3804 = vrsqrt.pop %v3758
        %v3805 = vmul.f32 %v3758, %v3804
        %vm3806 = vcmp.eq.f32.partialorder %v3758, inf
        %v3807 = vsel %vm3806, %v3758, %v3805
        %vm3808 = vcmp.eq.f32.partialorder %v3758, 0.0
        %v3809 = vand.u32 %v3758, 2147483648
        %v3810 = vsel %vm3808, %v3809, %v3807
        %v3811 = vrsqrt.pop %v3759
        %v3812 = vmul.f32 %v3759, %v3811
        %vm3813 = vcmp.eq.f32.partialorder %v3759, inf
        %v3814 = vsel %vm3813, %v3759, %v3812
        %vm3815 = vcmp.eq.f32.partialorder %v3759, 0.0
        %v3816 = vand.u32 %v3759, 2147483648
        %v3817 = vsel %vm3815, %v3816, %v3814
        %v3818 = vrsqrt.pop %v3760
        %v3819 = vmul.f32 %v3760, %v3818
        %vm3820 = vcmp.eq.f32.partialorder %v3760, inf
        %v3821 = vsel %vm3820, %v3760, %v3819
        %vm3822 = vcmp.eq.f32.partialorder %v3760, 0.0
        %v3823 = vand.u32 %v3760, 2147483648
        %v3824 = vsel %vm3822, %v3823, %v3821
        %v3825 = vrsqrt.pop %v3761
        %v3826 = vmul.f32 %v3761, %v3825
        %vm3827 = vcmp.eq.f32.partialorder %v3761, inf
        %v3828 = vsel %vm3827, %v3761, %v3826
        %vm3829 = vcmp.eq.f32.partialorder %v3761, 0.0
        %v3830 = vand.u32 %v3761, 2147483648
        %v3831 = vsel %vm3829, %v3830, %v3828
        %v3832 = vrsqrt.pop %v3762
        %v3833 = vmul.f32 %v3762, %v3832
        %vm3834 = vcmp.eq.f32.partialorder %v3762, inf
        %v3835 = vsel %vm3834, %v3762, %v3833
        %vm3836 = vcmp.eq.f32.partialorder %v3762, 0.0
        %v3837 = vand.u32 %v3762, 2147483648
        %v3838 = vsel %vm3836, %v3837, %v3835
        %v3839 = vrsqrt.pop %v3763
        %v3840 = vmul.f32 %v3763, %v3839
        %vm3841 = vcmp.eq.f32.partialorder %v3763, inf
        %v3842 = vsel %vm3841, %v3763, %v3840
        %vm3843 = vcmp.eq.f32.partialorder %v3763, 0.0
        %v3844 = vand.u32 %v3763, 2147483648
        %v3845 = vsel %vm3843, %v3844, %v3842
        %v3846 = vrsqrt.pop %v3764
        %v3847 = vmul.f32 %v3764, %v3846
        %vm3848 = vcmp.eq.f32.partialorder %v3764, inf
        %v3849 = vsel %vm3848, %v3764, %v3847
        %vm3850 = vcmp.eq.f32.partialorder %v3764, 0.0
        %v3851 = vand.u32 %v3764, 2147483648
        %v3852 = vsel %vm3850, %v3851, %v3849
        %v3853 = vrsqrt.pop %v3765
        %v3854 = vmul.f32 %v3765, %v3853
        %vm3855 = vcmp.eq.f32.partialorder %v3765, inf
        %v3856 = vsel %vm3855, %v3765, %v3854
        %vm3857 = vcmp.eq.f32.partialorder %v3765, 0.0
        %v3858 = vand.u32 %v3765, 2147483648
        %v3859 = vsel %vm3857, %v3858, %v3856
        %v3860 = vrsqrt.pop %v3766
        %v3861 = vmul.f32 %v3766, %v3860
        %vm3862 = vcmp.eq.f32.partialorder %v3766, inf
        %v3863 = vsel %vm3862, %v3766, %v3861
        %vm3864 = vcmp.eq.f32.partialorder %v3766, 0.0
        %v3865 = vand.u32 %v3766, 2147483648
        %v3866 = vsel %vm3864, %v3865, %v3863
        %v3867 = vrsqrt.pop %v3767
        %v3868 = vmul.f32 %v3767, %v3867
        %vm3869 = vcmp.eq.f32.partialorder %v3767, inf
        %v3870 = vsel %vm3869, %v3767, %v3868
        %vm3871 = vcmp.eq.f32.partialorder %v3767, 0.0
        %v3872 = vand.u32 %v3767, 2147483648
        %v3873 = vsel %vm3871, %v3872, %v3870
        %v3874 = vrsqrt.pop %v3768
        %v3875 = vmul.f32 %v3768, %v3874
        %vm3876 = vcmp.eq.f32.partialorder %v3768, inf
        %v3877 = vsel %vm3876, %v3768, %v3875
        %vm3878 = vcmp.eq.f32.partialorder %v3768, 0.0
        %v3879 = vand.u32 %v3768, 2147483648
        %v3880 = vsel %vm3878, %v3879, %v3877
        %v3881 = vmul.f32 %v3775, 2.0
        %v3882 = vmul.f32 %v3782, 2.0
        %v3883 = vmul.f32 %v3789, 2.0
        %v3884 = vmul.f32 %v3796, 2.0
        %v3885 = vmul.f32 %v3803, 2.0
        %v3886 = vmul.f32 %v3810, 2.0
        %v3887 = vmul.f32 %v3817, 2.0
        %v3888 = vmul.f32 %v3824, 2.0
        %v3889 = vmul.f32 %v3831, 2.0
        %v3890 = vmul.f32 %v3838, 2.0
        %v3891 = vmul.f32 %v3845, 2.0
        %v3892 = vmul.f32 %v3852, 2.0
        %v3893 = vmul.f32 %v3859, 2.0
        %v3894 = vmul.f32 %v3866, 2.0
        %v3895 = vmul.f32 %v3873, 2.0
        %v3896 = vmul.f32 %v3880, 2.0
        %v3897 = vsub.f32 %v3737, %v3881
        %v3898 = vsub.f32 %v3738, %v3882
        %v3899 = vsub.f32 %v3739, %v3883
        %v3900 = vsub.f32 %v3740, %v3884
        %v3901 = vsub.f32 %v3741, %v3885
        %v3902 = vsub.f32 %v3742, %v3886
        %v3903 = vsub.f32 %v3743, %v3887
        %v3904 = vsub.f32 %v3744, %v3888
        %v3905 = vsub.f32 %v3745, %v3889
        %v3906 = vsub.f32 %v3746, %v3890
        %v3907 = vsub.f32 %v3747, %v3891
        %v3908 = vsub.f32 %v3748, %v3892
        %v3909 = vsub.f32 %v3749, %v3893
        %v3910 = vsub.f32 %v3750, %v3894
        %v3911 = vsub.f32 %v3751, %v3895
        %v3912 = vsub.f32 %v3752, %v3896
        %v3913 = vmax.f32 %v3897, 0.0
        %v3914 = vmax.f32 %v3898, 0.0
        %v3915 = vmax.f32 %v3899, 0.0
        %v3916 = vmax.f32 %v3900, 0.0
        %v3917 = vmax.f32 %v3901, 0.0
        %v3918 = vmax.f32 %v3902, 0.0
        %v3919 = vmax.f32 %v3903, 0.0
        %v3920 = vmax.f32 %v3904, 0.0
        %v3921 = vmax.f32 %v3905, 0.0
        %v3922 = vmax.f32 %v3906, 0.0
        %v3923 = vmax.f32 %v3907, 0.0
        %v3924 = vmax.f32 %v3908, 0.0
        %v3925 = vmax.f32 %v3909, 0.0
        %v3926 = vmax.f32 %v3910, 0.0
        %v3927 = vmax.f32 %v3911, 0.0
        %v3928 = vmax.f32 %v3912, 0.0
        %v3929 = vmul.f32 %v3913, 100.0
        %v3930 = vmul.f32 %v3914, 100.0
        %v3931 = vmul.f32 %v3915, 100.0
        %v3932 = vmul.f32 %v3916, 100.0
        %v3933 = vmul.f32 %v3917, 100.0
        %v3934 = vmul.f32 %v3918, 100.0
        %v3935 = vmul.f32 %v3919, 100.0
        %v3936 = vmul.f32 %v3920, 100.0
        %v3937 = vmul.f32 %v3921, 100.0
        %v3938 = vmul.f32 %v3922, 100.0
        %v3939 = vmul.f32 %v3923, 100.0
        %v3940 = vmul.f32 %v3924, 100.0
        %v3941 = vmul.f32 %v3925, 100.0
        %v3942 = vmul.f32 %v3926, 100.0
        %v3943 = vmul.f32 %v3927, 100.0
        %v3944 = vmul.f32 %v3928, 100.0
        %v3945 = vsub.f32 1.0, %v3929
        %v3946 = vsub.f32 1.0, %v3930
        %v3947 = vsub.f32 1.0, %v3931
        %v3948 = vsub.f32 1.0, %v3932
        %v3949 = vsub.f32 1.0, %v3933
        %v3950 = vsub.f32 1.0, %v3934
        %v3951 = vsub.f32 1.0, %v3935
        %v3952 = vsub.f32 1.0, %v3936
        %v3953 = vsub.f32 1.0, %v3937
        %v3954 = vsub.f32 1.0, %v3938
        %v3955 = vsub.f32 1.0, %v3939
        %v3956 = vsub.f32 1.0, %v3940
        %v3957 = vsub.f32 1.0, %v3941
        %v3958 = vsub.f32 1.0, %v3942
        %v3959 = vsub.f32 1.0, %v3943
        %v3960 = vsub.f32 1.0, %v3944
        %vm3961 = vcmp.lt.f32.partialorder %v3945, 0.9
        %vm3962 = vcmp.lt.f32.partialorder %v3946, 0.9
        %vm3963 = vcmp.lt.f32.partialorder %v3947, 0.9
        %vm3964 = vcmp.lt.f32.partialorder %v3948, 0.9
        %vm3965 = vcmp.lt.f32.partialorder %v3949, 0.9
        %vm3966 = vcmp.lt.f32.partialorder %v3950, 0.9
        %vm3967 = vcmp.lt.f32.partialorder %v3951, 0.9
        %vm3968 = vcmp.lt.f32.partialorder %v3952, 0.9
        %vm3969 = vcmp.lt.f32.partialorder %v3953, 0.9
        %vm3970 = vcmp.lt.f32.partialorder %v3954, 0.9
        %vm3971 = vcmp.lt.f32.partialorder %v3955, 0.9
        %vm3972 = vcmp.lt.f32.partialorder %v3956, 0.9
        %vm3973 = vcmp.lt.f32.partialorder %v3957, 0.9
        %vm3974 = vcmp.lt.f32.partialorder %v3958, 0.9
        %vm3975 = vcmp.lt.f32.partialorder %v3959, 0.9
        %vm3976 = vcmp.lt.f32.partialorder %v3960, 0.9
        %v3977 = vsel %vm3961, 0.0, %v3945
        %v3978 = vsel %vm3962, 0.0, %v3946
        %v3979 = vsel %vm3963, 0.0, %v3947
        %v3980 = vsel %vm3964, 0.0, %v3948
        %v3981 = vsel %vm3965, 0.0, %v3949
        %v3982 = vsel %vm3966, 0.0, %v3950
        %v3983 = vsel %vm3967, 0.0, %v3951
        %v3984 = vsel %vm3968, 0.0, %v3952
        %v3985 = vsel %vm3969, 0.0, %v3953
        %v3986 = vsel %vm3970, 0.0, %v3954
        %v3987 = vsel %vm3971, 0.0, %v3955
        %v3988 = vsel %vm3972, 0.0, %v3956
        %v3989 = vsel %vm3973, 0.0, %v3957
        %v3990 = vsel %vm3974, 0.0, %v3958
        %v3991 = vsel %vm3975, 0.0, %v3959
        %v3992 = vsel %vm3976, 0.0, %v3960
        %3993 = vst [vmem:[%s500] sm:$0xff] %v3977
        %3994 = vst [vmem:[%s500 + $0x8] sm:$0xff] %v3978
        %3995 = vst [vmem:[%s500 + $0x10] sm:$0xff] %v3979
        %3996 = vst [vmem:[%s500 + $0x18] sm:$0xff] %v3980
        %3997 = vst [vmem:[%s500 + $0x20] sm:$0xff] %v3981
        %3998 = vst [vmem:[%s500 + $0x28] sm:$0xff] %v3982
        %3999 = vst [vmem:[%s500 + $0x30] sm:$0xff] %v3983
        %4000 = vst [vmem:[%s500 + $0x38] sm:$0xff] %v3984
        %4001 = vst [vmem:[%s500 + $0x40] sm:$0xff] %v3985
        %4002 = vst [vmem:[%s500 + $0x48] sm:$0xff] %v3986
        %4003 = vst [vmem:[%s500 + $0x50] sm:$0xff] %v3987
        %4004 = vst [vmem:[%s500 + $0x58] sm:$0xff] %v3988
        %4005 = vst [vmem:[%s500 + $0x60] sm:$0xff] %v3989
        %4006 = vst [vmem:[%s500 + $0x68] sm:$0xff] %v3990
        %4007 = vst [vmem:[%s500 + $0x70] sm:$0xff] %v3991
        %4008 = vst [vmem:[%s500 + $0x78] sm:$0xff] %v3992
        %s4009 = sand.u32 %s277, 1
        %s4010 = scalar_lea.sflag [#allocation3], %s4009
        %s4011 = sand.u32 %s277, 1
        %s4012 = smul.addr %s4011, 128
        %s4013 = scalar_lea.vmem [#allocation2], %s4012
        // Predicated region
        $region53: #{tpu_custom_call.1} parent=51 // pred_check
          %p4014 = pneg %p287
        $region54: #{tpu_custom_call.1} parent=51 // pred_check_branch
          %4016 = sbr.rel (%p4014) target = $region56
        $region55: #{tpu_custom_call.1} parent=51 // pred_region
          %s4017 = smul.u32 16, %s28
          %s4019 = ssub.s32 2048, 2048
          %4020 = vsyncadd %s4010, %s4019
          %s4021 = sadd.s32 %s29, %s4017
          %s4022 = smul.addr %s27, 16
          %s4023 = sadd.s32 %s4021, %s4022
          %s4024 = smul.addr %s4023, 128
          %s4025 = scalar_lea.hbm %s8, %s4024
          %s4026 = sshll.u32 %s4013, 4
          %s4027 = int_to_ptr.vmem [resolvable:$true] %s4026
          %4032 = dma.vmem_to_hbm [thread:$0]  %s4027, 2048, %s4025, %s4010, 128, 128, 8
        $region56: #{tpu_custom_call.1} parent=51 // pred_fallthru
          _
      $region52: #{tpu_custom_call.1} parent=5 // pred_fallthru
        _
      %p4033 = scmp.le.s32.totalorder 2, %s17
      // Predicated region
      $region57: #{tpu_custom_call.1} parent=5 // pred_check
        %p4034 = pneg %p4033
      $region58: #{tpu_custom_call.1} parent=5 // pred_check_branch
        %4036 = sbr.rel (%p4034) target = $region60
      $region59: #{tpu_custom_call.1} parent=5 // pred_region
        %s4037 = ssub.s32 %s17, 2
        // Predicated region
        $region61: #{tpu_custom_call.1} parent=59 // pred_check
          %p4038 = pneg %p293
        $region62: #{tpu_custom_call.1} parent=59 // pred_check_branch
          %4040 = sbr.rel (%p4038) target = $region64
        $region63: #{tpu_custom_call.1} parent=59 // pred_region
          %s4041 = sand.u32 %s278, 1
          %s4042 = scalar_lea.sflag [#allocation3], %s4041
          %s4043 = sand.u32 %s278, 1
          %s4044 = smul.addr %s4043, 128
          %s4045 = scalar_lea.vmem [#allocation2], %s4044
          %4046 = dma.done %s4042, 2048
        $region64: #{tpu_custom_call.1} parent=59 // pred_fallthru
          _
      $region60: #{tpu_custom_call.1} parent=5 // pred_fallthru
        _
    $region6: #{tpu_custom_call.1} parent=1 // loop_footer
      %s21 = sadd.s32 1, %s17
    $region7: #{tpu_custom_call.1} parent=1 // loop_footer_branch
      %16 = sbr.rel target = $region3
    $region8: #{tpu_custom_call.1} parent=1 // loop_exit
      _
    %4047 = vsyncpa [#allocation3], 1
    %s4048 = scalar_lea.sflag [#allocation3], 1
    %4049 = vsyncpa %s4048, 1

</llo_original>
